<compile_context>
chip_gen: v5e
topology: v5e:2x2
jax: 0.10.0
libtpu: 0.0.40
codegen_flags: <defaults>
</compile_context>

<pallas_src>
import numpy as np
import jax
import jax.numpy as jnp
from jax import lax
from jax.experimental import pallas as pl
from jax.experimental.pallas import tpu as pltpu


# ----------------------------- fused Pallas kernel ---------------------------

def _mnist_fused_kernel(x_ref, m28_ref, m14_ref,
                        w1_ref, b1_ref, w2_ref, b2_ref,
                        cp1_ref, cp2_ref,
                        wfc1_ref, bfc1_ref, wfc2_ref, bfc2_ref,
                        o_ref,
                        xs_ref, lhs1_ref, p1s_ref, lhs2_ref,
                        y1_ref, y2_ref, p2_ref):
    """MNISTModel.eval() forward for a block of B images; all VMEM-resident.

    Activation layout: rows = b*H + h (image-major), lanes = w*C + c
    (channels fastest on lanes).
    """
    f32 = jnp.float32
    B28 = x_ref.shape[0]          # B * 28
    B = B28 // 28
    B14 = B28 // 2                # B * 14
    B7 = B14 // 2                 # B * 7

    # ---- conv1 (1->4, 3x3, pad=1) + ReLU: one tap-folded MXU matmul ----------
    x = x_ref[...]                                          # (B*28, 28)
    xs_ref[0:1, :] = jnp.zeros((1, 28), f32)                # global top pad row
    xs_ref[B28 + 1:B28 + 2, :] = jnp.zeros((1, 28), f32)    # global bottom pad
    xs_ref[1:B28 + 1, :] = x
    # Shifted row taps; per-image boundary rows are zeroed by host-built masks.
    lhs1_ref[:, 0:28] = xs_ref[0:B28, :] * m28_ref[0]        # x[h-1]
    lhs1_ref[:, 28:56] = x                                   # x[h]
    lhs1_ref[:, 56:84] = xs_ref[2:B28 + 2, :] * m28_ref[1]   # x[h+1]
    y1_ref[...] = jnp.maximum(
        jnp.dot(lhs1_ref[...], w1_ref[...], preferred_element_type=f32)
        + b1_ref[...], 0.0)                                  # (B*28, 112)

    # ---- maxpool 2x2 #1: rows = strided loads + VPU max; cols = 0/1 matmuls --
    rmax1 = jnp.maximum(y1_ref[pl.ds(0, B14, 2), :],
                        y1_ref[pl.ds(1, B14, 2), :])         # (B*14, 112)
    # TODO(synk): columns could use pltpu.roll(-C) + max to drop one selector
    # matmul per pool; kept the verified even/odd selector pair because the
    # sub-128-lane (112-wide) roll path is less battle-tested.
    p1 = jnp.maximum(
        jnp.dot(rmax1, cp1_ref[0], preferred_element_type=f32),
        jnp.dot(rmax1, cp1_ref[1], preferred_element_type=f32))   # (B*14, 56)
    # dropout1 (Dropout2d 0.25): identity in eval mode

    # ---- conv2 (4->8, 3x3, pad=1) + ReLU -------------------------------------
    p1s_ref[0:1, :] = jnp.zeros((1, 56), f32)
    p1s_ref[B14 + 1:B14 + 2, :] = jnp.zeros((1, 56), f32)
    p1s_ref[1:B14 + 1, :] = p1
    lhs2_ref[:, 0:56] = p1s_ref[0:B14, :] * m14_ref[0]       # p1[h-1]
    lhs2_ref[:, 56:112] = p1                                 # p1[h]
    lhs2_ref[:, 112:168] = p1s_ref[2:B14 + 2, :] * m14_ref[1]  # p1[h+1]
    y2_ref[...] = jnp.maximum(
        jnp.dot(lhs2_ref[...], w2_ref[...], preferred_element_type=f32)
        + b2_ref[...], 0.0)                                  # (B*14, 112)

    # ---- maxpool 2x2 #2 -------------------------------------------------------
    rmax2 = jnp.maximum(y2_ref[pl.ds(0, B7, 2), :],
                        y2_ref[pl.ds(1, B7, 2), :])          # (B*7, 112)
    p2_ref[...] = jnp.maximum(
        jnp.dot(rmax2, cp2_ref[0], preferred_element_type=f32),
        jnp.dot(rmax2, cp2_ref[1], preferred_element_type=f32))   # (B*7, 56)
    # dropout1 (Dropout2d 0.25): identity in eval mode

    # ---- flatten (torch C,H,W order folded into wfc1) + fc1 + ReLU + fc2 -----
    h = jnp.zeros((B, 16), f32)
    for r in range(7):                         # batched (B, 56) LHS per h-row
        h = h + jnp.dot(p2_ref[pl.ds(r, B, 7), :], wfc1_ref[r],
                        preferred_element_type=f32)
    h = jnp.maximum(h + bfc1_ref[...], 0.0)
    # dropout2 (Dropout 0.5): identity in eval mode
    o_ref[...] = (jnp.dot(h, wfc2_ref[...], preferred_element_type=f32)
                  + bfc2_ref[...])                           # (B, 128) lane-dense


# ------------------------- host-side weight preparation ----------------------
# Pure constant / weight re-layout; in a real deployment this is done once.

def _fold_conv_weight(w, width):
    """(Co,Ci,3,3) torch conv weight -> (3*width*Ci, width*Co) tap-folded matrix.

    With activations laid out as A[h, w*Ci + ci] and the kernel's shifted LHS
    [x[h-1] | x[h] | x[h+1]] along lanes, LHS @ W reproduces a 3x3 conv with
    padding=1 (column padding is encoded by dropping out-of-range taps).
    """
    co, ci = int(w.shape[0]), int(w.shape[1])
    # sel[dx][u, v] = 1 iff input column u feeds output column v for tap dx.
    sel = jnp.asarray(
        np.stack([np.eye(width, width, 1 - dx, dtype=np.float32)
                  for dx in range(3)]))                    # (3, width, width)
    big = jnp.einsum("xuv,cidx->duivc", sel, w.astype(jnp.float32))
    return big.reshape(3 * width * ci, width * co)


def _pool_row_sel(n):
    """Even/odd row selectors: (n//2, n) each, S_e[r,2r]=1, S_o[r,2r+1]=1."""
    m = n // 2
    e = np.zeros((m, n), np.float32)
    o = np.zeros((m, n), np.float32)
    e[np.arange(m), 2 * np.arange(m)] = 1.0
    o[np.arange(m), 2 * np.arange(m) + 1] = 1.0
    return e, o


def _pool_col_sel(n, c):
    """Even/odd column selectors for the (W*C) lane layout: (2, n*c, (n//2)*c)."""
    e, o = _pool_row_sel(n)
    eye_c = np.eye(c, dtype=np.float32)
    return jnp.asarray(np.stack([np.kron(e.T, eye_c), np.kron(o.T, eye_c)]))


def _boundary_masks(b, h):
    """(2, b*h, 1) f32: [0] zeroes each image's first row, [1] its last row."""
    r = np.arange(b * h)
    first = (r % h != 0).astype(np.float32)
    last = (r % h != h - 1).astype(np.float32)
    return jnp.asarray(np.stack([first, last])[:, :, None])


def _prepare_kernel_operands(p, B):
    ops = {}
    ops["w1"] = _fold_conv_weight(p["w_conv1"], 28)                       # (84, 112)
    ops["b1"] = jnp.tile(p["b_conv1"].astype(jnp.float32), 28)[None, :]   # (1, 112)
    ops["w2"] = _fold_conv_weight(p["w_conv2"], 14)                       # (168, 112)
    ops["b2"] = jnp.tile(p["b_conv2"].astype(jnp.float32), 14)[None, :]   # (1, 112)
    ops["cp1"] = _pool_col_sel(28, 4)                                     # (2, 112, 56)
    ops["cp2"] = _pool_col_sel(14, 8)                                     # (2, 112, 56)
    # fc1 weight: torch (c,h,w) flatten order -> (h, w*8+c) to match pooled layout.
    ops["wfc1"] = (p["w_fc1"].astype(jnp.float32)
                   .reshape(8, 7, 7, 16).transpose(1, 2, 0, 3).reshape(7, 56, 16))
    ops["bfc1"] = p["b_fc1"].astype(jnp.float32).reshape(1, 16)
    # fc2 weight/bias zero-padded to 128 lanes -> unmasked lane-dense output store.
    ops["wfc2"] = jnp.zeros((16, 128), jnp.float32).at[:, :10].set(
        p["w_fc2"].astype(jnp.float32))
    ops["bfc2"] = jnp.zeros((1, 128), jnp.float32).at[:, :10].set(
        p["b_fc2"].astype(jnp.float32).reshape(1, 10))
    ops["m28"] = _boundary_masks(B, 28)                                   # (2, B*28, 1)
    ops["m14"] = _boundary_masks(B, 14)                                   # (2, B*14, 1)
    return ops


# ----------------------------- pallas_call wrapper ---------------------------

def _const_spec(shape):
    nd = len(shape)
    return pl.BlockSpec(shape, lambda i, _nd=nd: (0,) * _nd)


def mnist_forward(x, p, *, batch_block=32):
    """x: (N, 1, 28, 28) float32 NCHW -> logits (N, 10). Matches MNISTModel.eval()."""
    n = x.shape[0]
    assert x.shape[1:] == (1, 28, 28), x.shape
    # Per-step image block B: multiple of 8 when the grid has >1 step (block
    # alignment); on v7x choose N/batch_block >= 2 so both TensorCores get work.
    if n > batch_block:
        B = max(8, (batch_block // 8) * 8)
    else:
        B = n
    n_pad = -(-n // B) * B
    xf = x.astype(jnp.float32)
    if n_pad != n:
        xf = jnp.concatenate(
            [xf, jnp.zeros((n_pad - n, 1, 28, 28), jnp.float32)], axis=0)
    xr = xf.reshape(n_pad * 28, 28)        # free relayout: rows = b*28 + h
    ops = _prepare_kernel_operands(p, B)

    out = pl.pallas_call(
        _mnist_fused_kernel,
        out_shape=jax.ShapeDtypeStruct((n_pad, 128), jnp.float32),
        grid=(n_pad // B,),
        in_specs=[
            pl.BlockSpec((B * 28, 28), lambda i: (i, 0)),   # B images per step
            _const_spec((2, B * 28, 1)),   # conv1 per-image boundary row masks
            _const_spec((2, B * 14, 1)),   # conv2 per-image boundary row masks
            _const_spec((84, 112)),        # conv1 folded 3-tap weight
            _const_spec((1, 112)),         # conv1 bias (tiled along lanes)
            _const_spec((168, 112)),       # conv2 folded 3-tap weight
            _const_spec((1, 112)),         # conv2 bias
            _const_spec((2, 112, 56)),     # pool1 even/odd column selectors
            _const_spec((2, 112, 56)),     # pool2 even/odd column selectors
            _const_spec((7, 56, 16)),      # fc1 weight (CHW flatten folded)
            _const_spec((1, 16)),          # fc1 bias
            _const_spec((16, 128)),        # fc2 weight, zero-padded to 128 lanes
            _const_spec((1, 128)),         # fc2 bias, zero-padded
        ],
        out_specs=pl.BlockSpec((B, 128), lambda i: (i, 0)),
        scratch_shapes=[
            pltpu.VMEM((B * 28 + 2, 28), jnp.float32),   # row-shift staging (conv1)
            pltpu.VMEM((B * 28, 84), jnp.float32),       # tap-folded conv1 LHS
            pltpu.VMEM((B * 14 + 2, 56), jnp.float32),   # row-shift staging (conv2)
            pltpu.VMEM((B * 14, 168), jnp.float32),      # tap-folded conv2 LHS
            pltpu.VMEM((B * 28, 112), jnp.float32),      # conv1+ReLU output
            pltpu.VMEM((B * 14, 112), jnp.float32),      # conv2+ReLU output
            pltpu.VMEM((B * 7, 56), jnp.float32),        # pooled conv2 output
        ],
        compiler_params=pltpu.CompilerParams(
            dimension_semantics=("parallel",)),          # image blocks shard across TCs
    )(xr, ops["m28"], ops["m14"], ops["w1"], ops["b1"], ops["w2"], ops["b2"],
      ops["cp1"], ops["cp2"], ops["wfc1"], ops["bfc1"], ops["wfc2"], ops["bfc2"])
    return out[:n, :10]


# ----------------------------- params & reference ----------------------------

def init_params(key):
    ks = jax.random.split(key, 8)
    f32 = jnp.float32
    return {
        # conv weights stored in PyTorch layout (O, C, kH, kW)
        "w_conv1": 0.1 * jax.random.normal(ks[0], (4, 1, 3, 3), f32),
        "b_conv1": 0.1 * jax.random.normal(ks[1], (4,), f32),
        "w_conv2": 0.1 * jax.random.normal(ks[2], (8, 4, 3, 3), f32),
        "b_conv2": 0.1 * jax.random.normal(ks[3], (8,), f32),
        # linear weights stored transposed ((in, out)): x @ w + b == torch x @ W.T + b
        "w_fc1": 0.05 * jax.random.normal(ks[4], (8 * 7 * 7, 16), f32),
        "b_fc1": 0.05 * jax.random.normal(ks[5], (1, 16), f32),
        "w_fc2": 0.05 * jax.random.normal(ks[6], (16, 10), f32),
        "b_fc2": 0.05 * jax.random.normal(ks[7], (1, 10), f32),
    }


def _reference_forward(x, p):
    """Plain-JAX/XLA reference of MNISTModel.eval() for numerical checking."""
    hi = lax.Precision.HIGHEST
    y = lax.conv_general_dilated(
        x, p["w_conv1"], (1, 1), ((1, 1), (1, 1)),
        dimension_numbers=("NCHW", "OIHW", "NCHW"), precision=hi)
    y = jax.nn.relu(y + p["b_conv1"][None, :, None, None])
    y = lax.reduce_window(y, -jnp.inf, lax.max, (1, 1, 2, 2), (1, 1, 2, 2), "VALID")
    y = lax.conv_general_dilated(
        y, p["w_conv2"], (1, 1), ((1, 1), (1, 1)),
        dimension_numbers=("NCHW", "OIHW", "NCHW"), precision=hi)
    y = jax.nn.relu(y + p["b_conv2"][None, :, None, None])
    y = lax.reduce_window(y, -jnp.inf, lax.max, (1, 1, 2, 2), (1, 1, 2, 2), "VALID")
    y = y.reshape(y.shape[0], -1)                 # NCHW flatten == torch .view
    y = jax.nn.relu(jnp.dot(y, p["w_fc1"], precision=hi) + p["b_fc1"])
    return jnp.dot(y, p["w_fc2"], precision=hi) + p["b_fc2"]


if __name__ == "__main__":
    key = jax.random.PRNGKey(0)
    k_x, k_p = jax.random.split(key)
    # 16 MNIST-shaped images, 8 per grid step -> 2-step "parallel" grid.
    x = jax.random.normal(k_x, (16, 1, 28, 28), jnp.float32)
    params = init_params(k_p)

    fwd = jax.jit(lambda xx, pp: mnist_forward(xx, pp, batch_block=8))
    out = jax.block_until_ready(fwd(x, params))

    assert out.shape == (16, 10), out.shape
    assert out.dtype == jnp.float32

    ref = jax.block_until_ready(jax.jit(_reference_forward)(x, params))
    err = float(np.max(np.abs(np.asarray(out) - np.asarray(ref))))
    assert np.allclose(np.asarray(out), np.asarray(ref), atol=1e-2, rtol=1e-2), err

    print("KERNEL_OK")
</pallas_src>

<mosaic_0001>
module attributes {stable_mosaic.version = 11 : i64} {
  func.func @_mnist_fused_kernel(%arg0: i32, %arg1: memref<224x28xf32, #tpu.memory_space<vmem>>, %arg2: memref<2x224x1xf32, #tpu.memory_space<vmem>>, %arg3: memref<2x112x1xf32, #tpu.memory_space<vmem>>, %arg4: memref<84x112xf32, #tpu.memory_space<vmem>>, %arg5: memref<1x112xf32, #tpu.memory_space<vmem>>, %arg6: memref<168x112xf32, #tpu.memory_space<vmem>>, %arg7: memref<1x112xf32, #tpu.memory_space<vmem>>, %arg8: memref<2x112x56xf32, #tpu.memory_space<vmem>>, %arg9: memref<2x112x56xf32, #tpu.memory_space<vmem>>, %arg10: memref<7x56x16xf32, #tpu.memory_space<vmem>>, %arg11: memref<1x16xf32, #tpu.memory_space<vmem>>, %arg12: memref<16x128xf32, #tpu.memory_space<vmem>>, %arg13: memref<1x128xf32, #tpu.memory_space<vmem>>, %arg14: memref<8x128xf32, #tpu.memory_space<vmem>>, %arg15: memref<226x28xf32, #tpu.memory_space<vmem>>, %arg16: memref<224x84xf32, #tpu.memory_space<vmem>>, %arg17: memref<114x56xf32, #tpu.memory_space<vmem>>, %arg18: memref<112x168xf32, #tpu.memory_space<vmem>>, %arg19: memref<224x112xf32, #tpu.memory_space<vmem>>, %arg20: memref<112x112xf32, #tpu.memory_space<vmem>>, %arg21: memref<56x56xf32, #tpu.memory_space<vmem>>) attributes {dimension_semantics = [#tpu.dimension_semantics<parallel>], iteration_bounds = array<i64: 2>, scalar_prefetch = 0 : i64, scratch_operands = 7 : i64, tpu.core_type = #tpu.core_type<tc>, window_params = [{transform_indices = @transform_0, window_bounds = array<i64: 224, 28>}, {pipeline_mode = #tpu.pipeline_mode<synchronous>, transform_indices = @transform_1, window_bounds = array<i64: 2, 224, 1>}, {pipeline_mode = #tpu.pipeline_mode<synchronous>, transform_indices = @transform_2, window_bounds = array<i64: 2, 112, 1>}, {pipeline_mode = #tpu.pipeline_mode<synchronous>, transform_indices = @transform_3, window_bounds = array<i64: 84, 112>}, {pipeline_mode = #tpu.pipeline_mode<synchronous>, transform_indices = @transform_4, window_bounds = array<i64: 1, 112>}, {pipeline_mode = #tpu.pipeline_mode<synchronous>, transform_indices = @transform_5, window_bounds = array<i64: 168, 112>}, {pipeline_mode = #tpu.pipeline_mode<synchronous>, transform_indices = @transform_6, window_bounds = array<i64: 1, 112>}, {pipeline_mode = #tpu.pipeline_mode<synchronous>, transform_indices = @transform_7, window_bounds = array<i64: 2, 112, 56>}, {pipeline_mode = #tpu.pipeline_mode<synchronous>, transform_indices = @transform_8, window_bounds = array<i64: 2, 112, 56>}, {pipeline_mode = #tpu.pipeline_mode<synchronous>, transform_indices = @transform_9, window_bounds = array<i64: 7, 56, 16>}, {pipeline_mode = #tpu.pipeline_mode<synchronous>, transform_indices = @transform_10, window_bounds = array<i64: 1, 16>}, {pipeline_mode = #tpu.pipeline_mode<synchronous>, transform_indices = @transform_11, window_bounds = array<i64: 16, 128>}, {pipeline_mode = #tpu.pipeline_mode<synchronous>, transform_indices = @transform_12, window_bounds = array<i64: 1, 128>}, {transform_indices = @transform_13, window_bounds = array<i64: 8, 128>}]} {
    %c0 = arith.constant 0 : index
    %c0_0 = arith.constant 0 : index
    %0 = vector.load %arg1[%c0, %c0_0] : memref<224x28xf32, #tpu.memory_space<vmem>>, vector<224x28xf32>
    %cst = arith.constant 0.000000e+00 : f32
    %1 = vector.broadcast %cst : f32 to vector<1x28xf32>
    %c0_1 = arith.constant 0 : index
    %c0_2 = arith.constant 0 : index
    %2 = vector.load %arg15[%c0_1, %c0_2] : memref<226x28xf32, #tpu.memory_space<vmem>>, vector<1x28xf32>
    tpu.vector_store %arg15[%c0_1, %c0_2], %1 {strides = array<i32>} : memref<226x28xf32, #tpu.memory_space<vmem>>, vector<1x28xf32>,
    %cst_3 = arith.constant 0.000000e+00 : f32
    %3 = vector.broadcast %cst_3 : f32 to vector<1x28xf32>
    %c225 = arith.constant 225 : index
    %c0_4 = arith.constant 0 : index
    %4 = vector.load %arg15[%c225, %c0_4] : memref<226x28xf32, #tpu.memory_space<vmem>>, vector<1x28xf32>
    tpu.vector_store %arg15[%c225, %c0_4], %3 {strides = array<i32>} : memref<226x28xf32, #tpu.memory_space<vmem>>, vector<1x28xf32>,
    %c1 = arith.constant 1 : index
    %c0_5 = arith.constant 0 : index
    %5 = vector.load %arg15[%c1, %c0_5] : memref<226x28xf32, #tpu.memory_space<vmem>>, vector<224x28xf32>
    tpu.vector_store %arg15[%c1, %c0_5], %0 {strides = array<i32>} : memref<226x28xf32, #tpu.memory_space<vmem>>, vector<224x28xf32>,
    %c0_6 = arith.constant 0 : index
    %c0_7 = arith.constant 0 : index
    %6 = vector.load %arg15[%c0_6, %c0_7] : memref<226x28xf32, #tpu.memory_space<vmem>>, vector<224x28xf32>
    %c0_8 = arith.constant 0 : index
    %c0_9 = arith.constant 0 : index
    %c0_10 = arith.constant 0 : index
    %7 = vector.load %arg2[%c0_8, %c0_9, %c0_10] : memref<2x224x1xf32, #tpu.memory_space<vmem>>, vector<1x224x1xf32>
    %8 = vector.shape_cast %7 : vector<1x224x1xf32> to vector<224x1xf32>
    %9 = vector.broadcast %8 : vector<224x1xf32> to vector<224x28xf32>
    %10 = arith.mulf %6, %9 : vector<224x28xf32>
    %c0_11 = arith.constant 0 : index
    %c0_12 = arith.constant 0 : index
    %11 = vector.load %arg16[%c0_11, %c0_12] : memref<224x84xf32, #tpu.memory_space<vmem>>, vector<224x28xf32>
    tpu.vector_store %arg16[%c0_11, %c0_12], %10 {strides = array<i32>} : memref<224x84xf32, #tpu.memory_space<vmem>>, vector<224x28xf32>,
    %c0_13 = arith.constant 0 : index
    %c28 = arith.constant 28 : index
    %12 = vector.load %arg16[%c0_13, %c28] : memref<224x84xf32, #tpu.memory_space<vmem>>, vector<224x28xf32>
    tpu.vector_store %arg16[%c0_13, %c28], %0 {strides = array<i32>} : memref<224x84xf32, #tpu.memory_space<vmem>>, vector<224x28xf32>,
    %c2 = arith.constant 2 : index
    %c0_14 = arith.constant 0 : index
    %13 = vector.load %arg15[%c2, %c0_14] : memref<226x28xf32, #tpu.memory_space<vmem>>, vector<224x28xf32>
    %c1_15 = arith.constant 1 : index
    %c0_16 = arith.constant 0 : index
    %c0_17 = arith.constant 0 : index
    %14 = vector.load %arg2[%c1_15, %c0_16, %c0_17] : memref<2x224x1xf32, #tpu.memory_space<vmem>>, vector<1x224x1xf32>
    %15 = vector.shape_cast %14 : vector<1x224x1xf32> to vector<224x1xf32>
    %16 = vector.broadcast %15 : vector<224x1xf32> to vector<224x28xf32>
    %17 = arith.mulf %13, %16 : vector<224x28xf32>
    %c0_18 = arith.constant 0 : index
    %c56 = arith.constant 56 : index
    %18 = vector.load %arg16[%c0_18, %c56] : memref<224x84xf32, #tpu.memory_space<vmem>>, vector<224x28xf32>
    tpu.vector_store %arg16[%c0_18, %c56], %17 {strides = array<i32>} : memref<224x84xf32, #tpu.memory_space<vmem>>, vector<224x28xf32>,
    %c0_19 = arith.constant 0 : index
    %c0_20 = arith.constant 0 : index
    %19 = vector.load %arg16[%c0_19, %c0_20] : memref<224x84xf32, #tpu.memory_space<vmem>>, vector<224x84xf32>
    %c0_21 = arith.constant 0 : index
    %c0_22 = arith.constant 0 : index
    %20 = vector.load %arg4[%c0_21, %c0_22] : memref<84x112xf32, #tpu.memory_space<vmem>>, vector<84x112xf32>
    %cst_23 = arith.constant dense<0.000000e+00> : vector<224x112xf32>
    %21 = tpu.matmul %19, %20, %cst_23 {dimension_numbers = #tpu.dot_dimension_numbers<[1], [0], [0], [1], [0, 0, 1, 1], [], []>} : vector<224x84xf32>, vector<84x112xf32>, vector<224x112xf32> -> vector<224x112xf32>
    %c0_24 = arith.constant 0 : index
    %c0_25 = arith.constant 0 : index
    %22 = vector.load %arg5[%c0_24, %c0_25] : memref<1x112xf32, #tpu.memory_space<vmem>>, vector<1x112xf32>
    %23 = vector.broadcast %22 : vector<1x112xf32> to vector<224x112xf32>
    %24 = arith.addf %21, %23 : vector<224x112xf32>
    %cst_26 = arith.constant 0.000000e+00 : f32
    %25 = vector.broadcast %cst_26 : f32 to vector<224x112xf32>
    %26 = arith.maximumf %24, %25 : vector<224x112xf32>
    %c0_27 = arith.constant 0 : index
    %c0_28 = arith.constant 0 : index
    %27 = vector.load %arg19[%c0_27, %c0_28] : memref<224x112xf32, #tpu.memory_space<vmem>>, vector<224x112xf32>
    tpu.vector_store %arg19[%c0_27, %c0_28], %26 {strides = array<i32>} : memref<224x112xf32, #tpu.memory_space<vmem>>, vector<224x112xf32>,
    %c0_29 = arith.constant 0 : index
    %c0_30 = arith.constant 0 : index
    %28 = tpu.strided_load %arg19[%c0_29, %c0_30] {strides = array<i32: 2, 1>} : memref<224x112xf32, #tpu.memory_space<vmem>>, vector<112x112xf32>
    %c1_31 = arith.constant 1 : index
    %c0_32 = arith.constant 0 : index
    %29 = tpu.strided_load %arg19[%c1_31, %c0_32] {strides = array<i32: 2, 1>} : memref<224x112xf32, #tpu.memory_space<vmem>>, vector<112x112xf32>
    %30 = arith.maximumf %28, %29 : vector<112x112xf32>
    %c0_33 = arith.constant 0 : index
    %c0_34 = arith.constant 0 : index
    %c0_35 = arith.constant 0 : index
    %31 = vector.load %arg8[%c0_33, %c0_34, %c0_35] : memref<2x112x56xf32, #tpu.memory_space<vmem>>, vector<1x112x56xf32>
    %32 = vector.shape_cast %31 : vector<1x112x56xf32> to vector<112x56xf32>
    %cst_36 = arith.constant dense<0.000000e+00> : vector<112x56xf32>
    %33 = tpu.matmul %30, %32, %cst_36 {dimension_numbers = #tpu.dot_dimension_numbers<[1], [0], [0], [1], [0, 0, 1, 1], [], []>} : vector<112x112xf32>, vector<112x56xf32>, vector<112x56xf32> -> vector<112x56xf32>
    %c1_37 = arith.constant 1 : index
    %c0_38 = arith.constant 0 : index
    %c0_39 = arith.constant 0 : index
    %34 = vector.load %arg8[%c1_37, %c0_38, %c0_39] : memref<2x112x56xf32, #tpu.memory_space<vmem>>, vector<1x112x56xf32>
    %35 = vector.shape_cast %34 : vector<1x112x56xf32> to vector<112x56xf32>
    %cst_40 = arith.constant dense<0.000000e+00> : vector<112x56xf32>
    %36 = tpu.matmul %30, %35, %cst_40 {dimension_numbers = #tpu.dot_dimension_numbers<[1], [0], [0], [1], [0, 0, 1, 1], [], []>} : vector<112x112xf32>, vector<112x56xf32>, vector<112x56xf32> -> vector<112x56xf32>
    %37 = arith.maximumf %33, %36 : vector<112x56xf32>
    %cst_41 = arith.constant 0.000000e+00 : f32
    %38 = vector.broadcast %cst_41 : f32 to vector<1x56xf32>
    %c0_42 = arith.constant 0 : index
    %c0_43 = arith.constant 0 : index
    %39 = vector.load %arg17[%c0_42, %c0_43] : memref<114x56xf32, #tpu.memory_space<vmem>>, vector<1x56xf32>
    tpu.vector_store %arg17[%c0_42, %c0_43], %38 {strides = array<i32>} : memref<114x56xf32, #tpu.memory_space<vmem>>, vector<1x56xf32>,
    %cst_44 = arith.constant 0.000000e+00 : f32
    %40 = vector.broadcast %cst_44 : f32 to vector<1x56xf32>
    %c113 = arith.constant 113 : index
    %c0_45 = arith.constant 0 : index
    %41 = vector.load %arg17[%c113, %c0_45] : memref<114x56xf32, #tpu.memory_space<vmem>>, vector<1x56xf32>
    tpu.vector_store %arg17[%c113, %c0_45], %40 {strides = array<i32>} : memref<114x56xf32, #tpu.memory_space<vmem>>, vector<1x56xf32>,
    %c1_46 = arith.constant 1 : index
    %c0_47 = arith.constant 0 : index
    %42 = vector.load %arg17[%c1_46, %c0_47] : memref<114x56xf32, #tpu.memory_space<vmem>>, vector<112x56xf32>
    tpu.vector_store %arg17[%c1_46, %c0_47], %37 {strides = array<i32>} : memref<114x56xf32, #tpu.memory_space<vmem>>, vector<112x56xf32>,
    %c0_48 = arith.constant 0 : index
    %c0_49 = arith.constant 0 : index
    %43 = vector.load %arg17[%c0_48, %c0_49] : memref<114x56xf32, #tpu.memory_space<vmem>>, vector<112x56xf32>
    %c0_50 = arith.constant 0 : index
    %c0_51 = arith.constant 0 : index
    %c0_52 = arith.constant 0 : index
    %44 = vector.load %arg3[%c0_50, %c0_51, %c0_52] : memref<2x112x1xf32, #tpu.memory_space<vmem>>, vector<1x112x1xf32>
    %45 = vector.shape_cast %44 : vector<1x112x1xf32> to vector<112x1xf32>
    %46 = vector.broadcast %45 : vector<112x1xf32> to vector<112x56xf32>
    %47 = arith.mulf %43, %46 : vector<112x56xf32>
    %c0_53 = arith.constant 0 : index
    %c0_54 = arith.constant 0 : index
    %48 = vector.load %arg18[%c0_53, %c0_54] : memref<112x168xf32, #tpu.memory_space<vmem>>, vector<112x56xf32>
    tpu.vector_store %arg18[%c0_53, %c0_54], %47 {strides = array<i32>} : memref<112x168xf32, #tpu.memory_space<vmem>>, vector<112x56xf32>,
    %c0_55 = arith.constant 0 : index
    %c56_56 = arith.constant 56 : index
    %49 = vector.load %arg18[%c0_55, %c56_56] : memref<112x168xf32, #tpu.memory_space<vmem>>, vector<112x56xf32>
    tpu.vector_store %arg18[%c0_55, %c56_56], %37 {strides = array<i32>} : memref<112x168xf32, #tpu.memory_space<vmem>>, vector<112x56xf32>,
    %c2_57 = arith.constant 2 : index
    %c0_58 = arith.constant 0 : index
    %50 = vector.load %arg17[%c2_57, %c0_58] : memref<114x56xf32, #tpu.memory_space<vmem>>, vector<112x56xf32>
    %c1_59 = arith.constant 1 : index
    %c0_60 = arith.constant 0 : index
    %c0_61 = arith.constant 0 : index
    %51 = vector.load %arg3[%c1_59, %c0_60, %c0_61] : memref<2x112x1xf32, #tpu.memory_space<vmem>>, vector<1x112x1xf32>
    %52 = vector.shape_cast %51 : vector<1x112x1xf32> to vector<112x1xf32>
    %53 = vector.broadcast %52 : vector<112x1xf32> to vector<112x56xf32>
    %54 = arith.mulf %50, %53 : vector<112x56xf32>
    %c0_62 = arith.constant 0 : index
    %c112 = arith.constant 112 : index
    %55 = vector.load %arg18[%c0_62, %c112] : memref<112x168xf32, #tpu.memory_space<vmem>>, vector<112x56xf32>
    tpu.vector_store %arg18[%c0_62, %c112], %54 {strides = array<i32>} : memref<112x168xf32, #tpu.memory_space<vmem>>, vector<112x56xf32>,
    %c0_63 = arith.constant 0 : index
    %c0_64 = arith.constant 0 : index
    %56 = vector.load %arg18[%c0_63, %c0_64] : memref<112x168xf32, #tpu.memory_space<vmem>>, vector<112x168xf32>
    %c0_65 = arith.constant 0 : index
    %c0_66 = arith.constant 0 : index
    %57 = vector.load %arg6[%c0_65, %c0_66] : memref<168x112xf32, #tpu.memory_space<vmem>>, vector<168x112xf32>
    %cst_67 = arith.constant dense<0.000000e+00> : vector<112x112xf32>
    %58 = tpu.matmul %56, %57, %cst_67 {dimension_numbers = #tpu.dot_dimension_numbers<[1], [0], [0], [1], [0, 0, 1, 1], [], []>} : vector<112x168xf32>, vector<168x112xf32>, vector<112x112xf32> -> vector<112x112xf32>
    %c0_68 = arith.constant 0 : index
    %c0_69 = arith.constant 0 : index
    %59 = vector.load %arg7[%c0_68, %c0_69] : memref<1x112xf32, #tpu.memory_space<vmem>>, vector<1x112xf32>
    %60 = vector.broadcast %59 : vector<1x112xf32> to vector<112x112xf32>
    %61 = arith.addf %58, %60 : vector<112x112xf32>
    %cst_70 = arith.constant 0.000000e+00 : f32
    %62 = vector.broadcast %cst_70 : f32 to vector<112x112xf32>
    %63 = arith.maximumf %61, %62 : vector<112x112xf32>
    %c0_71 = arith.constant 0 : index
    %c0_72 = arith.constant 0 : index
    %64 = vector.load %arg20[%c0_71, %c0_72] : memref<112x112xf32, #tpu.memory_space<vmem>>, vector<112x112xf32>
    tpu.vector_store %arg20[%c0_71, %c0_72], %63 {strides = array<i32>} : memref<112x112xf32, #tpu.memory_space<vmem>>, vector<112x112xf32>,
    %c0_73 = arith.constant 0 : index
    %c0_74 = arith.constant 0 : index
    %65 = tpu.strided_load %arg20[%c0_73, %c0_74] {strides = array<i32: 2, 1>} : memref<112x112xf32, #tpu.memory_space<vmem>>, vector<56x112xf32>
    %c1_75 = arith.constant 1 : index
    %c0_76 = arith.constant 0 : index
    %66 = tpu.strided_load %arg20[%c1_75, %c0_76] {strides = array<i32: 2, 1>} : memref<112x112xf32, #tpu.memory_space<vmem>>, vector<56x112xf32>
    %67 = arith.maximumf %65, %66 : vector<56x112xf32>
    %c0_77 = arith.constant 0 : index
    %c0_78 = arith.constant 0 : index
    %c0_79 = arith.constant 0 : index
    %68 = vector.load %arg9[%c0_77, %c0_78, %c0_79] : memref<2x112x56xf32, #tpu.memory_space<vmem>>, vector<1x112x56xf32>
    %69 = vector.shape_cast %68 : vector<1x112x56xf32> to vector<112x56xf32>
    %cst_80 = arith.constant dense<0.000000e+00> : vector<56x56xf32>
    %70 = tpu.matmul %67, %69, %cst_80 {dimension_numbers = #tpu.dot_dimension_numbers<[1], [0], [0], [1], [0, 0, 1, 1], [], []>} : vector<56x112xf32>, vector<112x56xf32>, vector<56x56xf32> -> vector<56x56xf32>
    %c1_81 = arith.constant 1 : index
    %c0_82 = arith.constant 0 : index
    %c0_83 = arith.constant 0 : index
    %71 = vector.load %arg9[%c1_81, %c0_82, %c0_83] : memref<2x112x56xf32, #tpu.memory_space<vmem>>, vector<1x112x56xf32>
    %72 = vector.shape_cast %71 : vector<1x112x56xf32> to vector<112x56xf32>
    %cst_84 = arith.constant dense<0.000000e+00> : vector<56x56xf32>
    %73 = tpu.matmul %67, %72, %cst_84 {dimension_numbers = #tpu.dot_dimension_numbers<[1], [0], [0], [1], [0, 0, 1, 1], [], []>} : vector<56x112xf32>, vector<112x56xf32>, vector<56x56xf32> -> vector<56x56xf32>
    %74 = arith.maximumf %70, %73 : vector<56x56xf32>
    %c0_85 = arith.constant 0 : index
    %c0_86 = arith.constant 0 : index
    %75 = vector.load %arg21[%c0_85, %c0_86] : memref<56x56xf32, #tpu.memory_space<vmem>>, vector<56x56xf32>
    tpu.vector_store %arg21[%c0_85, %c0_86], %74 {strides = array<i32>} : memref<56x56xf32, #tpu.memory_space<vmem>>, vector<56x56xf32>,
    %cst_87 = arith.constant 0.000000e+00 : f32
    %76 = vector.broadcast %cst_87 : f32 to vector<8x16xf32>
    %c0_88 = arith.constant 0 : index
    %c0_89 = arith.constant 0 : index
    %77 = tpu.strided_load %arg21[%c0_88, %c0_89] {strides = array<i32: 7, 1>} : memref<56x56xf32, #tpu.memory_space<vmem>>, vector<8x56xf32>
    %c0_90 = arith.constant 0 : index
    %c0_91 = arith.constant 0 : index
    %c0_92 = arith.constant 0 : index
    %78 = vector.load %arg10[%c0_90, %c0_91, %c0_92] : memref<7x56x16xf32, #tpu.memory_space<vmem>>, vector<1x56x16xf32>
    %79 = vector.shape_cast %78 : vector<1x56x16xf32> to vector<56x16xf32>
    %cst_93 = arith.constant dense<0.000000e+00> : vector<8x16xf32>
    %80 = tpu.matmul %77, %79, %cst_93 {dimension_numbers = #tpu.dot_dimension_numbers<[1], [0], [0], [1], [0, 0, 1, 1], [], []>} : vector<8x56xf32>, vector<56x16xf32>, vector<8x16xf32> -> vector<8x16xf32>
    %81 = arith.addf %76, %80 : vector<8x16xf32>
    %c1_94 = arith.constant 1 : index
    %c0_95 = arith.constant 0 : index
    %82 = tpu.strided_load %arg21[%c1_94, %c0_95] {strides = array<i32: 7, 1>} : memref<56x56xf32, #tpu.memory_space<vmem>>, vector<8x56xf32>
    %c1_96 = arith.constant 1 : index
    %c0_97 = arith.constant 0 : index
    %c0_98 = arith.constant 0 : index
    %83 = vector.load %arg10[%c1_96, %c0_97, %c0_98] : memref<7x56x16xf32, #tpu.memory_space<vmem>>, vector<1x56x16xf32>
    %84 = vector.shape_cast %83 : vector<1x56x16xf32> to vector<56x16xf32>
    %cst_99 = arith.constant dense<0.000000e+00> : vector<8x16xf32>
    %85 = tpu.matmul %82, %84, %cst_99 {dimension_numbers = #tpu.dot_dimension_numbers<[1], [0], [0], [1], [0, 0, 1, 1], [], []>} : vector<8x56xf32>, vector<56x16xf32>, vector<8x16xf32> -> vector<8x16xf32>
    %86 = arith.addf %81, %85 : vector<8x16xf32>
    %c2_100 = arith.constant 2 : index
    %c0_101 = arith.constant 0 : index
    %87 = tpu.strided_load %arg21[%c2_100, %c0_101] {strides = array<i32: 7, 1>} : memref<56x56xf32, #tpu.memory_space<vmem>>, vector<8x56xf32>
    %c2_102 = arith.constant 2 : index
    %c0_103 = arith.constant 0 : index
    %c0_104 = arith.constant 0 : index
    %88 = vector.load %arg10[%c2_102, %c0_103, %c0_104] : memref<7x56x16xf32, #tpu.memory_space<vmem>>, vector<1x56x16xf32>
    %89 = vector.shape_cast %88 : vector<1x56x16xf32> to vector<56x16xf32>
    %cst_105 = arith.constant dense<0.000000e+00> : vector<8x16xf32>
    %90 = tpu.matmul %87, %89, %cst_105 {dimension_numbers = #tpu.dot_dimension_numbers<[1], [0], [0], [1], [0, 0, 1, 1], [], []>} : vector<8x56xf32>, vector<56x16xf32>, vector<8x16xf32> -> vector<8x16xf32>
    %91 = arith.addf %86, %90 : vector<8x16xf32>
    %c3 = arith.constant 3 : index
    %c0_106 = arith.constant 0 : index
    %92 = tpu.strided_load %arg21[%c3, %c0_106] {strides = array<i32: 7, 1>} : memref<56x56xf32, #tpu.memory_space<vmem>>, vector<8x56xf32>
    %c3_107 = arith.constant 3 : index
    %c0_108 = arith.constant 0 : index
    %c0_109 = arith.constant 0 : index
    %93 = vector.load %arg10[%c3_107, %c0_108, %c0_109] : memref<7x56x16xf32, #tpu.memory_space<vmem>>, vector<1x56x16xf32>
    %94 = vector.shape_cast %93 : vector<1x56x16xf32> to vector<56x16xf32>
    %cst_110 = arith.constant dense<0.000000e+00> : vector<8x16xf32>
    %95 = tpu.matmul %92, %94, %cst_110 {dimension_numbers = #tpu.dot_dimension_numbers<[1], [0], [0], [1], [0, 0, 1, 1], [], []>} : vector<8x56xf32>, vector<56x16xf32>, vector<8x16xf32> -> vector<8x16xf32>
    %96 = arith.addf %91, %95 : vector<8x16xf32>
    %c4 = arith.constant 4 : index
    %c0_111 = arith.constant 0 : index
    %97 = tpu.strided_load %arg21[%c4, %c0_111] {strides = array<i32: 7, 1>} : memref<56x56xf32, #tpu.memory_space<vmem>>, vector<8x56xf32>
    %c4_112 = arith.constant 4 : index
    %c0_113 = arith.constant 0 : index
    %c0_114 = arith.constant 0 : index
    %98 = vector.load %arg10[%c4_112, %c0_113, %c0_114] : memref<7x56x16xf32, #tpu.memory_space<vmem>>, vector<1x56x16xf32>
    %99 = vector.shape_cast %98 : vector<1x56x16xf32> to vector<56x16xf32>
    %cst_115 = arith.constant dense<0.000000e+00> : vector<8x16xf32>
    %100 = tpu.matmul %97, %99, %cst_115 {dimension_numbers = #tpu.dot_dimension_numbers<[1], [0], [0], [1], [0, 0, 1, 1], [], []>} : vector<8x56xf32>, vector<56x16xf32>, vector<8x16xf32> -> vector<8x16xf32>
    %101 = arith.addf %96, %100 : vector<8x16xf32>
    %c5 = arith.constant 5 : index
    %c0_116 = arith.constant 0 : index
    %102 = tpu.strided_load %arg21[%c5, %c0_116] {strides = array<i32: 7, 1>} : memref<56x56xf32, #tpu.memory_space<vmem>>, vector<8x56xf32>
    %c5_117 = arith.constant 5 : index
    %c0_118 = arith.constant 0 : index
    %c0_119 = arith.constant 0 : index
    %103 = vector.load %arg10[%c5_117, %c0_118, %c0_119] : memref<7x56x16xf32, #tpu.memory_space<vmem>>, vector<1x56x16xf32>
    %104 = vector.shape_cast %103 : vector<1x56x16xf32> to vector<56x16xf32>
    %cst_120 = arith.constant dense<0.000000e+00> : vector<8x16xf32>
    %105 = tpu.matmul %102, %104, %cst_120 {dimension_numbers = #tpu.dot_dimension_numbers<[1], [0], [0], [1], [0, 0, 1, 1], [], []>} : vector<8x56xf32>, vector<56x16xf32>, vector<8x16xf32> -> vector<8x16xf32>
    %106 = arith.addf %101, %105 : vector<8x16xf32>
    %c6 = arith.constant 6 : index
    %c0_121 = arith.constant 0 : index
    %107 = tpu.strided_load %arg21[%c6, %c0_121] {strides = array<i32: 7, 1>} : memref<56x56xf32, #tpu.memory_space<vmem>>, vector<8x56xf32>
    %c6_122 = arith.constant 6 : index
    %c0_123 = arith.constant 0 : index
    %c0_124 = arith.constant 0 : index
    %108 = vector.load %arg10[%c6_122, %c0_123, %c0_124] : memref<7x56x16xf32, #tpu.memory_space<vmem>>, vector<1x56x16xf32>
    %109 = vector.shape_cast %108 : vector<1x56x16xf32> to vector<56x16xf32>
    %cst_125 = arith.constant dense<0.000000e+00> : vector<8x16xf32>
    %110 = tpu.matmul %107, %109, %cst_125 {dimension_numbers = #tpu.dot_dimension_numbers<[1], [0], [0], [1], [0, 0, 1, 1], [], []>} : vector<8x56xf32>, vector<56x16xf32>, vector<8x16xf32> -> vector<8x16xf32>
    %111 = arith.addf %106, %110 : vector<8x16xf32>
    %c0_126 = arith.constant 0 : index
    %c0_127 = arith.constant 0 : index
    %112 = vector.load %arg11[%c0_126, %c0_127] : memref<1x16xf32, #tpu.memory_space<vmem>>, vector<1x16xf32>
    %113 = vector.broadcast %112 : vector<1x16xf32> to vector<8x16xf32>
    %114 = arith.addf %111, %113 : vector<8x16xf32>
    %cst_128 = arith.constant 0.000000e+00 : f32
    %115 = vector.broadcast %cst_128 : f32 to vector<8x16xf32>
    %116 = arith.maximumf %114, %115 : vector<8x16xf32>
    %c0_129 = arith.constant 0 : index
    %c0_130 = arith.constant 0 : index
    %117 = vector.load %arg12[%c0_129, %c0_130] : memref<16x128xf32, #tpu.memory_space<vmem>>, vector<16x128xf32>
    %cst_131 = arith.constant dense<0.000000e+00> : vector<8x128xf32>
    %118 = tpu.matmul %116, %117, %cst_131 {dimension_numbers = #tpu.dot_dimension_numbers<[1], [0], [0], [1], [0, 0, 1, 1], [], []>} : vector<8x16xf32>, vector<16x128xf32>, vector<8x128xf32> -> vector<8x128xf32>
    %c0_132 = arith.constant 0 : index
    %c0_133 = arith.constant 0 : index
    %119 = vector.load %arg13[%c0_132, %c0_133] : memref<1x128xf32, #tpu.memory_space<vmem>>, vector<1x128xf32>
    %120 = vector.broadcast %119 : vector<1x128xf32> to vector<8x128xf32>
    %121 = arith.addf %118, %120 : vector<8x128xf32>
    %c0_134 = arith.constant 0 : index
    %c0_135 = arith.constant 0 : index
    %122 = vector.load %arg14[%c0_134, %c0_135] : memref<8x128xf32, #tpu.memory_space<vmem>>, vector<8x128xf32>
    tpu.vector_store %arg14[%c0_134, %c0_135], %121 {strides = array<i32>} : memref<8x128xf32, #tpu.memory_space<vmem>>, vector<8x128xf32>,
    return
  }
  func.func @transform_0(%arg0: i32) -> (i32, i32) {
    %c0_i32 = arith.constant 0 : i32
    %c0_i32_0 = arith.constant 0 : i32
    return %arg0, %c0_i32 : i32, i32
  }
  func.func @transform_1(%arg0: i32) -> (i32, i32, i32) {
    %c0_i32 = arith.constant 0 : i32
    %c0_i32_0 = arith.constant 0 : i32
    %c0_i32_1 = arith.constant 0 : i32
    %c0_i32_2 = arith.constant 0 : i32
    return %c0_i32, %c0_i32_0, %c0_i32_1 : i32, i32, i32
  }
  func.func @transform_2(%arg0: i32) -> (i32, i32, i32) {
    %c0_i32 = arith.constant 0 : i32
    %c0_i32_0 = arith.constant 0 : i32
    %c0_i32_1 = arith.constant 0 : i32
    %c0_i32_2 = arith.constant 0 : i32
    return %c0_i32, %c0_i32_0, %c0_i32_1 : i32, i32, i32
  }
  func.func @transform_3(%arg0: i32) -> (i32, i32) {
    %c0_i32 = arith.constant 0 : i32
    %c0_i32_0 = arith.constant 0 : i32
    %c0_i32_1 = arith.constant 0 : i32
    return %c0_i32, %c0_i32_0 : i32, i32
  }
  func.func @transform_4(%arg0: i32) -> (i32, i32) {
    %c0_i32 = arith.constant 0 : i32
    %c0_i32_0 = arith.constant 0 : i32
    %c0_i32_1 = arith.constant 0 : i32
    return %c0_i32, %c0_i32_0 : i32, i32
  }
  func.func @transform_5(%arg0: i32) -> (i32, i32) {
    %c0_i32 = arith.constant 0 : i32
    %c0_i32_0 = arith.constant 0 : i32
    %c0_i32_1 = arith.constant 0 : i32
    return %c0_i32, %c0_i32_0 : i32, i32
  }
  func.func @transform_6(%arg0: i32) -> (i32, i32) {
    %c0_i32 = arith.constant 0 : i32
    %c0_i32_0 = arith.constant 0 : i32
    %c0_i32_1 = arith.constant 0 : i32
    return %c0_i32, %c0_i32_0 : i32, i32
  }
  func.func @transform_7(%arg0: i32) -> (i32, i32, i32) {
    %c0_i32 = arith.constant 0 : i32
    %c0_i32_0 = arith.constant 0 : i32
    %c0_i32_1 = arith.constant 0 : i32
    %c0_i32_2 = arith.constant 0 : i32
    return %c0_i32, %c0_i32_0, %c0_i32_1 : i32, i32, i32
  }
  func.func @transform_8(%arg0: i32) -> (i32, i32, i32) {
    %c0_i32 = arith.constant 0 : i32
    %c0_i32_0 = arith.constant 0 : i32
    %c0_i32_1 = arith.constant 0 : i32
    %c0_i32_2 = arith.constant 0 : i32
    return %c0_i32, %c0_i32_0, %c0_i32_1 : i32, i32, i32
  }
  func.func @transform_9(%arg0: i32) -> (i32, i32, i32) {
    %c0_i32 = arith.constant 0 : i32
    %c0_i32_0 = arith.constant 0 : i32
    %c0_i32_1 = arith.constant 0 : i32
    %c0_i32_2 = arith.constant 0 : i32
    return %c0_i32, %c0_i32_0, %c0_i32_1 : i32, i32, i32
  }
  func.func @transform_10(%arg0: i32) -> (i32, i32) {
    %c0_i32 = arith.constant 0 : i32
    %c0_i32_0 = arith.constant 0 : i32
    %c0_i32_1 = arith.constant 0 : i32
    return %c0_i32, %c0_i32_0 : i32, i32
  }
  func.func @transform_11(%arg0: i32) -> (i32, i32) {
    %c0_i32 = arith.constant 0 : i32
    %c0_i32_0 = arith.constant 0 : i32
    %c0_i32_1 = arith.constant 0 : i32
    return %c0_i32, %c0_i32_0 : i32, i32
  }
  func.func @transform_12(%arg0: i32) -> (i32, i32) {
    %c0_i32 = arith.constant 0 : i32
    %c0_i32_0 = arith.constant 0 : i32
    %c0_i32_1 = arith.constant 0 : i32
    return %c0_i32, %c0_i32_0 : i32, i32
  }
  func.func @transform_13(%arg0: i32) -> (i32, i32) {
    %c0_i32 = arith.constant 0 : i32
    %c0_i32_0 = arith.constant 0 : i32
    return %arg0, %c0_i32 : i32, i32
  }
}

</mosaic_0001>

<llo_original>
// kernel: tile.13
$region0: #{tile.13}
  #allocation0 [shape = 's32[1]{0}', space=sflag, size = 0x4, scoped, tag = 'scoped memory for tile.13']
  %s0 = inlined_call_operand.vmem [shape: f32[4], index: 0, kind: input, shape index: {}]
  %s1 = inlined_call_operand.vmem [shape: f32[28,4], index: 1, kind: output, shape index: {}]
  // Predicated region
  $region2: #{tile.13} parent=0 // pred_check
    _
  $region3: #{tile.13} parent=0 // pred_check_branch
    %3 = sbr.rel (0) target = $region5
  $region4: #{tile.13} parent=0 // pred_region
    _
  $region5: #{tile.13} parent=0 // pred_fallthru
    _
  %v4 = vld [vmem:[%s0] ss:$0 sm:$0xff]
  %5 = vst [vmem:[%s1] sm:$0xff] %v4
  %s6 = scalar_lea.vmem %s1, 8
  %7 = vst [vmem:[%s6] sm:$0xff] %v4
  %s8 = scalar_lea.vmem %s1, 16
  %9 = vst [vmem:[%s8] sm:$0xff] %v4
  %s10 = scalar_lea.vmem %s1, 24
  %11 = vst [vmem:[%s10] sm:$0xff] %v4

// kernel: tile.14
$region0: #{tile.14}
  %s0 = inlined_call_operand.vmem [shape: f32[28,4], index: 0, kind: input, shape index: {}]
  %s1 = inlined_call_operand.vmem [shape: f32[1,112], index: 1, kind: output, shape index: {}]
  $region1: #{tile.14} parent=0
    #allocation0 [shape = 'u8[4096]{0}', space=vmem, size = 0x1000, scoped, tag = 'scoped mem for output reshape']
    %v2 = vld [vmem:[%s0] sm:$0x1]
    %vm3 = vcmask 31744
    %4 = vst.msk [vmem:[#allocation0] sm:$0x1] %vm3, %v2
    %s5 = scalar_lea.vmem %s0, 27
    %v6 = vld [vmem:[%s5] sm:$0x1]
    %7 = vrot.lane.b32.xlu0 %v6, 108
    %v8 = vpop.permute.xlu0 %7
    %vm9 = vcmask 917344
    %10 = vst.msk [vmem:[#allocation0] sm:$0x1] %vm9, %v8
    %s11 = scalar_lea.vmem %s0, 26
    %v12 = vld [vmem:[%s11] sm:$0x1]
    %13 = vrot.lane.b32.xlu0 %v12, 104
    %v14 = vpop.permute.xlu0 %13
    %vm15 = vcmask 884544
    %16 = vst.msk [vmem:[#allocation0] sm:$0x1] %vm15, %v14
    %s17 = scalar_lea.vmem %s0, 25
    %v18 = vld [vmem:[%s17] sm:$0x1]
    %19 = vrot.lane.b32.xlu0 %v18, 100
    %v20 = vpop.permute.xlu0 %19
    %vm21 = vcmask 851744
    %22 = vst.msk [vmem:[#allocation0] sm:$0x1] %vm21, %v20
    %s23 = scalar_lea.vmem %s0, 24
    %v24 = vld [vmem:[%s23] sm:$0x1]
    %25 = vrot.lane.b32.xlu0 %v24, 96
    %v26 = vpop.permute.xlu0 %25
    %vm27 = vcmask 818944
    %28 = vst.msk [vmem:[#allocation0] sm:$0x1] %vm27, %v26
    %s29 = scalar_lea.vmem %s0, 23
    %v30 = vld [vmem:[%s29] sm:$0x1]
    %31 = vrot.lane.b32.xlu0 %v30, 92
    %v32 = vpop.permute.xlu0 %31
    %vm33 = vcmask 786144
    %34 = vst.msk [vmem:[#allocation0] sm:$0x1] %vm33, %v32
    %s35 = scalar_lea.vmem %s0, 22
    %v36 = vld [vmem:[%s35] sm:$0x1]
    %37 = vrot.lane.b32.xlu0 %v36, 88
    %v38 = vpop.permute.xlu0 %37
    %vm39 = vcmask 753344
    %40 = vst.msk [vmem:[#allocation0] sm:$0x1] %vm39, %v38
    %s41 = scalar_lea.vmem %s0, 21
    %v42 = vld [vmem:[%s41] sm:$0x1]
    %43 = vrot.lane.b32.xlu0 %v42, 84
    %v44 = vpop.permute.xlu0 %43
    %vm45 = vcmask 720544
    %46 = vst.msk [vmem:[#allocation0] sm:$0x1] %vm45, %v44
    %s47 = scalar_lea.vmem %s0, 20
    %v48 = vld [vmem:[%s47] sm:$0x1]
    %49 = vrot.lane.b32.xlu0 %v48, 80
    %v50 = vpop.permute.xlu0 %49
    %vm51 = vcmask 687744
    %52 = vst.msk [vmem:[#allocation0] sm:$0x1] %vm51, %v50
    %s53 = scalar_lea.vmem %s0, 19
    %v54 = vld [vmem:[%s53] sm:$0x1]
    %55 = vrot.lane.b32.xlu0 %v54, 76
    %v56 = vpop.permute.xlu0 %55
    %vm57 = vcmask 654944
    %58 = vst.msk [vmem:[#allocation0] sm:$0x1] %vm57, %v56
    %s59 = scalar_lea.vmem %s0, 18
    %v60 = vld [vmem:[%s59] sm:$0x1]
    %61 = vrot.lane.b32.xlu0 %v60, 72
    %v62 = vpop.permute.xlu0 %61
    %vm63 = vcmask 622144
    %64 = vst.msk [vmem:[#allocation0] sm:$0x1] %vm63, %v62
    %s65 = scalar_lea.vmem %s0, 17
    %v66 = vld [vmem:[%s65] sm:$0x1]
    %67 = vrot.lane.b32.xlu0 %v66, 68
    %v68 = vpop.permute.xlu0 %67
    %vm69 = vcmask 589344
    %70 = vst.msk [vmem:[#allocation0] sm:$0x1] %vm69, %v68
    %s71 = scalar_lea.vmem %s0, 16
    %v72 = vld [vmem:[%s71] sm:$0x1]
    %73 = vrot.lane.b32.xlu0 %v72, 64
    %v74 = vpop.permute.xlu0 %73
    %vm75 = vcmask 556544
    %76 = vst.msk [vmem:[#allocation0] sm:$0x1] %vm75, %v74
    %s77 = scalar_lea.vmem %s0, 15
    %v78 = vld [vmem:[%s77] sm:$0x1]
    %79 = vrot.lane.b32.xlu0 %v78, 60
    %v80 = vpop.permute.xlu0 %79
    %vm81 = vcmask 523744
    %82 = vst.msk [vmem:[#allocation0] sm:$0x1] %vm81, %v80
    %s83 = scalar_lea.vmem %s0, 14
    %v84 = vld [vmem:[%s83] sm:$0x1]
    %85 = vrot.lane.b32.xlu0 %v84, 56
    %v86 = vpop.permute.xlu0 %85
    %vm87 = vcmask 490944
    %88 = vst.msk [vmem:[#allocation0] sm:$0x1] %vm87, %v86
    %s89 = scalar_lea.vmem %s0, 13
    %v90 = vld [vmem:[%s89] sm:$0x1]
    %91 = vrot.lane.b32.xlu0 %v90, 52
    %v92 = vpop.permute.xlu0 %91
    %vm93 = vcmask 458144
    %94 = vst.msk [vmem:[#allocation0] sm:$0x1] %vm93, %v92
    %s95 = scalar_lea.vmem %s0, 12
    %v96 = vld [vmem:[%s95] sm:$0x1]
    %97 = vrot.lane.b32.xlu0 %v96, 48
    %v98 = vpop.permute.xlu0 %97
    %vm99 = vcmask 425344
    %100 = vst.msk [vmem:[#allocation0] sm:$0x1] %vm99, %v98
    %s101 = scalar_lea.vmem %s0, 11
    %v102 = vld [vmem:[%s101] sm:$0x1]
    %103 = vrot.lane.b32.xlu0 %v102, 44
    %v104 = vpop.permute.xlu0 %103
    %vm105 = vcmask 392544
    %106 = vst.msk [vmem:[#allocation0] sm:$0x1] %vm105, %v104
    %s107 = scalar_lea.vmem %s0, 10
    %v108 = vld [vmem:[%s107] sm:$0x1]
    %109 = vrot.lane.b32.xlu0 %v108, 40
    %v110 = vpop.permute.xlu0 %109
    %vm111 = vcmask 359744
    %112 = vst.msk [vmem:[#allocation0] sm:$0x1] %vm111, %v110
    %s113 = scalar_lea.vmem %s0, 9
    %v114 = vld [vmem:[%s113] sm:$0x1]
    %115 = vrot.lane.b32.xlu0 %v114, 36
    %v116 = vpop.permute.xlu0 %115
    %vm117 = vcmask 326944
    %118 = vst.msk [vmem:[#allocation0] sm:$0x1] %vm117, %v116
    %s119 = scalar_lea.vmem %s0, 8
    %v120 = vld [vmem:[%s119] sm:$0x1]
    %121 = vrot.lane.b32.xlu0 %v120, 32
    %v122 = vpop.permute.xlu0 %121
    %vm123 = vcmask 294144
    %124 = vst.msk [vmem:[#allocation0] sm:$0x1] %vm123, %v122
    %s125 = scalar_lea.vmem %s0, 7
    %v126 = vld [vmem:[%s125] sm:$0x1]
    %127 = vrot.lane.b32.xlu0 %v126, 28
    %v128 = vpop.permute.xlu0 %127
    %vm129 = vcmask 261344
    %130 = vst.msk [vmem:[#allocation0] sm:$0x1] %vm129, %v128
    %s131 = scalar_lea.vmem %s0, 6
    %v132 = vld [vmem:[%s131] sm:$0x1]
    %133 = vrot.lane.b32.xlu0 %v132, 24
    %v134 = vpop.permute.xlu0 %133
    %vm135 = vcmask 228544
    %136 = vst.msk [vmem:[#allocation0] sm:$0x1] %vm135, %v134
    %s137 = scalar_lea.vmem %s0, 5
    %v138 = vld [vmem:[%s137] sm:$0x1]
    %139 = vrot.lane.b32.xlu0 %v138, 20
    %v140 = vpop.permute.xlu0 %139
    %vm141 = vcmask 195744
    %142 = vst.msk [vmem:[#allocation0] sm:$0x1] %vm141, %v140
    %s143 = scalar_lea.vmem %s0, 4
    %v144 = vld [vmem:[%s143] sm:$0x1]
    %145 = vrot.lane.b32.xlu0 %v144, 16
    %v146 = vpop.permute.xlu0 %145
    %vm147 = vcmask 162944
    %148 = vst.msk [vmem:[#allocation0] sm:$0x1] %vm147, %v146
    %s149 = scalar_lea.vmem %s0, 3
    %v150 = vld [vmem:[%s149] sm:$0x1]
    %151 = vrot.lane.b32.xlu0 %v150, 12
    %v152 = vpop.permute.xlu0 %151
    %vm153 = vcmask 130144
    %154 = vst.msk [vmem:[#allocation0] sm:$0x1] %vm153, %v152
    %s155 = scalar_lea.vmem %s0, 2
    %v156 = vld [vmem:[%s155] sm:$0x1]
    %157 = vrot.lane.b32.xlu0 %v156, 8
    %v158 = vpop.permute.xlu0 %157
    %vm159 = vcmask 97344
    %160 = vst.msk [vmem:[#allocation0] sm:$0x1] %vm159, %v158
    %s161 = scalar_lea.vmem %s0, 1
    %v162 = vld [vmem:[%s161] sm:$0x1]
    %163 = vrot.lane.b32.xlu0 %v162, 4
    %v164 = vpop.permute.xlu0 %163
    %vm165 = vcmask 64544
    %166 = vst.msk [vmem:[#allocation0] sm:$0x1] %vm165, %v164
    %s168 = ssub.s32 2, 1
    %v169 = vld [vmem:[#allocation0] sm:%s168]
    %s171 = ssub.s32 2, 1
    %172 = vst [vmem:[%s1] sm:%s171] %v169

// kernel: tile.18
$region0: #{tile.18}
  #allocation0 [shape = 's32[1]{0}', space=sflag, size = 0x4, scoped, tag = 'scoped memory for tile.18']
  %s0 = inlined_call_operand.vmem [shape: f32[8], index: 0, kind: input, shape index: {}]
  %s1 = inlined_call_operand.vmem [shape: f32[14,8], index: 1, kind: output, shape index: {}]
  // Predicated region
  $region2: #{tile.18} parent=0 // pred_check
    _
  $region3: #{tile.18} parent=0 // pred_check_branch
    %3 = sbr.rel (0) target = $region5
  $region4: #{tile.18} parent=0 // pred_region
    _
  $region5: #{tile.18} parent=0 // pred_fallthru
    _
  %v4 = vld [vmem:[%s0] ss:$0 sm:$0xff]
  %5 = vst [vmem:[%s1] sm:$0xff] %v4
  %s6 = scalar_lea.vmem %s1, 8
  %7 = vst [vmem:[%s6] sm:$0xff] %v4

// kernel: tile.19
$region0: #{tile.19}
  %s0 = inlined_call_operand.vmem [shape: f32[14,8], index: 0, kind: input, shape index: {}]
  %s1 = inlined_call_operand.vmem [shape: f32[1,112], index: 1, kind: output, shape index: {}]
  $region1: #{tile.19} parent=0
    #allocation0 [shape = 'u8[4096]{0}', space=vmem, size = 0x1000, scoped, tag = 'scoped mem for output reshape']
    %v2 = vld [vmem:[%s0] sm:$0x1]
    %vm3 = vcmask 64512
    %4 = vst.msk [vmem:[#allocation0] sm:$0x1] %vm3, %v2
    %s5 = scalar_lea.vmem %s0, 13
    %v6 = vld [vmem:[%s5] sm:$0x1]
    %7 = vrot.lane.b32.xlu0 %v6, 104
    %v8 = vpop.permute.xlu0 %7
    %vm9 = vcmask 917312
    %10 = vst.msk [vmem:[#allocation0] sm:$0x1] %vm9, %v8
    %s11 = scalar_lea.vmem %s0, 12
    %v12 = vld [vmem:[%s11] sm:$0x1]
    %13 = vrot.lane.b32.xlu0 %v12, 96
    %v14 = vpop.permute.xlu0 %13
    %vm15 = vcmask 851712
    %16 = vst.msk [vmem:[#allocation0] sm:$0x1] %vm15, %v14
    %s17 = scalar_lea.vmem %s0, 11
    %v18 = vld [vmem:[%s17] sm:$0x1]
    %19 = vrot.lane.b32.xlu0 %v18, 88
    %v20 = vpop.permute.xlu0 %19
    %vm21 = vcmask 786112
    %22 = vst.msk [vmem:[#allocation0] sm:$0x1] %vm21, %v20
    %s23 = scalar_lea.vmem %s0, 10
    %v24 = vld [vmem:[%s23] sm:$0x1]
    %25 = vrot.lane.b32.xlu0 %v24, 80
    %v26 = vpop.permute.xlu0 %25
    %vm27 = vcmask 720512
    %28 = vst.msk [vmem:[#allocation0] sm:$0x1] %vm27, %v26
    %s29 = scalar_lea.vmem %s0, 9
    %v30 = vld [vmem:[%s29] sm:$0x1]
    %31 = vrot.lane.b32.xlu0 %v30, 72
    %v32 = vpop.permute.xlu0 %31
    %vm33 = vcmask 654912
    %34 = vst.msk [vmem:[#allocation0] sm:$0x1] %vm33, %v32
    %s35 = scalar_lea.vmem %s0, 8
    %v36 = vld [vmem:[%s35] sm:$0x1]
    %37 = vrot.lane.b32.xlu0 %v36, 64
    %v38 = vpop.permute.xlu0 %37
    %vm39 = vcmask 589312
    %40 = vst.msk [vmem:[#allocation0] sm:$0x1] %vm39, %v38
    %s41 = scalar_lea.vmem %s0, 7
    %v42 = vld [vmem:[%s41] sm:$0x1]
    %43 = vrot.lane.b32.xlu0 %v42, 56
    %v44 = vpop.permute.xlu0 %43
    %vm45 = vcmask 523712
    %46 = vst.msk [vmem:[#allocation0] sm:$0x1] %vm45, %v44
    %s47 = scalar_lea.vmem %s0, 6
    %v48 = vld [vmem:[%s47] sm:$0x1]
    %49 = vrot.lane.b32.xlu0 %v48, 48
    %v50 = vpop.permute.xlu0 %49
    %vm51 = vcmask 458112
    %52 = vst.msk [vmem:[#allocation0] sm:$0x1] %vm51, %v50
    %s53 = scalar_lea.vmem %s0, 5
    %v54 = vld [vmem:[%s53] sm:$0x1]
    %55 = vrot.lane.b32.xlu0 %v54, 40
    %v56 = vpop.permute.xlu0 %55
    %vm57 = vcmask 392512
    %58 = vst.msk [vmem:[#allocation0] sm:$0x1] %vm57, %v56
    %s59 = scalar_lea.vmem %s0, 4
    %v60 = vld [vmem:[%s59] sm:$0x1]
    %61 = vrot.lane.b32.xlu0 %v60, 32
    %v62 = vpop.permute.xlu0 %61
    %vm63 = vcmask 326912
    %64 = vst.msk [vmem:[#allocation0] sm:$0x1] %vm63, %v62
    %s65 = scalar_lea.vmem %s0, 3
    %v66 = vld [vmem:[%s65] sm:$0x1]
    %67 = vrot.lane.b32.xlu0 %v66, 24
    %v68 = vpop.permute.xlu0 %67
    %vm69 = vcmask 261312
    %70 = vst.msk [vmem:[#allocation0] sm:$0x1] %vm69, %v68
    %s71 = scalar_lea.vmem %s0, 2
    %v72 = vld [vmem:[%s71] sm:$0x1]
    %73 = vrot.lane.b32.xlu0 %v72, 16
    %v74 = vpop.permute.xlu0 %73
    %vm75 = vcmask 195712
    %76 = vst.msk [vmem:[#allocation0] sm:$0x1] %vm75, %v74
    %s77 = scalar_lea.vmem %s0, 1
    %v78 = vld [vmem:[%s77] sm:$0x1]
    %79 = vrot.lane.b32.xlu0 %v78, 8
    %v80 = vpop.permute.xlu0 %79
    %vm81 = vcmask 130112
    %82 = vst.msk [vmem:[#allocation0] sm:$0x1] %vm81, %v80
    %s84 = ssub.s32 2, 1
    %v85 = vld [vmem:[#allocation0] sm:%s84]
    %s87 = ssub.s32 2, 1
    %88 = vst [vmem:[%s1] sm:%s87] %v85

// kernel: _lambda_.1
$region0: #{_lambda_.1}
  #allocation0 [shape = 'u32[]', space=smem, size = 0x4, offset = 0x4, fixed_abs, tag = 'smem constant byte address 0x4 - core index']
  #allocation1 [shape = 'u32[72,128]{1,0:T(1,128)}', space=vmem, size = 0x9000, scoped, tag = 'internal scratch']
  #allocation2 [shape = 'f32[226,28]{1,0:T(8,128)}', space=vmem, size = 0x1d000, scoped, tag = 'scratch operand']
  #allocation3 [shape = 'f32[224,84]{1,0:T(8,128)}', space=vmem, size = 0x1c000, scoped, tag = 'scratch operand']
  #allocation4 [shape = 'f32[114,56]{1,0:T(8,128)}', space=vmem, size = 0xf000, scoped, tag = 'scratch operand']
  #allocation5 [shape = 'f32[112,168]{1,0:T(8,128)}', space=vmem, size = 0x1c000, scoped, tag = 'scratch operand']
  #allocation6 [shape = 'f32[224,112]{1,0:T(8,128)}', space=vmem, size = 0x1c000, scoped, tag = 'scratch operand']
  #allocation7 [shape = 'f32[112,112]{1,0:T(8,128)}', space=vmem, size = 0xe000, scoped, tag = 'scratch operand']
  #allocation8 [shape = 'f32[56,56]{1,0:T(8,128)}', space=vmem, size = 0x7000, scoped, tag = 'scratch operand']
  %s0 = inlined_call_operand.vmem [shape: f32[448,28], index: 0, kind: input, shape index: {}]
  %s1 = inlined_call_operand.vmem [shape: f32[2,224,1], index: 1, kind: input, shape index: {}]
  %s2 = inlined_call_operand.vmem [shape: f32[2,112,1], index: 2, kind: input, shape index: {}]
  %s3 = inlined_call_operand.vmem [shape: f32[84,112], index: 3, kind: input, shape index: {}]
  %s4 = inlined_call_operand.vmem [shape: f32[1,112], index: 4, kind: input, shape index: {}]
  %s5 = inlined_call_operand.vmem [shape: f32[168,112], index: 5, kind: input, shape index: {}]
  %s6 = inlined_call_operand.vmem [shape: f32[1,112], index: 6, kind: input, shape index: {}]
  %s7 = inlined_call_operand.vmem [shape: f32[2,112,56], index: 7, kind: input, shape index: {}]
  %s8 = inlined_call_operand.vmem [shape: f32[2,112,56], index: 8, kind: input, shape index: {}]
  %s9 = inlined_call_operand.vmem [shape: f32[7,56,16], index: 9, kind: input, shape index: {}]
  %s10 = inlined_call_operand.vmem [shape: f32[1,16], index: 10, kind: input, shape index: {}]
  %s11 = inlined_call_operand.vmem [shape: f32[16,128], index: 11, kind: input, shape index: {}]
  %s12 = inlined_call_operand.vmem [shape: f32[1,128], index: 12, kind: input, shape index: {}]
  %s13 = inlined_call_operand.hbm [shape: f32[16,128], index: 13, kind: output, shape index: {}]
  %s14 = sld [smem:[#allocation0]]
  $region85: #{_lambda_.1} parent=0
    _
  %s16 = ssub.s32 1, %s14
  %s17 = scalar_select 0, %s16, %s14
  $region1: #{_lambda_.1} parent=0
    #allocation9 [shape = 'u8[8192]{0}', space=vmem, size = 0x2000, scoped, tag = 'output window, operand 0']
    #allocation10 [shape = 's32[2]{0}', space=sflag, size = 0x8, scoped, tag = 'scoped memory for _lambda_.1']
    %18 = vsyncpa [#allocation10], 0
    %s19 = scalar_lea.sflag [#allocation10], 1
    %20 = vsyncpa %s19, 0
    loop: start=0, step=1, limit=4
    $region2: #{_lambda_.1} parent=1 // loop_pre_header
      _
    $region3: #{_lambda_.1} parent=1 // loop_header
      %s22 = sphi 0, %s26
      %p23 = scmp.ge.s32.totalorder %s22, 4
      %s32 = sphi 0, %s34
      %s35 = sphi 0, %s32
      %s36 = sphi 0, %s35
      %s52 = sphi 0, %s36
      %s56 = sphi 0, %s56
      %s58 = sphi 0, %s56
      %s59 = sphi 0, %s58
      %s73 = sphi 0, %s59
      %s77 = sphi 0, %s77
      %s79 = sphi 0, %s77
      %s80 = sphi 0, %s79
      %s94 = sphi 0, %s80
      %s98 = sphi 0, %s98
      %s100 = sphi 0, %s98
      %s101 = sphi 0, %s100
      %s115 = sphi 0, %s101
      %s119 = sphi 0, %s119
      %s121 = sphi 0, %s119
      %s122 = sphi 0, %s121
      %s136 = sphi 0, %s122
      %s140 = sphi 0, %s140
      %s142 = sphi 0, %s140
      %s143 = sphi 0, %s142
      %s157 = sphi 0, %s143
      %s161 = sphi 0, %s161
      %s163 = sphi 0, %s161
      %s164 = sphi 0, %s163
      %s178 = sphi 0, %s164
      %s182 = sphi 0, %s182
      %s184 = sphi 0, %s182
      %s185 = sphi 0, %s184
      %s199 = sphi 0, %s185
      %s203 = sphi 0, %s203
      %s205 = sphi 0, %s203
      %s206 = sphi 0, %s205
      %s220 = sphi 0, %s206
      %s224 = sphi 0, %s224
      %s226 = sphi 0, %s224
      %s227 = sphi 0, %s226
      %s241 = sphi 0, %s227
      %s245 = sphi 0, %s245
      %s247 = sphi 0, %s245
      %s248 = sphi 0, %s247
      %s262 = sphi 0, %s248
      %s266 = sphi 0, %s266
      %s268 = sphi 0, %s266
      %s269 = sphi 0, %s268
      %s283 = sphi 0, %s269
      %s287 = sphi 0, %s287
      %s289 = sphi 0, %s287
      %s290 = sphi 0, %s289
      %s304 = sphi 0, %s290
      %s310 = sphi 0, %s312
      %s313 = sphi 0, %s310
      %s314 = sphi 0, %s313
      %s330 = sphi 0, %s314
    $region4: #{_lambda_.1} parent=1 // loop_header_branch
      %25 = sbr.rel (%p23) target = $region8
    $region5: #{_lambda_.1} parent=1 // loop_body
      %s27 = ssub.s32 %s22, 1
      %s28 = ssub.s32 %s22, 2
      %s29 = sadd.s32 %s22, 1
      %s30 = ssub.s32 %s22, %s29
      %p31 = scmp.eq.s32.totalorder %s30, 0
      %s33 = sadd.s32 %s32, 1
      %s34 = scalar_select %p31, %s32, %s33
      %p37 = pneg %p31
      %p38 = scmp.eq.s32.totalorder %s22, 1
      %p39 = por %p37, %p38
      %p40 = scmp.ne.s32.totalorder %s32, %s35
      %p41 = scmp.eq.s32.totalorder %s22, 0
      %p42 = por %p40, %p41
      %p43 = scmp.ne.s32.totalorder %s32, %s35
      %p44 = scmp.eq.s32.totalorder %s27, 1
      %p45 = por %p43, %p44
      %p46 = scmp.ne.s32.totalorder %s35, %s36
      %p47 = scmp.eq.s32.totalorder %s27, 0
      %p48 = por %p46, %p47
      %p49 = scmp.ne.s32.totalorder %s35, %s36
      %p50 = scmp.eq.s32.totalorder %s28, 1
      %p51 = por %p49, %p50
      %p53 = scmp.ne.s32.totalorder %s36, %s52
      %p54 = scmp.eq.s32.totalorder %s28, 0
      %p55 = por %p53, %p54
      %s57 = sadd.s32 %s56, 1
      %p60 = scmp.eq.s32.totalorder %s22, 1
      %p61 = scmp.ne.s32.totalorder %s56, %s58
      %p62 = scmp.eq.s32.totalorder %s22, 0
      %p63 = por %p61, %p62
      %p64 = scmp.ne.s32.totalorder %s56, %s58
      %p65 = scmp.eq.s32.totalorder %s27, 1
      %p66 = por %p64, %p65
      %p67 = scmp.ne.s32.totalorder %s58, %s59
      %p68 = scmp.eq.s32.totalorder %s27, 0
      %p69 = por %p67, %p68
      %p70 = scmp.ne.s32.totalorder %s58, %s59
      %p71 = scmp.eq.s32.totalorder %s28, 1
      %p72 = por %p70, %p71
      %p74 = scmp.ne.s32.totalorder %s59, %s73
      %p75 = scmp.eq.s32.totalorder %s28, 0
      %p76 = por %p74, %p75
      %s78 = sadd.s32 %s77, 1
      %p81 = scmp.eq.s32.totalorder %s22, 1
      %p82 = scmp.ne.s32.totalorder %s77, %s79
      %p83 = scmp.eq.s32.totalorder %s22, 0
      %p84 = por %p82, %p83
      %p85 = scmp.ne.s32.totalorder %s77, %s79
      %p86 = scmp.eq.s32.totalorder %s27, 1
      %p87 = por %p85, %p86
      %p88 = scmp.ne.s32.totalorder %s79, %s80
      %p89 = scmp.eq.s32.totalorder %s27, 0
      %p90 = por %p88, %p89
      %p91 = scmp.ne.s32.totalorder %s79, %s80
      %p92 = scmp.eq.s32.totalorder %s28, 1
      %p93 = por %p91, %p92
      %p95 = scmp.ne.s32.totalorder %s80, %s94
      %p96 = scmp.eq.s32.totalorder %s28, 0
      %p97 = por %p95, %p96
      %s99 = sadd.s32 %s98, 1
      %p102 = scmp.eq.s32.totalorder %s22, 1
      %p103 = scmp.ne.s32.totalorder %s98, %s100
      %p104 = scmp.eq.s32.totalorder %s22, 0
      %p105 = por %p103, %p104
      %p106 = scmp.ne.s32.totalorder %s98, %s100
      %p107 = scmp.eq.s32.totalorder %s27, 1
      %p108 = por %p106, %p107
      %p109 = scmp.ne.s32.totalorder %s100, %s101
      %p110 = scmp.eq.s32.totalorder %s27, 0
      %p111 = por %p109, %p110
      %p112 = scmp.ne.s32.totalorder %s100, %s101
      %p113 = scmp.eq.s32.totalorder %s28, 1
      %p114 = por %p112, %p113
      %p116 = scmp.ne.s32.totalorder %s101, %s115
      %p117 = scmp.eq.s32.totalorder %s28, 0
      %p118 = por %p116, %p117
      %s120 = sadd.s32 %s119, 1
      %p123 = scmp.eq.s32.totalorder %s22, 1
      %p124 = scmp.ne.s32.totalorder %s119, %s121
      %p125 = scmp.eq.s32.totalorder %s22, 0
      %p126 = por %p124, %p125
      %p127 = scmp.ne.s32.totalorder %s119, %s121
      %p128 = scmp.eq.s32.totalorder %s27, 1
      %p129 = por %p127, %p128
      %p130 = scmp.ne.s32.totalorder %s121, %s122
      %p131 = scmp.eq.s32.totalorder %s27, 0
      %p132 = por %p130, %p131
      %p133 = scmp.ne.s32.totalorder %s121, %s122
      %p134 = scmp.eq.s32.totalorder %s28, 1
      %p135 = por %p133, %p134
      %p137 = scmp.ne.s32.totalorder %s122, %s136
      %p138 = scmp.eq.s32.totalorder %s28, 0
      %p139 = por %p137, %p138
      %s141 = sadd.s32 %s140, 1
      %p144 = scmp.eq.s32.totalorder %s22, 1
      %p145 = scmp.ne.s32.totalorder %s140, %s142
      %p146 = scmp.eq.s32.totalorder %s22, 0
      %p147 = por %p145, %p146
      %p148 = scmp.ne.s32.totalorder %s140, %s142
      %p149 = scmp.eq.s32.totalorder %s27, 1
      %p150 = por %p148, %p149
      %p151 = scmp.ne.s32.totalorder %s142, %s143
      %p152 = scmp.eq.s32.totalorder %s27, 0
      %p153 = por %p151, %p152
      %p154 = scmp.ne.s32.totalorder %s142, %s143
      %p155 = scmp.eq.s32.totalorder %s28, 1
      %p156 = por %p154, %p155
      %p158 = scmp.ne.s32.totalorder %s143, %s157
      %p159 = scmp.eq.s32.totalorder %s28, 0
      %p160 = por %p158, %p159
      %s162 = sadd.s32 %s161, 1
      %p165 = scmp.eq.s32.totalorder %s22, 1
      %p166 = scmp.ne.s32.totalorder %s161, %s163
      %p167 = scmp.eq.s32.totalorder %s22, 0
      %p168 = por %p166, %p167
      %p169 = scmp.ne.s32.totalorder %s161, %s163
      %p170 = scmp.eq.s32.totalorder %s27, 1
      %p171 = por %p169, %p170
      %p172 = scmp.ne.s32.totalorder %s163, %s164
      %p173 = scmp.eq.s32.totalorder %s27, 0
      %p174 = por %p172, %p173
      %p175 = scmp.ne.s32.totalorder %s163, %s164
      %p176 = scmp.eq.s32.totalorder %s28, 1
      %p177 = por %p175, %p176
      %p179 = scmp.ne.s32.totalorder %s164, %s178
      %p180 = scmp.eq.s32.totalorder %s28, 0
      %p181 = por %p179, %p180
      %s183 = sadd.s32 %s182, 1
      %p186 = scmp.eq.s32.totalorder %s22, 1
      %p187 = scmp.ne.s32.totalorder %s182, %s184
      %p188 = scmp.eq.s32.totalorder %s22, 0
      %p189 = por %p187, %p188
      %p190 = scmp.ne.s32.totalorder %s182, %s184
      %p191 = scmp.eq.s32.totalorder %s27, 1
      %p192 = por %p190, %p191
      %p193 = scmp.ne.s32.totalorder %s184, %s185
      %p194 = scmp.eq.s32.totalorder %s27, 0
      %p195 = por %p193, %p194
      %p196 = scmp.ne.s32.totalorder %s184, %s185
      %p197 = scmp.eq.s32.totalorder %s28, 1
      %p198 = por %p196, %p197
      %p200 = scmp.ne.s32.totalorder %s185, %s199
      %p201 = scmp.eq.s32.totalorder %s28, 0
      %p202 = por %p200, %p201
      %s204 = sadd.s32 %s203, 1
      %p207 = scmp.eq.s32.totalorder %s22, 1
      %p208 = scmp.ne.s32.totalorder %s203, %s205
      %p209 = scmp.eq.s32.totalorder %s22, 0
      %p210 = por %p208, %p209
      %p211 = scmp.ne.s32.totalorder %s203, %s205
      %p212 = scmp.eq.s32.totalorder %s27, 1
      %p213 = por %p211, %p212
      %p214 = scmp.ne.s32.totalorder %s205, %s206
      %p215 = scmp.eq.s32.totalorder %s27, 0
      %p216 = por %p214, %p215
      %p217 = scmp.ne.s32.totalorder %s205, %s206
      %p218 = scmp.eq.s32.totalorder %s28, 1
      %p219 = por %p217, %p218
      %p221 = scmp.ne.s32.totalorder %s206, %s220
      %p222 = scmp.eq.s32.totalorder %s28, 0
      %p223 = por %p221, %p222
      %s225 = sadd.s32 %s224, 1
      %p228 = scmp.eq.s32.totalorder %s22, 1
      %p229 = scmp.ne.s32.totalorder %s224, %s226
      %p230 = scmp.eq.s32.totalorder %s22, 0
      %p231 = por %p229, %p230
      %p232 = scmp.ne.s32.totalorder %s224, %s226
      %p233 = scmp.eq.s32.totalorder %s27, 1
      %p234 = por %p232, %p233
      %p235 = scmp.ne.s32.totalorder %s226, %s227
      %p236 = scmp.eq.s32.totalorder %s27, 0
      %p237 = por %p235, %p236
      %p238 = scmp.ne.s32.totalorder %s226, %s227
      %p239 = scmp.eq.s32.totalorder %s28, 1
      %p240 = por %p238, %p239
      %p242 = scmp.ne.s32.totalorder %s227, %s241
      %p243 = scmp.eq.s32.totalorder %s28, 0
      %p244 = por %p242, %p243
      %s246 = sadd.s32 %s245, 1
      %p249 = scmp.eq.s32.totalorder %s22, 1
      %p250 = scmp.ne.s32.totalorder %s245, %s247
      %p251 = scmp.eq.s32.totalorder %s22, 0
      %p252 = por %p250, %p251
      %p253 = scmp.ne.s32.totalorder %s245, %s247
      %p254 = scmp.eq.s32.totalorder %s27, 1
      %p255 = por %p253, %p254
      %p256 = scmp.ne.s32.totalorder %s247, %s248
      %p257 = scmp.eq.s32.totalorder %s27, 0
      %p258 = por %p256, %p257
      %p259 = scmp.ne.s32.totalorder %s247, %s248
      %p260 = scmp.eq.s32.totalorder %s28, 1
      %p261 = por %p259, %p260
      %p263 = scmp.ne.s32.totalorder %s248, %s262
      %p264 = scmp.eq.s32.totalorder %s28, 0
      %p265 = por %p263, %p264
      %s267 = sadd.s32 %s266, 1
      %p270 = scmp.eq.s32.totalorder %s22, 1
      %p271 = scmp.ne.s32.totalorder %s266, %s268
      %p272 = scmp.eq.s32.totalorder %s22, 0
      %p273 = por %p271, %p272
      %p274 = scmp.ne.s32.totalorder %s266, %s268
      %p275 = scmp.eq.s32.totalorder %s27, 1
      %p276 = por %p274, %p275
      %p277 = scmp.ne.s32.totalorder %s268, %s269
      %p278 = scmp.eq.s32.totalorder %s27, 0
      %p279 = por %p277, %p278
      %p280 = scmp.ne.s32.totalorder %s268, %s269
      %p281 = scmp.eq.s32.totalorder %s28, 1
      %p282 = por %p280, %p281
      %p284 = scmp.ne.s32.totalorder %s269, %s283
      %p285 = scmp.eq.s32.totalorder %s28, 0
      %p286 = por %p284, %p285
      %s288 = sadd.s32 %s287, 1
      %p291 = scmp.eq.s32.totalorder %s22, 1
      %p292 = scmp.ne.s32.totalorder %s287, %s289
      %p293 = scmp.eq.s32.totalorder %s22, 0
      %p294 = por %p292, %p293
      %p295 = scmp.ne.s32.totalorder %s287, %s289
      %p296 = scmp.eq.s32.totalorder %s27, 1
      %p297 = por %p295, %p296
      %p298 = scmp.ne.s32.totalorder %s289, %s290
      %p299 = scmp.eq.s32.totalorder %s27, 0
      %p300 = por %p298, %p299
      %p301 = scmp.ne.s32.totalorder %s289, %s290
      %p302 = scmp.eq.s32.totalorder %s28, 1
      %p303 = por %p301, %p302
      %p305 = scmp.ne.s32.totalorder %s290, %s304
      %p306 = scmp.eq.s32.totalorder %s28, 0
      %p307 = por %p305, %p306
      %s308 = ssub.s32 %s22, %s29
      %p309 = scmp.eq.s32.totalorder %s308, 0
      %s311 = sadd.s32 %s310, 1
      %s312 = scalar_select %p309, %s310, %s311
      %p315 = pneg %p309
      %p316 = scmp.eq.s32.totalorder %s22, 1
      %p317 = por %p315, %p316
      %p318 = scmp.ne.s32.totalorder %s310, %s313
      %p319 = scmp.eq.s32.totalorder %s22, 0
      %p320 = por %p318, %p319
      %p321 = scmp.ne.s32.totalorder %s310, %s313
      %p322 = scmp.eq.s32.totalorder %s27, 1
      %p323 = por %p321, %p322
      %p324 = scmp.ne.s32.totalorder %s313, %s314
      %p325 = scmp.eq.s32.totalorder %s27, 0
      %p326 = por %p324, %p325
      %p327 = scmp.ne.s32.totalorder %s313, %s314
      %p328 = scmp.eq.s32.totalorder %s28, 1
      %p329 = por %p327, %p328
      %p331 = scmp.ne.s32.totalorder %s314, %s330
      %p332 = scmp.eq.s32.totalorder %s28, 0
      %p333 = por %p331, %p332
      %p334 = scmp.le.s32.totalorder 1, %s22
      %p335 = scmp.lt.s32.totalorder %s22, 3
      %p336 = pnand %p334, %p335
      %p337 = pneg %p336
      // Predicated region
      $region9: #{_lambda_.1} parent=5 // pred_check
        _
      $region10: #{_lambda_.1} parent=5 // pred_check_branch
        %339 = sbr.rel (%p336) target = $region12
      $region11: #{_lambda_.1} parent=5 // pred_region
        %s340 = ssub.s32 %s22, 1
        // Predicated region
        $region13: #{_lambda_.1} parent=11 // pred_check
          %p341 = pneg %p69
        $region14: #{_lambda_.1} parent=11 // pred_check_branch
          %343 = sbr.rel (%p341) target = $region16
        $region15: #{_lambda_.1} parent=11 // pred_region
          _
        $region16: #{_lambda_.1} parent=11 // pred_fallthru
          _
        // Predicated region
        $region17: #{_lambda_.1} parent=11 // pred_check
          %p344 = pneg %p90
        $region18: #{_lambda_.1} parent=11 // pred_check_branch
          %346 = sbr.rel (%p344) target = $region20
        $region19: #{_lambda_.1} parent=11 // pred_region
          _
        $region20: #{_lambda_.1} parent=11 // pred_fallthru
          _
        // Predicated region
        $region21: #{_lambda_.1} parent=11 // pred_check
          %p347 = pneg %p111
        $region22: #{_lambda_.1} parent=11 // pred_check_branch
          %349 = sbr.rel (%p347) target = $region24
        $region23: #{_lambda_.1} parent=11 // pred_region
          _
        $region24: #{_lambda_.1} parent=11 // pred_fallthru
          _
        // Predicated region
        $region25: #{_lambda_.1} parent=11 // pred_check
          %p350 = pneg %p132
        $region26: #{_lambda_.1} parent=11 // pred_check_branch
          %352 = sbr.rel (%p350) target = $region28
        $region27: #{_lambda_.1} parent=11 // pred_region
          _
        $region28: #{_lambda_.1} parent=11 // pred_fallthru
          _
        // Predicated region
        $region29: #{_lambda_.1} parent=11 // pred_check
          %p353 = pneg %p153
        $region30: #{_lambda_.1} parent=11 // pred_check_branch
          %355 = sbr.rel (%p353) target = $region32
        $region31: #{_lambda_.1} parent=11 // pred_region
          _
        $region32: #{_lambda_.1} parent=11 // pred_fallthru
          _
        // Predicated region
        $region33: #{_lambda_.1} parent=11 // pred_check
          %p356 = pneg %p174
        $region34: #{_lambda_.1} parent=11 // pred_check_branch
          %358 = sbr.rel (%p356) target = $region36
        $region35: #{_lambda_.1} parent=11 // pred_region
          _
        $region36: #{_lambda_.1} parent=11 // pred_fallthru
          _
        // Predicated region
        $region37: #{_lambda_.1} parent=11 // pred_check
          %p359 = pneg %p195
        $region38: #{_lambda_.1} parent=11 // pred_check_branch
          %361 = sbr.rel (%p359) target = $region40
        $region39: #{_lambda_.1} parent=11 // pred_region
          _
        $region40: #{_lambda_.1} parent=11 // pred_fallthru
          _
        // Predicated region
        $region41: #{_lambda_.1} parent=11 // pred_check
          %p362 = pneg %p216
        $region42: #{_lambda_.1} parent=11 // pred_check_branch
          %364 = sbr.rel (%p362) target = $region44
        $region43: #{_lambda_.1} parent=11 // pred_region
          _
        $region44: #{_lambda_.1} parent=11 // pred_fallthru
          _
        // Predicated region
        $region45: #{_lambda_.1} parent=11 // pred_check
          %p365 = pneg %p237
        $region46: #{_lambda_.1} parent=11 // pred_check_branch
          %367 = sbr.rel (%p365) target = $region48
        $region47: #{_lambda_.1} parent=11 // pred_region
          _
        $region48: #{_lambda_.1} parent=11 // pred_fallthru
          _
        // Predicated region
        $region49: #{_lambda_.1} parent=11 // pred_check
          %p368 = pneg %p258
        $region50: #{_lambda_.1} parent=11 // pred_check_branch
          %370 = sbr.rel (%p368) target = $region52
        $region51: #{_lambda_.1} parent=11 // pred_region
          _
        $region52: #{_lambda_.1} parent=11 // pred_fallthru
          _
        // Predicated region
        $region53: #{_lambda_.1} parent=11 // pred_check
          %p371 = pneg %p279
        $region54: #{_lambda_.1} parent=11 // pred_check_branch
          %373 = sbr.rel (%p371) target = $region56
        $region55: #{_lambda_.1} parent=11 // pred_region
          _
        $region56: #{_lambda_.1} parent=11 // pred_fallthru
          _
        // Predicated region
        $region57: #{_lambda_.1} parent=11 // pred_check
          %p374 = pneg %p300
        $region58: #{_lambda_.1} parent=11 // pred_check_branch
          %376 = sbr.rel (%p374) target = $region60
        $region59: #{_lambda_.1} parent=11 // pred_region
          _
        $region60: #{_lambda_.1} parent=11 // pred_fallthru
          _
      $region12: #{_lambda_.1} parent=5 // pred_fallthru
        _
      %p377 = scmp.lt.s32.totalorder %s22, 2
      // Predicated region
      $region61: #{_lambda_.1} parent=5 // pred_check
        %p378 = pneg %p377
      $region62: #{_lambda_.1} parent=5 // pred_check_branch
        %380 = sbr.rel (%p378) target = $region64
      $region63: #{_lambda_.1} parent=5 // pred_region
        // Predicated region
        $region65: #{_lambda_.1} parent=63 // pred_check
          %p381 = pneg %p42
        $region66: #{_lambda_.1} parent=63 // pred_check_branch
          %383 = sbr.rel (%p381) target = $region68
        $region67: #{_lambda_.1} parent=63 // pred_region
          %s384 = smul.u32 28, %s22
          %p385 = scmp.lt.s32.totalorder %s384, 55
          %s386 = scalar_select %p385, %s384, 55
          %s387 = smul.addr %s386, 8
          %s388 = scalar_lea.vmem %s0, %s387
          %s389 = smul.u32 28, %s22
        $region68: #{_lambda_.1} parent=63 // pred_fallthru
          _
      $region64: #{_lambda_.1} parent=5 // pred_fallthru
        _
      %p390 = scmp.le.s32.totalorder 1, %s22
      %p391 = scmp.lt.s32.totalorder %s22, 3
      %p392 = pnand %p390, %p391
      %p393 = pneg %p392
      // Predicated region
      $region69: #{_lambda_.1} parent=5 // pred_check
        _
      $region70: #{_lambda_.1} parent=5 // pred_check_branch
        %395 = sbr.rel (%p392) target = $region72
      $region71: #{_lambda_.1} parent=5 // pred_region
        %s396 = ssub.s32 %s22, 1
        %s397 = smul.u32 28, %s27
        %p398 = scmp.lt.s32.totalorder %s397, 55
        %s399 = scalar_select %p398, %s397, 55
        %s400 = smul.addr %s399, 8
        %s401 = scalar_lea.vmem %s0, %s400
        %p402 = pneg %p48
        %p403 = pneg %p45
        %p404 = pneg %p69
        %p405 = pneg %p66
        %p406 = pneg %p90
        %p407 = pneg %p87
        %p408 = pneg %p111
        %p409 = pneg %p108
        %p410 = pneg %p132
        %p411 = pneg %p129
        %p412 = pneg %p153
        %p413 = pneg %p150
        %p414 = pneg %p174
        %p415 = pneg %p171
        %p416 = pneg %p195
        %p417 = pneg %p192
        %p418 = pneg %p216
        %p419 = pneg %p213
        %p420 = pneg %p237
        %p421 = pneg %p234
        %p422 = pneg %p258
        %p423 = pneg %p255
        %p424 = pneg %p279
        %p425 = pneg %p276
        %p426 = pneg %p300
        %p427 = pneg %p297
        %p428 = pneg %p326
        %p429 = pneg %p323
        %s430 = sand.u32 %s313, 1
        %s431 = scalar_lea.sflag [#allocation10], %s430
        %s432 = sand.u32 %s313, 1
        %s433 = smul.addr %s432, 8
        %s434 = scalar_lea.vmem [#allocation9], %s433
        %s435 = smul.u32 28, %s27
        %p436 = scmp.lt.s32.totalorder %s435, 55
        %s437 = scalar_select %p436, %s435, 55
        %s438 = smul.addr %s437, 8
        %s439 = scalar_lea.vmem %s0, %s438
        %s440 = smul.u32 28, %s27
        %v441 = vld [vmem:[%s439] sm:$0xff]
        %v442 = vld [vmem:[%s439 + $0x8] sm:$0xff]
        %v443 = vld [vmem:[%s439 + $0x10] sm:$0xff]
        %v444 = vld [vmem:[%s439 + $0x18] sm:$0xff]
        %v445 = vld [vmem:[%s439 + $0x20] sm:$0xff]
        %v446 = vld [vmem:[%s439 + $0x28] sm:$0xff]
        %v447 = vld [vmem:[%s439 + $0x30] sm:$0xff]
        %v448 = vld [vmem:[%s439 + $0x38] sm:$0xff]
        %v449 = vld [vmem:[%s439 + $0x40] sm:$0xff]
        %v450 = vld [vmem:[%s439 + $0x48] sm:$0xff]
        %v451 = vld [vmem:[%s439 + $0x50] sm:$0xff]
        %v452 = vld [vmem:[%s439 + $0x58] sm:$0xff]
        %v453 = vld [vmem:[%s439 + $0x60] sm:$0xff]
        %v454 = vld [vmem:[%s439 + $0x68] sm:$0xff]
        %v455 = vld [vmem:[%s439 + $0x70] sm:$0xff]
        %v456 = vld [vmem:[%s439 + $0x78] sm:$0xff]
        %v457 = vld [vmem:[%s439 + $0x80] sm:$0xff]
        %v458 = vld [vmem:[%s439 + $0x88] sm:$0xff]
        %v459 = vld [vmem:[%s439 + $0x90] sm:$0xff]
        %v460 = vld [vmem:[%s439 + $0x98] sm:$0xff]
        %v461 = vld [vmem:[%s439 + $0xa0] sm:$0xff]
        %v462 = vld [vmem:[%s439 + $0xa8] sm:$0xff]
        %v463 = vld [vmem:[%s439 + $0xb0] sm:$0xff]
        %v464 = vld [vmem:[%s439 + $0xb8] sm:$0xff]
        %v465 = vld [vmem:[%s439 + $0xc0] sm:$0xff]
        %v466 = vld [vmem:[%s439 + $0xc8] sm:$0xff]
        %v467 = vld [vmem:[%s439 + $0xd0] sm:$0xff]
        %v468 = vld [vmem:[%s439 + $0xd8] sm:$0xff]
        %vm469 = vcmask 221184
        %470 = vst.msk [vmem:[#allocation2] sm:$0x1] %vm469, 0.0
        %471 = vst.msk [vmem:[#allocation2 + $0xe1] sm:$0x1] %vm469, 0.0
        %vm472 = vcmask 228352
        %473 = vst.msk [vmem:[#allocation2 + $0x1] sm:$0xff] %vm472, %v441
        %474 = vst.msk [vmem:[#allocation2 + $0x9] sm:$0xff] %vm472, %v442
        %475 = vst.msk [vmem:[#allocation2 + $0x11] sm:$0xff] %vm472, %v443
        %476 = vst.msk [vmem:[#allocation2 + $0x19] sm:$0xff] %vm472, %v444
        %477 = vst.msk [vmem:[#allocation2 + $0x21] sm:$0xff] %vm472, %v445
        %478 = vst.msk [vmem:[#allocation2 + $0x29] sm:$0xff] %vm472, %v446
        %479 = vst.msk [vmem:[#allocation2 + $0x31] sm:$0xff] %vm472, %v447
        %480 = vst.msk [vmem:[#allocation2 + $0x39] sm:$0xff] %vm472, %v448
        %481 = vst.msk [vmem:[#allocation2 + $0x41] sm:$0xff] %vm472, %v449
        %482 = vst.msk [vmem:[#allocation2 + $0x49] sm:$0xff] %vm472, %v450
        %483 = vst.msk [vmem:[#allocation2 + $0x51] sm:$0xff] %vm472, %v451
        %484 = vst.msk [vmem:[#allocation2 + $0x59] sm:$0xff] %vm472, %v452
        %485 = vst.msk [vmem:[#allocation2 + $0x61] sm:$0xff] %vm472, %v453
        %486 = vst.msk [vmem:[#allocation2 + $0x69] sm:$0xff] %vm472, %v454
        %487 = vst.msk [vmem:[#allocation2 + $0x71] sm:$0xff] %vm472, %v455
        %488 = vst.msk [vmem:[#allocation2 + $0x79] sm:$0xff] %vm472, %v456
        %489 = vst.msk [vmem:[#allocation2 + $0x81] sm:$0xff] %vm472, %v457
        %490 = vst.msk [vmem:[#allocation2 + $0x89] sm:$0xff] %vm472, %v458
        %491 = vst.msk [vmem:[#allocation2 + $0x91] sm:$0xff] %vm472, %v459
        %492 = vst.msk [vmem:[#allocation2 + $0x99] sm:$0xff] %vm472, %v460
        %493 = vst.msk [vmem:[#allocation2 + $0xa1] sm:$0xff] %vm472, %v461
        %494 = vst.msk [vmem:[#allocation2 + $0xa9] sm:$0xff] %vm472, %v462
        %495 = vst.msk [vmem:[#allocation2 + $0xb1] sm:$0xff] %vm472, %v463
        %496 = vst.msk [vmem:[#allocation2 + $0xb9] sm:$0xff] %vm472, %v464
        %497 = vst.msk [vmem:[#allocation2 + $0xc1] sm:$0xff] %vm472, %v465
        %498 = vst.msk [vmem:[#allocation2 + $0xc9] sm:$0xff] %vm472, %v466
        %499 = vst.msk [vmem:[#allocation2 + $0xd1] sm:$0xff] %vm472, %v467
        %500 = vst.msk [vmem:[#allocation2 + $0xd9] sm:$0xff] %vm472, %v468
        %v501 = vld [vmem:[#allocation2] sm:$0xff]
        %v502 = vld [vmem:[#allocation2 + $0x8] sm:$0xff]
        %v503 = vld [vmem:[#allocation2 + $0x10] sm:$0xff]
        %v504 = vld [vmem:[#allocation2 + $0x18] sm:$0xff]
        %v505 = vld [vmem:[#allocation2 + $0x20] sm:$0xff]
        %v506 = vld [vmem:[#allocation2 + $0x28] sm:$0xff]
        %v507 = vld [vmem:[#allocation2 + $0x30] sm:$0xff]
        %v508 = vld [vmem:[#allocation2 + $0x38] sm:$0xff]
        %v509 = vld [vmem:[#allocation2 + $0x40] sm:$0xff]
        %v510 = vld [vmem:[#allocation2 + $0x48] sm:$0xff]
        %v511 = vld [vmem:[#allocation2 + $0x50] sm:$0xff]
        %v512 = vld [vmem:[#allocation2 + $0x58] sm:$0xff]
        %v513 = vld [vmem:[#allocation2 + $0x60] sm:$0xff]
        %v514 = vld [vmem:[#allocation2 + $0x68] sm:$0xff]
        %v515 = vld [vmem:[#allocation2 + $0x70] sm:$0xff]
        %v516 = vld [vmem:[#allocation2 + $0x78] sm:$0xff]
        %v517 = vld [vmem:[#allocation2 + $0x80] sm:$0xff]
        %v518 = vld [vmem:[#allocation2 + $0x88] sm:$0xff]
        %v519 = vld [vmem:[#allocation2 + $0x90] sm:$0xff]
        %v520 = vld [vmem:[#allocation2 + $0x98] sm:$0xff]
        %v521 = vld [vmem:[#allocation2 + $0xa0] sm:$0xff]
        %v522 = vld [vmem:[#allocation2 + $0xa8] sm:$0xff]
        %v523 = vld [vmem:[#allocation2 + $0xb0] sm:$0xff]
        %v524 = vld [vmem:[#allocation2 + $0xb8] sm:$0xff]
        %v525 = vld [vmem:[#allocation2 + $0xc0] sm:$0xff]
        %v526 = vld [vmem:[#allocation2 + $0xc8] sm:$0xff]
        %v527 = vld [vmem:[#allocation2 + $0xd0] sm:$0xff]
        %v528 = vld [vmem:[#allocation2 + $0xd8] sm:$0xff]
        %v529 = vld [vmem:[%s1] sm:$0xff]
        %v530 = vld [vmem:[%s1 + $0x8] sm:$0xff]
        %v531 = vld [vmem:[%s1 + $0x10] sm:$0xff]
        %v532 = vld [vmem:[%s1 + $0x18] sm:$0xff]
        %v533 = vld [vmem:[%s1 + $0x20] sm:$0xff]
        %v534 = vld [vmem:[%s1 + $0x28] sm:$0xff]
        %v535 = vld [vmem:[%s1 + $0x30] sm:$0xff]
        %v536 = vld [vmem:[%s1 + $0x38] sm:$0xff]
        %v537 = vld [vmem:[%s1 + $0x40] sm:$0xff]
        %v538 = vld [vmem:[%s1 + $0x48] sm:$0xff]
        %v539 = vld [vmem:[%s1 + $0x50] sm:$0xff]
        %v540 = vld [vmem:[%s1 + $0x58] sm:$0xff]
        %v541 = vld [vmem:[%s1 + $0x60] sm:$0xff]
        %v542 = vld [vmem:[%s1 + $0x68] sm:$0xff]
        %v543 = vld [vmem:[%s1 + $0x70] sm:$0xff]
        %v544 = vld [vmem:[%s1 + $0x78] sm:$0xff]
        %v545 = vld [vmem:[%s1 + $0x80] sm:$0xff]
        %v546 = vld [vmem:[%s1 + $0x88] sm:$0xff]
        %v547 = vld [vmem:[%s1 + $0x90] sm:$0xff]
        %v548 = vld [vmem:[%s1 + $0x98] sm:$0xff]
        %v549 = vld [vmem:[%s1 + $0xa0] sm:$0xff]
        %v550 = vld [vmem:[%s1 + $0xa8] sm:$0xff]
        %v551 = vld [vmem:[%s1 + $0xb0] sm:$0xff]
        %v552 = vld [vmem:[%s1 + $0xb8] sm:$0xff]
        %v553 = vld [vmem:[%s1 + $0xc0] sm:$0xff]
        %v554 = vld [vmem:[%s1 + $0xc8] sm:$0xff]
        %v555 = vld [vmem:[%s1 + $0xd0] sm:$0xff]
        %v556 = vld [vmem:[%s1 + $0xd8] sm:$0xff]
        %558 = vset.pattern.permute.xlu0 0
        %559 = vperm.xlu0 %558, %v529
        %v560 = vpop.permute.xlu0 %559
        %563 = vset.pattern.permute.xlu0 0
        %564 = vperm.xlu0 %563, %v530
        %v565 = vpop.permute.xlu0 %564
        %568 = vset.pattern.permute.xlu0 0
        %569 = vperm.xlu0 %568, %v531
        %v570 = vpop.permute.xlu0 %569
        %573 = vset.pattern.permute.xlu0 0
        %574 = vperm.xlu0 %573, %v532
        %v575 = vpop.permute.xlu0 %574
        %578 = vset.pattern.permute.xlu0 0
        %579 = vperm.xlu0 %578, %v533
        %v580 = vpop.permute.xlu0 %579
        %583 = vset.pattern.permute.xlu0 0
        %584 = vperm.xlu0 %583, %v534
        %v585 = vpop.permute.xlu0 %584
        %588 = vset.pattern.permute.xlu0 0
        %589 = vperm.xlu0 %588, %v535
        %v590 = vpop.permute.xlu0 %589
        %593 = vset.pattern.permute.xlu0 0
        %594 = vperm.xlu0 %593, %v536
        %v595 = vpop.permute.xlu0 %594
        %598 = vset.pattern.permute.xlu0 0
        %599 = vperm.xlu0 %598, %v537
        %v600 = vpop.permute.xlu0 %599
        %603 = vset.pattern.permute.xlu0 0
        %604 = vperm.xlu0 %603, %v538
        %v605 = vpop.permute.xlu0 %604
        %608 = vset.pattern.permute.xlu0 0
        %609 = vperm.xlu0 %608, %v539
        %v610 = vpop.permute.xlu0 %609
        %613 = vset.pattern.permute.xlu0 0
        %614 = vperm.xlu0 %613, %v540
        %v615 = vpop.permute.xlu0 %614
        %618 = vset.pattern.permute.xlu0 0
        %619 = vperm.xlu0 %618, %v541
        %v620 = vpop.permute.xlu0 %619
        %623 = vset.pattern.permute.xlu0 0
        %624 = vperm.xlu0 %623, %v542
        %v625 = vpop.permute.xlu0 %624
        %628 = vset.pattern.permute.xlu0 0
        %629 = vperm.xlu0 %628, %v543
        %v630 = vpop.permute.xlu0 %629
        %633 = vset.pattern.permute.xlu0 0
        %634 = vperm.xlu0 %633, %v544
        %v635 = vpop.permute.xlu0 %634
        %638 = vset.pattern.permute.xlu0 0
        %639 = vperm.xlu0 %638, %v545
        %v640 = vpop.permute.xlu0 %639
        %643 = vset.pattern.permute.xlu0 0
        %644 = vperm.xlu0 %643, %v546
        %v645 = vpop.permute.xlu0 %644
        %648 = vset.pattern.permute.xlu0 0
        %649 = vperm.xlu0 %648, %v547
        %v650 = vpop.permute.xlu0 %649
        %653 = vset.pattern.permute.xlu0 0
        %654 = vperm.xlu0 %653, %v548
        %v655 = vpop.permute.xlu0 %654
        %658 = vset.pattern.permute.xlu0 0
        %659 = vperm.xlu0 %658, %v549
        %v660 = vpop.permute.xlu0 %659
        %663 = vset.pattern.permute.xlu0 0
        %664 = vperm.xlu0 %663, %v550
        %v665 = vpop.permute.xlu0 %664
        %668 = vset.pattern.permute.xlu0 0
        %669 = vperm.xlu0 %668, %v551
        %v670 = vpop.permute.xlu0 %669
        %673 = vset.pattern.permute.xlu0 0
        %674 = vperm.xlu0 %673, %v552
        %v675 = vpop.permute.xlu0 %674
        %678 = vset.pattern.permute.xlu0 0
        %679 = vperm.xlu0 %678, %v553
        %v680 = vpop.permute.xlu0 %679
        %683 = vset.pattern.permute.xlu0 0
        %684 = vperm.xlu0 %683, %v554
        %v685 = vpop.permute.xlu0 %684
        %688 = vset.pattern.permute.xlu0 0
        %689 = vperm.xlu0 %688, %v555
        %v690 = vpop.permute.xlu0 %689
        %693 = vset.pattern.permute.xlu0 0
        %694 = vperm.xlu0 %693, %v556
        %v695 = vpop.permute.xlu0 %694
        %v697 = vmul.f32 %v501, %v560
        %v698 = vmul.f32 %v502, %v565
        %v699 = vmul.f32 %v503, %v570
        %v700 = vmul.f32 %v504, %v575
        %v701 = vmul.f32 %v505, %v580
        %v702 = vmul.f32 %v506, %v585
        %v703 = vmul.f32 %v507, %v590
        %v704 = vmul.f32 %v508, %v595
        %v705 = vmul.f32 %v509, %v600
        %v706 = vmul.f32 %v510, %v605
        %v707 = vmul.f32 %v511, %v610
        %v708 = vmul.f32 %v512, %v615
        %v709 = vmul.f32 %v513, %v620
        %v710 = vmul.f32 %v514, %v625
        %v711 = vmul.f32 %v515, %v630
        %v712 = vmul.f32 %v516, %v635
        %v713 = vmul.f32 %v517, %v640
        %v714 = vmul.f32 %v518, %v645
        %v715 = vmul.f32 %v519, %v650
        %v716 = vmul.f32 %v520, %v655
        %v717 = vmul.f32 %v521, %v660
        %v718 = vmul.f32 %v522, %v665
        %v719 = vmul.f32 %v523, %v670
        %v720 = vmul.f32 %v524, %v675
        %v721 = vmul.f32 %v525, %v680
        %v722 = vmul.f32 %v526, %v685
        %v723 = vmul.f32 %v527, %v690
        %v724 = vmul.f32 %v528, %v695
        %725 = vst.msk [vmem:[#allocation3] sm:$0xff] %vm472, %v697
        %726 = vst.msk [vmem:[#allocation3 + $0x8] sm:$0xff] %vm472, %v698
        %727 = vst.msk [vmem:[#allocation3 + $0x10] sm:$0xff] %vm472, %v699
        %728 = vst.msk [vmem:[#allocation3 + $0x18] sm:$0xff] %vm472, %v700
        %729 = vst.msk [vmem:[#allocation3 + $0x20] sm:$0xff] %vm472, %v701
        %730 = vst.msk [vmem:[#allocation3 + $0x28] sm:$0xff] %vm472, %v702
        %731 = vst.msk [vmem:[#allocation3 + $0x30] sm:$0xff] %vm472, %v703
        %732 = vst.msk [vmem:[#allocation3 + $0x38] sm:$0xff] %vm472, %v704
        %733 = vst.msk [vmem:[#allocation3 + $0x40] sm:$0xff] %vm472, %v705
        %734 = vst.msk [vmem:[#allocation3 + $0x48] sm:$0xff] %vm472, %v706
        %735 = vst.msk [vmem:[#allocation3 + $0x50] sm:$0xff] %vm472, %v707
        %736 = vst.msk [vmem:[#allocation3 + $0x58] sm:$0xff] %vm472, %v708
        %737 = vst.msk [vmem:[#allocation3 + $0x60] sm:$0xff] %vm472, %v709
        %738 = vst.msk [vmem:[#allocation3 + $0x68] sm:$0xff] %vm472, %v710
        %739 = vst.msk [vmem:[#allocation3 + $0x70] sm:$0xff] %vm472, %v711
        %740 = vst.msk [vmem:[#allocation3 + $0x78] sm:$0xff] %vm472, %v712
        %741 = vst.msk [vmem:[#allocation3 + $0x80] sm:$0xff] %vm472, %v713
        %742 = vst.msk [vmem:[#allocation3 + $0x88] sm:$0xff] %vm472, %v714
        %743 = vst.msk [vmem:[#allocation3 + $0x90] sm:$0xff] %vm472, %v715
        %744 = vst.msk [vmem:[#allocation3 + $0x98] sm:$0xff] %vm472, %v716
        %745 = vst.msk [vmem:[#allocation3 + $0xa0] sm:$0xff] %vm472, %v717
        %746 = vst.msk [vmem:[#allocation3 + $0xa8] sm:$0xff] %vm472, %v718
        %747 = vst.msk [vmem:[#allocation3 + $0xb0] sm:$0xff] %vm472, %v719
        %748 = vst.msk [vmem:[#allocation3 + $0xb8] sm:$0xff] %vm472, %v720
        %749 = vst.msk [vmem:[#allocation3 + $0xc0] sm:$0xff] %vm472, %v721
        %750 = vst.msk [vmem:[#allocation3 + $0xc8] sm:$0xff] %vm472, %v722
        %751 = vst.msk [vmem:[#allocation3 + $0xd0] sm:$0xff] %vm472, %v723
        %752 = vst.msk [vmem:[#allocation3 + $0xd8] sm:$0xff] %vm472, %v724
        %781 = vrot.lane.b32.xlu0 %v441, 28
        %v782 = vpop.permute.xlu0 %781
        %783 = vrot.lane.b32.xlu0 %v442, 28
        %v784 = vpop.permute.xlu0 %783
        %785 = vrot.lane.b32.xlu0 %v443, 28
        %v786 = vpop.permute.xlu0 %785
        %787 = vrot.lane.b32.xlu0 %v444, 28
        %v788 = vpop.permute.xlu0 %787
        %789 = vrot.lane.b32.xlu0 %v445, 28
        %v790 = vpop.permute.xlu0 %789
        %791 = vrot.lane.b32.xlu0 %v446, 28
        %v792 = vpop.permute.xlu0 %791
        %793 = vrot.lane.b32.xlu0 %v447, 28
        %v794 = vpop.permute.xlu0 %793
        %795 = vrot.lane.b32.xlu0 %v448, 28
        %v796 = vpop.permute.xlu0 %795
        %797 = vrot.lane.b32.xlu0 %v449, 28
        %v798 = vpop.permute.xlu0 %797
        %799 = vrot.lane.b32.xlu0 %v450, 28
        %v800 = vpop.permute.xlu0 %799
        %801 = vrot.lane.b32.xlu0 %v451, 28
        %v802 = vpop.permute.xlu0 %801
        %803 = vrot.lane.b32.xlu0 %v452, 28
        %v804 = vpop.permute.xlu0 %803
        %805 = vrot.lane.b32.xlu0 %v453, 28
        %v806 = vpop.permute.xlu0 %805
        %807 = vrot.lane.b32.xlu0 %v454, 28
        %v808 = vpop.permute.xlu0 %807
        %809 = vrot.lane.b32.xlu0 %v455, 28
        %v810 = vpop.permute.xlu0 %809
        %811 = vrot.lane.b32.xlu0 %v456, 28
        %v812 = vpop.permute.xlu0 %811
        %813 = vrot.lane.b32.xlu0 %v457, 28
        %v814 = vpop.permute.xlu0 %813
        %815 = vrot.lane.b32.xlu0 %v458, 28
        %v816 = vpop.permute.xlu0 %815
        %817 = vrot.lane.b32.xlu0 %v459, 28
        %v818 = vpop.permute.xlu0 %817
        %819 = vrot.lane.b32.xlu0 %v460, 28
        %v820 = vpop.permute.xlu0 %819
        %821 = vrot.lane.b32.xlu0 %v461, 28
        %v822 = vpop.permute.xlu0 %821
        %823 = vrot.lane.b32.xlu0 %v462, 28
        %v824 = vpop.permute.xlu0 %823
        %825 = vrot.lane.b32.xlu0 %v463, 28
        %v826 = vpop.permute.xlu0 %825
        %827 = vrot.lane.b32.xlu0 %v464, 28
        %v828 = vpop.permute.xlu0 %827
        %829 = vrot.lane.b32.xlu0 %v465, 28
        %v830 = vpop.permute.xlu0 %829
        %831 = vrot.lane.b32.xlu0 %v466, 28
        %v832 = vpop.permute.xlu0 %831
        %833 = vrot.lane.b32.xlu0 %v467, 28
        %v834 = vpop.permute.xlu0 %833
        %835 = vrot.lane.b32.xlu0 %v468, 28
        %v836 = vpop.permute.xlu0 %835
        %vm865 = vcmask 457952
        %866 = vst.msk [vmem:[#allocation3] sm:$0xff] %vm865, %v782
        %867 = vst.msk [vmem:[#allocation3 + $0x8] sm:$0xff] %vm865, %v784
        %868 = vst.msk [vmem:[#allocation3 + $0x10] sm:$0xff] %vm865, %v786
        %869 = vst.msk [vmem:[#allocation3 + $0x18] sm:$0xff] %vm865, %v788
        %870 = vst.msk [vmem:[#allocation3 + $0x20] sm:$0xff] %vm865, %v790
        %871 = vst.msk [vmem:[#allocation3 + $0x28] sm:$0xff] %vm865, %v792
        %872 = vst.msk [vmem:[#allocation3 + $0x30] sm:$0xff] %vm865, %v794
        %873 = vst.msk [vmem:[#allocation3 + $0x38] sm:$0xff] %vm865, %v796
        %874 = vst.msk [vmem:[#allocation3 + $0x40] sm:$0xff] %vm865, %v798
        %875 = vst.msk [vmem:[#allocation3 + $0x48] sm:$0xff] %vm865, %v800
        %876 = vst.msk [vmem:[#allocation3 + $0x50] sm:$0xff] %vm865, %v802
        %877 = vst.msk [vmem:[#allocation3 + $0x58] sm:$0xff] %vm865, %v804
        %878 = vst.msk [vmem:[#allocation3 + $0x60] sm:$0xff] %vm865, %v806
        %879 = vst.msk [vmem:[#allocation3 + $0x68] sm:$0xff] %vm865, %v808
        %880 = vst.msk [vmem:[#allocation3 + $0x70] sm:$0xff] %vm865, %v810
        %881 = vst.msk [vmem:[#allocation3 + $0x78] sm:$0xff] %vm865, %v812
        %882 = vst.msk [vmem:[#allocation3 + $0x80] sm:$0xff] %vm865, %v814
        %883 = vst.msk [vmem:[#allocation3 + $0x88] sm:$0xff] %vm865, %v816
        %884 = vst.msk [vmem:[#allocation3 + $0x90] sm:$0xff] %vm865, %v818
        %885 = vst.msk [vmem:[#allocation3 + $0x98] sm:$0xff] %vm865, %v820
        %886 = vst.msk [vmem:[#allocation3 + $0xa0] sm:$0xff] %vm865, %v822
        %887 = vst.msk [vmem:[#allocation3 + $0xa8] sm:$0xff] %vm865, %v824
        %888 = vst.msk [vmem:[#allocation3 + $0xb0] sm:$0xff] %vm865, %v826
        %889 = vst.msk [vmem:[#allocation3 + $0xb8] sm:$0xff] %vm865, %v828
        %890 = vst.msk [vmem:[#allocation3 + $0xc0] sm:$0xff] %vm865, %v830
        %891 = vst.msk [vmem:[#allocation3 + $0xc8] sm:$0xff] %vm865, %v832
        %892 = vst.msk [vmem:[#allocation3 + $0xd0] sm:$0xff] %vm865, %v834
        %893 = vst.msk [vmem:[#allocation3 + $0xd8] sm:$0xff] %vm865, %v836
        %v894 = vld [vmem:[#allocation2 + $0x2] sm:$0xff]
        %v895 = vld [vmem:[#allocation2 + $0xa] sm:$0xff]
        %v896 = vld [vmem:[#allocation2 + $0x12] sm:$0xff]
        %v897 = vld [vmem:[#allocation2 + $0x1a] sm:$0xff]
        %v898 = vld [vmem:[#allocation2 + $0x22] sm:$0xff]
        %v899 = vld [vmem:[#allocation2 + $0x2a] sm:$0xff]
        %v900 = vld [vmem:[#allocation2 + $0x32] sm:$0xff]
        %v901 = vld [vmem:[#allocation2 + $0x3a] sm:$0xff]
        %v902 = vld [vmem:[#allocation2 + $0x42] sm:$0xff]
        %v903 = vld [vmem:[#allocation2 + $0x4a] sm:$0xff]
        %v904 = vld [vmem:[#allocation2 + $0x52] sm:$0xff]
        %v905 = vld [vmem:[#allocation2 + $0x5a] sm:$0xff]
        %v906 = vld [vmem:[#allocation2 + $0x62] sm:$0xff]
        %v907 = vld [vmem:[#allocation2 + $0x6a] sm:$0xff]
        %v908 = vld [vmem:[#allocation2 + $0x72] sm:$0xff]
        %v909 = vld [vmem:[#allocation2 + $0x7a] sm:$0xff]
        %v910 = vld [vmem:[#allocation2 + $0x82] sm:$0xff]
        %v911 = vld [vmem:[#allocation2 + $0x8a] sm:$0xff]
        %v912 = vld [vmem:[#allocation2 + $0x92] sm:$0xff]
        %v913 = vld [vmem:[#allocation2 + $0x9a] sm:$0xff]
        %v914 = vld [vmem:[#allocation2 + $0xa2] sm:$0xff]
        %v915 = vld [vmem:[#allocation2 + $0xaa] sm:$0xff]
        %v916 = vld [vmem:[#allocation2 + $0xb2] sm:$0xff]
        %v917 = vld [vmem:[#allocation2 + $0xba] sm:$0xff]
        %v918 = vld [vmem:[#allocation2 + $0xc2] sm:$0xff]
        %v919 = vld [vmem:[#allocation2 + $0xca] sm:$0xff]
        %v920 = vld [vmem:[#allocation2 + $0xd2] sm:$0xff]
        %v921 = vld [vmem:[#allocation2 + $0xda] sm:$0xff]
        %s922 = scalar_lea.vmem %s1, 224
        %v923 = vld [vmem:[%s922] sm:$0xff]
        %v924 = vld [vmem:[%s922 + $0x8] sm:$0xff]
        %v925 = vld [vmem:[%s922 + $0x10] sm:$0xff]
        %v926 = vld [vmem:[%s922 + $0x18] sm:$0xff]
        %v927 = vld [vmem:[%s922 + $0x20] sm:$0xff]
        %v928 = vld [vmem:[%s922 + $0x28] sm:$0xff]
        %v929 = vld [vmem:[%s922 + $0x30] sm:$0xff]
        %v930 = vld [vmem:[%s922 + $0x38] sm:$0xff]
        %v931 = vld [vmem:[%s922 + $0x40] sm:$0xff]
        %v932 = vld [vmem:[%s922 + $0x48] sm:$0xff]
        %v933 = vld [vmem:[%s922 + $0x50] sm:$0xff]
        %v934 = vld [vmem:[%s922 + $0x58] sm:$0xff]
        %v935 = vld [vmem:[%s922 + $0x60] sm:$0xff]
        %v936 = vld [vmem:[%s922 + $0x68] sm:$0xff]
        %v937 = vld [vmem:[%s922 + $0x70] sm:$0xff]
        %v938 = vld [vmem:[%s922 + $0x78] sm:$0xff]
        %v939 = vld [vmem:[%s922 + $0x80] sm:$0xff]
        %v940 = vld [vmem:[%s922 + $0x88] sm:$0xff]
        %v941 = vld [vmem:[%s922 + $0x90] sm:$0xff]
        %v942 = vld [vmem:[%s922 + $0x98] sm:$0xff]
        %v943 = vld [vmem:[%s922 + $0xa0] sm:$0xff]
        %v944 = vld [vmem:[%s922 + $0xa8] sm:$0xff]
        %v945 = vld [vmem:[%s922 + $0xb0] sm:$0xff]
        %v946 = vld [vmem:[%s922 + $0xb8] sm:$0xff]
        %v947 = vld [vmem:[%s922 + $0xc0] sm:$0xff]
        %v948 = vld [vmem:[%s922 + $0xc8] sm:$0xff]
        %v949 = vld [vmem:[%s922 + $0xd0] sm:$0xff]
        %v950 = vld [vmem:[%s922 + $0xd8] sm:$0xff]
        %952 = vset.pattern.permute.xlu0 0
        %953 = vperm.xlu0 %952, %v923
        %v954 = vpop.permute.xlu0 %953
        %957 = vset.pattern.permute.xlu0 0
        %958 = vperm.xlu0 %957, %v924
        %v959 = vpop.permute.xlu0 %958
        %962 = vset.pattern.permute.xlu0 0
        %963 = vperm.xlu0 %962, %v925
        %v964 = vpop.permute.xlu0 %963
        %967 = vset.pattern.permute.xlu0 0
        %968 = vperm.xlu0 %967, %v926
        %v969 = vpop.permute.xlu0 %968
        %972 = vset.pattern.permute.xlu0 0
        %973 = vperm.xlu0 %972, %v927
        %v974 = vpop.permute.xlu0 %973
        %977 = vset.pattern.permute.xlu0 0
        %978 = vperm.xlu0 %977, %v928
        %v979 = vpop.permute.xlu0 %978
        %982 = vset.pattern.permute.xlu0 0
        %983 = vperm.xlu0 %982, %v929
        %v984 = vpop.permute.xlu0 %983
        %987 = vset.pattern.permute.xlu0 0
        %988 = vperm.xlu0 %987, %v930
        %v989 = vpop.permute.xlu0 %988
        %992 = vset.pattern.permute.xlu0 0
        %993 = vperm.xlu0 %992, %v931
        %v994 = vpop.permute.xlu0 %993
        %997 = vset.pattern.permute.xlu0 0
        %998 = vperm.xlu0 %997, %v932
        %v999 = vpop.permute.xlu0 %998
        %1002 = vset.pattern.permute.xlu0 0
        %1003 = vperm.xlu0 %1002, %v933
        %v1004 = vpop.permute.xlu0 %1003
        %1007 = vset.pattern.permute.xlu0 0
        %1008 = vperm.xlu0 %1007, %v934
        %v1009 = vpop.permute.xlu0 %1008
        %1012 = vset.pattern.permute.xlu0 0
        %1013 = vperm.xlu0 %1012, %v935
        %v1014 = vpop.permute.xlu0 %1013
        %1017 = vset.pattern.permute.xlu0 0
        %1018 = vperm.xlu0 %1017, %v936
        %v1019 = vpop.permute.xlu0 %1018
        %1022 = vset.pattern.permute.xlu0 0
        %1023 = vperm.xlu0 %1022, %v937
        %v1024 = vpop.permute.xlu0 %1023
        %1027 = vset.pattern.permute.xlu0 0
        %1028 = vperm.xlu0 %1027, %v938
        %v1029 = vpop.permute.xlu0 %1028
        %1032 = vset.pattern.permute.xlu0 0
        %1033 = vperm.xlu0 %1032, %v939
        %v1034 = vpop.permute.xlu0 %1033
        %1037 = vset.pattern.permute.xlu0 0
        %1038 = vperm.xlu0 %1037, %v940
        %v1039 = vpop.permute.xlu0 %1038
        %1042 = vset.pattern.permute.xlu0 0
        %1043 = vperm.xlu0 %1042, %v941
        %v1044 = vpop.permute.xlu0 %1043
        %1047 = vset.pattern.permute.xlu0 0
        %1048 = vperm.xlu0 %1047, %v942
        %v1049 = vpop.permute.xlu0 %1048
        %1052 = vset.pattern.permute.xlu0 0
        %1053 = vperm.xlu0 %1052, %v943
        %v1054 = vpop.permute.xlu0 %1053
        %1057 = vset.pattern.permute.xlu0 0
        %1058 = vperm.xlu0 %1057, %v944
        %v1059 = vpop.permute.xlu0 %1058
        %1062 = vset.pattern.permute.xlu0 0
        %1063 = vperm.xlu0 %1062, %v945
        %v1064 = vpop.permute.xlu0 %1063
        %1067 = vset.pattern.permute.xlu0 0
        %1068 = vperm.xlu0 %1067, %v946
        %v1069 = vpop.permute.xlu0 %1068
        %1072 = vset.pattern.permute.xlu0 0
        %1073 = vperm.xlu0 %1072, %v947
        %v1074 = vpop.permute.xlu0 %1073
        %1077 = vset.pattern.permute.xlu0 0
        %1078 = vperm.xlu0 %1077, %v948
        %v1079 = vpop.permute.xlu0 %1078
        %1082 = vset.pattern.permute.xlu0 0
        %1083 = vperm.xlu0 %1082, %v949
        %v1084 = vpop.permute.xlu0 %1083
        %1087 = vset.pattern.permute.xlu0 0
        %1088 = vperm.xlu0 %1087, %v950
        %v1089 = vpop.permute.xlu0 %1088
        %v1091 = vmul.f32 %v894, %v954
        %v1092 = vmul.f32 %v895, %v959
        %v1093 = vmul.f32 %v896, %v964
        %v1094 = vmul.f32 %v897, %v969
        %v1095 = vmul.f32 %v898, %v974
        %v1096 = vmul.f32 %v899, %v979
        %v1097 = vmul.f32 %v900, %v984
        %v1098 = vmul.f32 %v901, %v989
        %v1099 = vmul.f32 %v902, %v994
        %v1100 = vmul.f32 %v903, %v999
        %v1101 = vmul.f32 %v904, %v1004
        %v1102 = vmul.f32 %v905, %v1009
        %v1103 = vmul.f32 %v906, %v1014
        %v1104 = vmul.f32 %v907, %v1019
        %v1105 = vmul.f32 %v908, %v1024
        %v1106 = vmul.f32 %v909, %v1029
        %v1107 = vmul.f32 %v910, %v1034
        %v1108 = vmul.f32 %v911, %v1039
        %v1109 = vmul.f32 %v912, %v1044
        %v1110 = vmul.f32 %v913, %v1049
        %v1111 = vmul.f32 %v914, %v1054
        %v1112 = vmul.f32 %v915, %v1059
        %v1113 = vmul.f32 %v916, %v1064
        %v1114 = vmul.f32 %v917, %v1069
        %v1115 = vmul.f32 %v918, %v1074
        %v1116 = vmul.f32 %v919, %v1079
        %v1117 = vmul.f32 %v920, %v1084
        %v1118 = vmul.f32 %v921, %v1089
        %1147 = vrot.lane.b32.xlu0 %v1091, 56
        %v1148 = vpop.permute.xlu0 %1147
        %1149 = vrot.lane.b32.xlu0 %v1092, 56
        %v1150 = vpop.permute.xlu0 %1149
        %1151 = vrot.lane.b32.xlu0 %v1093, 56
        %v1152 = vpop.permute.xlu0 %1151
        %1153 = vrot.lane.b32.xlu0 %v1094, 56
        %v1154 = vpop.permute.xlu0 %1153
        %1155 = vrot.lane.b32.xlu0 %v1095, 56
        %v1156 = vpop.permute.xlu0 %1155
        %1157 = vrot.lane.b32.xlu0 %v1096, 56
        %v1158 = vpop.permute.xlu0 %1157
        %1159 = vrot.lane.b32.xlu0 %v1097, 56
        %v1160 = vpop.permute.xlu0 %1159
        %1161 = vrot.lane.b32.xlu0 %v1098, 56
        %v1162 = vpop.permute.xlu0 %1161
        %1163 = vrot.lane.b32.xlu0 %v1099, 56
        %v1164 = vpop.permute.xlu0 %1163
        %1165 = vrot.lane.b32.xlu0 %v1100, 56
        %v1166 = vpop.permute.xlu0 %1165
        %1167 = vrot.lane.b32.xlu0 %v1101, 56
        %v1168 = vpop.permute.xlu0 %1167
        %1169 = vrot.lane.b32.xlu0 %v1102, 56
        %v1170 = vpop.permute.xlu0 %1169
        %1171 = vrot.lane.b32.xlu0 %v1103, 56
        %v1172 = vpop.permute.xlu0 %1171
        %1173 = vrot.lane.b32.xlu0 %v1104, 56
        %v1174 = vpop.permute.xlu0 %1173
        %1175 = vrot.lane.b32.xlu0 %v1105, 56
        %v1176 = vpop.permute.xlu0 %1175
        %1177 = vrot.lane.b32.xlu0 %v1106, 56
        %v1178 = vpop.permute.xlu0 %1177
        %1179 = vrot.lane.b32.xlu0 %v1107, 56
        %v1180 = vpop.permute.xlu0 %1179
        %1181 = vrot.lane.b32.xlu0 %v1108, 56
        %v1182 = vpop.permute.xlu0 %1181
        %1183 = vrot.lane.b32.xlu0 %v1109, 56
        %v1184 = vpop.permute.xlu0 %1183
        %1185 = vrot.lane.b32.xlu0 %v1110, 56
        %v1186 = vpop.permute.xlu0 %1185
        %1187 = vrot.lane.b32.xlu0 %v1111, 56
        %v1188 = vpop.permute.xlu0 %1187
        %1189 = vrot.lane.b32.xlu0 %v1112, 56
        %v1190 = vpop.permute.xlu0 %1189
        %1191 = vrot.lane.b32.xlu0 %v1113, 56
        %v1192 = vpop.permute.xlu0 %1191
        %1193 = vrot.lane.b32.xlu0 %v1114, 56
        %v1194 = vpop.permute.xlu0 %1193
        %1195 = vrot.lane.b32.xlu0 %v1115, 56
        %v1196 = vpop.permute.xlu0 %1195
        %1197 = vrot.lane.b32.xlu0 %v1116, 56
        %v1198 = vpop.permute.xlu0 %1197
        %1199 = vrot.lane.b32.xlu0 %v1117, 56
        %v1200 = vpop.permute.xlu0 %1199
        %1201 = vrot.lane.b32.xlu0 %v1118, 56
        %v1202 = vpop.permute.xlu0 %1201
        %vm1231 = vcmask 687552
        %1232 = vst.msk [vmem:[#allocation3] sm:$0xff] %vm1231, %v1148
        %1233 = vst.msk [vmem:[#allocation3 + $0x8] sm:$0xff] %vm1231, %v1150
        %1234 = vst.msk [vmem:[#allocation3 + $0x10] sm:$0xff] %vm1231, %v1152
        %1235 = vst.msk [vmem:[#allocation3 + $0x18] sm:$0xff] %vm1231, %v1154
        %1236 = vst.msk [vmem:[#allocation3 + $0x20] sm:$0xff] %vm1231, %v1156
        %1237 = vst.msk [vmem:[#allocation3 + $0x28] sm:$0xff] %vm1231, %v1158
        %1238 = vst.msk [vmem:[#allocation3 + $0x30] sm:$0xff] %vm1231, %v1160
        %1239 = vst.msk [vmem:[#allocation3 + $0x38] sm:$0xff] %vm1231, %v1162
        %1240 = vst.msk [vmem:[#allocation3 + $0x40] sm:$0xff] %vm1231, %v1164
        %1241 = vst.msk [vmem:[#allocation3 + $0x48] sm:$0xff] %vm1231, %v1166
        %1242 = vst.msk [vmem:[#allocation3 + $0x50] sm:$0xff] %vm1231, %v1168
        %1243 = vst.msk [vmem:[#allocation3 + $0x58] sm:$0xff] %vm1231, %v1170
        %1244 = vst.msk [vmem:[#allocation3 + $0x60] sm:$0xff] %vm1231, %v1172
        %1245 = vst.msk [vmem:[#allocation3 + $0x68] sm:$0xff] %vm1231, %v1174
        %1246 = vst.msk [vmem:[#allocation3 + $0x70] sm:$0xff] %vm1231, %v1176
        %1247 = vst.msk [vmem:[#allocation3 + $0x78] sm:$0xff] %vm1231, %v1178
        %1248 = vst.msk [vmem:[#allocation3 + $0x80] sm:$0xff] %vm1231, %v1180
        %1249 = vst.msk [vmem:[#allocation3 + $0x88] sm:$0xff] %vm1231, %v1182
        %1250 = vst.msk [vmem:[#allocation3 + $0x90] sm:$0xff] %vm1231, %v1184
        %1251 = vst.msk [vmem:[#allocation3 + $0x98] sm:$0xff] %vm1231, %v1186
        %1252 = vst.msk [vmem:[#allocation3 + $0xa0] sm:$0xff] %vm1231, %v1188
        %1253 = vst.msk [vmem:[#allocation3 + $0xa8] sm:$0xff] %vm1231, %v1190
        %1254 = vst.msk [vmem:[#allocation3 + $0xb0] sm:$0xff] %vm1231, %v1192
        %1255 = vst.msk [vmem:[#allocation3 + $0xb8] sm:$0xff] %vm1231, %v1194
        %1256 = vst.msk [vmem:[#allocation3 + $0xc0] sm:$0xff] %vm1231, %v1196
        %1257 = vst.msk [vmem:[#allocation3 + $0xc8] sm:$0xff] %vm1231, %v1198
        %1258 = vst.msk [vmem:[#allocation3 + $0xd0] sm:$0xff] %vm1231, %v1200
        %1259 = vst.msk [vmem:[#allocation3 + $0xd8] sm:$0xff] %vm1231, %v1202
        %v1260 = vld [vmem:[#allocation3] sm:$0xff]
        %v1261 = vld [vmem:[#allocation3 + $0x8] sm:$0xff]
        %v1262 = vld [vmem:[#allocation3 + $0x10] sm:$0xff]
        %v1263 = vld [vmem:[#allocation3 + $0x18] sm:$0xff]
        %v1264 = vld [vmem:[#allocation3 + $0x20] sm:$0xff]
        %v1265 = vld [vmem:[#allocation3 + $0x28] sm:$0xff]
        %v1266 = vld [vmem:[#allocation3 + $0x30] sm:$0xff]
        %v1267 = vld [vmem:[#allocation3 + $0x38] sm:$0xff]
        %v1268 = vld [vmem:[#allocation3 + $0x40] sm:$0xff]
        %v1269 = vld [vmem:[#allocation3 + $0x48] sm:$0xff]
        %v1270 = vld [vmem:[#allocation3 + $0x50] sm:$0xff]
        %v1271 = vld [vmem:[#allocation3 + $0x58] sm:$0xff]
        %v1272 = vld [vmem:[#allocation3 + $0x60] sm:$0xff]
        %v1273 = vld [vmem:[#allocation3 + $0x68] sm:$0xff]
        %v1274 = vld [vmem:[#allocation3 + $0x70] sm:$0xff]
        %v1275 = vld [vmem:[#allocation3 + $0x78] sm:$0xff]
        %v1276 = vld [vmem:[#allocation3 + $0x80] sm:$0xff]
        %v1277 = vld [vmem:[#allocation3 + $0x88] sm:$0xff]
        %v1278 = vld [vmem:[#allocation3 + $0x90] sm:$0xff]
        %v1279 = vld [vmem:[#allocation3 + $0x98] sm:$0xff]
        %v1280 = vld [vmem:[#allocation3 + $0xa0] sm:$0xff]
        %v1281 = vld [vmem:[#allocation3 + $0xa8] sm:$0xff]
        %v1282 = vld [vmem:[#allocation3 + $0xb0] sm:$0xff]
        %v1283 = vld [vmem:[#allocation3 + $0xb8] sm:$0xff]
        %v1284 = vld [vmem:[#allocation3 + $0xc0] sm:$0xff]
        %v1285 = vld [vmem:[#allocation3 + $0xc8] sm:$0xff]
        %v1286 = vld [vmem:[#allocation3 + $0xd0] sm:$0xff]
        %v1287 = vld [vmem:[#allocation3 + $0xd8] sm:$0xff]
        %v1288 = vld [vmem:[%s3] sm:$0xff]
        %v1289 = vld [vmem:[%s3 + $0x8] sm:$0xff]
        %v1290 = vld [vmem:[%s3 + $0x10] sm:$0xff]
        %v1291 = vld [vmem:[%s3 + $0x18] sm:$0xff]
        %v1292 = vld [vmem:[%s3 + $0x20] sm:$0xff]
        %v1293 = vld [vmem:[%s3 + $0x28] sm:$0xff]
        %v1294 = vld [vmem:[%s3 + $0x30] sm:$0xff]
        %v1295 = vld [vmem:[%s3 + $0x38] sm:$0xff]
        %v1296 = vld [vmem:[%s3 + $0x40] sm:$0xff]
        %v1297 = vld [vmem:[%s3 + $0x48] sm:$0xff]
        %v1298 = vld [vmem:[%s3 + $0x50] sm:$0xf]
        %v1299 = vld [vmem:[%s4] sm:$0x1]
        %v1301 = vperm.slane %v1299, 0
        %vm1303 = vcmask 687104
        %v1305 = vsel %vm1303, %v1260, 0
        %v1308 = vsel %vm1303, %v1261, 0
        %v1311 = vsel %vm1303, %v1262, 0
        %v1314 = vsel %vm1303, %v1263, 0
        %v1317 = vsel %vm1303, %v1264, 0
        %v1320 = vsel %vm1303, %v1265, 0
        %v1323 = vsel %vm1303, %v1266, 0
        %v1326 = vsel %vm1303, %v1267, 0
        %v1329 = vsel %vm1303, %v1268, 0
        %v1332 = vsel %vm1303, %v1269, 0
        %v1335 = vsel %vm1303, %v1270, 0
        %v1338 = vsel %vm1303, %v1271, 0
        %v1341 = vsel %vm1303, %v1272, 0
        %v1344 = vsel %vm1303, %v1273, 0
        %v1347 = vsel %vm1303, %v1274, 0
        %v1350 = vsel %vm1303, %v1275, 0
        %v1353 = vsel %vm1303, %v1276, 0
        %v1356 = vsel %vm1303, %v1277, 0
        %v1359 = vsel %vm1303, %v1278, 0
        %v1362 = vsel %vm1303, %v1279, 0
        %v1365 = vsel %vm1303, %v1280, 0
        %v1368 = vsel %vm1303, %v1281, 0
        %v1371 = vsel %vm1303, %v1282, 0
        %v1374 = vsel %vm1303, %v1283, 0
        %v1377 = vsel %vm1303, %v1284, 0
        %v1380 = vsel %vm1303, %v1285, 0
        %v1383 = vsel %vm1303, %v1286, 0
        %v1386 = vsel %vm1303, %v1287, 0
        %vm1388 = vcmask 1043456
        %v1390 = vsel %vm1388, %v1298, 0
        %1392 = vmatpush.msra.mxu0 0.0
        %1393 = vmatpush.msra.mxu0 0.0
        %1394 = vmatpush.msra.mxu0 0.0
        %1395 = vmatpush.msra.mxu0 0.0
        %1396 = vmatpush.msra.mxu0 0.0
        %1397 = vmatpush.msra.mxu0 %v1390
        %1398 = vmatpush.msra.mxu0 %v1297
        %1399 = vmatpush.msra.mxu0 %v1296
        %1400 = vmatpush.msra.mxu0 %v1295
        %1401 = vmatpush.msra.mxu0 %v1294
        %1402 = vmatpush.msra.mxu0 %v1293
        %1403 = vmatpush.msra.mxu0 %v1292
        %1404 = vmatpush.msra.mxu0 %v1291
        %1405 = vmatpush.msra.mxu0 %v1290
        %1406 = vmatpush.msra.mxu0 %v1289
        %1407 = vmatpush.msra.mxu0 %v1288
        %1408 = vmatmul.f32.gmra.mxu0 %v1305
        %v1409 = vpop.f32.mrf.mxu0
        %v1410 = vadd.f32 %v1301, %v1409
        %1411 = vmatmul.f32.gmra.mxu0 %v1308
        %v1412 = vpop.f32.mrf.mxu0
        %v1413 = vadd.f32 %v1301, %v1412
        %1414 = vmatmul.f32.gmra.mxu0 %v1311
        %v1415 = vpop.f32.mrf.mxu0
        %v1416 = vadd.f32 %v1301, %v1415
        %1417 = vmatmul.f32.gmra.mxu0 %v1314
        %v1418 = vpop.f32.mrf.mxu0
        %v1419 = vadd.f32 %v1301, %v1418
        %1420 = vmatmul.f32.gmra.mxu0 %v1317
        %v1421 = vpop.f32.mrf.mxu0
        %v1422 = vadd.f32 %v1301, %v1421
        %1423 = vmatmul.f32.gmra.mxu0 %v1320
        %v1424 = vpop.f32.mrf.mxu0
        %v1425 = vadd.f32 %v1301, %v1424
        %1426 = vmatmul.f32.gmra.mxu0 %v1323
        %v1427 = vpop.f32.mrf.mxu0
        %v1428 = vadd.f32 %v1301, %v1427
        %1429 = vmatmul.f32.gmra.mxu0 %v1326
        %v1430 = vpop.f32.mrf.mxu0
        %v1431 = vadd.f32 %v1301, %v1430
        %1432 = vmatmul.f32.gmra.mxu0 %v1329
        %v1433 = vpop.f32.mrf.mxu0
        %v1434 = vadd.f32 %v1301, %v1433
        %1435 = vmatmul.f32.gmra.mxu0 %v1332
        %v1436 = vpop.f32.mrf.mxu0
        %v1437 = vadd.f32 %v1301, %v1436
        %1438 = vmatmul.f32.gmra.mxu0 %v1335
        %v1439 = vpop.f32.mrf.mxu0
        %v1440 = vadd.f32 %v1301, %v1439
        %1441 = vmatmul.f32.gmra.mxu0 %v1338
        %v1442 = vpop.f32.mrf.mxu0
        %v1443 = vadd.f32 %v1301, %v1442
        %1444 = vmatmul.f32.gmra.mxu0 %v1341
        %v1445 = vpop.f32.mrf.mxu0
        %v1446 = vadd.f32 %v1301, %v1445
        %1447 = vmatmul.f32.gmra.mxu0 %v1344
        %v1448 = vpop.f32.mrf.mxu0
        %v1449 = vadd.f32 %v1301, %v1448
        %1450 = vmatmul.f32.gmra.mxu0 %v1347
        %v1451 = vpop.f32.mrf.mxu0
        %v1452 = vadd.f32 %v1301, %v1451
        %1453 = vmatmul.f32.gmra.mxu0 %v1350
        %v1454 = vpop.f32.mrf.mxu0
        %v1455 = vadd.f32 %v1301, %v1454
        %1456 = vmatmul.f32.gmra.mxu0 %v1353
        %v1457 = vpop.f32.mrf.mxu0
        %v1458 = vadd.f32 %v1301, %v1457
        %1459 = vmatmul.f32.gmra.mxu0 %v1356
        %v1460 = vpop.f32.mrf.mxu0
        %v1461 = vadd.f32 %v1301, %v1460
        %1462 = vmatmul.f32.gmra.mxu0 %v1359
        %v1463 = vpop.f32.mrf.mxu0
        %v1464 = vadd.f32 %v1301, %v1463
        %1465 = vmatmul.f32.gmra.mxu0 %v1362
        %v1466 = vpop.f32.mrf.mxu0
        %v1467 = vadd.f32 %v1301, %v1466
        %1468 = vmatmul.f32.gmra.mxu0 %v1365
        %v1469 = vpop.f32.mrf.mxu0
        %v1470 = vadd.f32 %v1301, %v1469
        %1471 = vmatmul.f32.gmra.mxu0 %v1368
        %v1472 = vpop.f32.mrf.mxu0
        %v1473 = vadd.f32 %v1301, %v1472
        %1474 = vmatmul.f32.gmra.mxu0 %v1371
        %v1475 = vpop.f32.mrf.mxu0
        %v1476 = vadd.f32 %v1301, %v1475
        %1477 = vmatmul.f32.gmra.mxu0 %v1374
        %v1478 = vpop.f32.mrf.mxu0
        %v1479 = vadd.f32 %v1301, %v1478
        %1480 = vmatmul.f32.gmra.mxu0 %v1377
        %v1481 = vpop.f32.mrf.mxu0
        %v1482 = vadd.f32 %v1301, %v1481
        %1483 = vmatmul.f32.gmra.mxu0 %v1380
        %v1484 = vpop.f32.mrf.mxu0
        %v1485 = vadd.f32 %v1301, %v1484
        %1486 = vmatmul.f32.gmra.mxu0 %v1383
        %v1487 = vpop.f32.mrf.mxu0
        %v1488 = vadd.f32 %v1301, %v1487
        %1489 = vmatmul.f32.gmra.mxu0 %v1386
        %v1490 = vpop.f32.mrf.mxu0
        %v1491 = vadd.f32 %v1301, %v1490
        %1492 = vdwg.mxu0
        %v1493 = vmax.f32 %v1410, 0.0
        %v1494 = vmax.f32 %v1413, 0.0
        %v1495 = vmax.f32 %v1416, 0.0
        %v1496 = vmax.f32 %v1419, 0.0
        %v1497 = vmax.f32 %v1422, 0.0
        %v1498 = vmax.f32 %v1425, 0.0
        %v1499 = vmax.f32 %v1428, 0.0
        %v1500 = vmax.f32 %v1431, 0.0
        %v1501 = vmax.f32 %v1434, 0.0
        %v1502 = vmax.f32 %v1437, 0.0
        %v1503 = vmax.f32 %v1440, 0.0
        %v1504 = vmax.f32 %v1443, 0.0
        %v1505 = vmax.f32 %v1446, 0.0
        %v1506 = vmax.f32 %v1449, 0.0
        %v1507 = vmax.f32 %v1452, 0.0
        %v1508 = vmax.f32 %v1455, 0.0
        %v1509 = vmax.f32 %v1458, 0.0
        %v1510 = vmax.f32 %v1461, 0.0
        %v1511 = vmax.f32 %v1464, 0.0
        %v1512 = vmax.f32 %v1467, 0.0
        %v1513 = vmax.f32 %v1470, 0.0
        %v1514 = vmax.f32 %v1473, 0.0
        %v1515 = vmax.f32 %v1476, 0.0
        %v1516 = vmax.f32 %v1479, 0.0
        %v1517 = vmax.f32 %v1482, 0.0
        %v1518 = vmax.f32 %v1485, 0.0
        %v1519 = vmax.f32 %v1488, 0.0
        %v1520 = vmax.f32 %v1491, 0.0
        %vm1521 = vcmask 916480
        %1522 = vst.msk [vmem:[#allocation6] sm:$0xff] %vm1521, %v1493
        %1523 = vst.msk [vmem:[#allocation6 + $0x8] sm:$0xff] %vm1521, %v1494
        %1524 = vst.msk [vmem:[#allocation6 + $0x10] sm:$0xff] %vm1521, %v1495
        %1525 = vst.msk [vmem:[#allocation6 + $0x18] sm:$0xff] %vm1521, %v1496
        %1526 = vst.msk [vmem:[#allocation6 + $0x20] sm:$0xff] %vm1521, %v1497
        %1527 = vst.msk [vmem:[#allocation6 + $0x28] sm:$0xff] %vm1521, %v1498
        %1528 = vst.msk [vmem:[#allocation6 + $0x30] sm:$0xff] %vm1521, %v1499
        %1529 = vst.msk [vmem:[#allocation6 + $0x38] sm:$0xff] %vm1521, %v1500
        %1530 = vst.msk [vmem:[#allocation6 + $0x40] sm:$0xff] %vm1521, %v1501
        %1531 = vst.msk [vmem:[#allocation6 + $0x48] sm:$0xff] %vm1521, %v1502
        %1532 = vst.msk [vmem:[#allocation6 + $0x50] sm:$0xff] %vm1521, %v1503
        %1533 = vst.msk [vmem:[#allocation6 + $0x58] sm:$0xff] %vm1521, %v1504
        %1534 = vst.msk [vmem:[#allocation6 + $0x60] sm:$0xff] %vm1521, %v1505
        %1535 = vst.msk [vmem:[#allocation6 + $0x68] sm:$0xff] %vm1521, %v1506
        %1536 = vst.msk [vmem:[#allocation6 + $0x70] sm:$0xff] %vm1521, %v1507
        %1537 = vst.msk [vmem:[#allocation6 + $0x78] sm:$0xff] %vm1521, %v1508
        %1538 = vst.msk [vmem:[#allocation6 + $0x80] sm:$0xff] %vm1521, %v1509
        %1539 = vst.msk [vmem:[#allocation6 + $0x88] sm:$0xff] %vm1521, %v1510
        %1540 = vst.msk [vmem:[#allocation6 + $0x90] sm:$0xff] %vm1521, %v1511
        %1541 = vst.msk [vmem:[#allocation6 + $0x98] sm:$0xff] %vm1521, %v1512
        %1542 = vst.msk [vmem:[#allocation6 + $0xa0] sm:$0xff] %vm1521, %v1513
        %1543 = vst.msk [vmem:[#allocation6 + $0xa8] sm:$0xff] %vm1521, %v1514
        %1544 = vst.msk [vmem:[#allocation6 + $0xb0] sm:$0xff] %vm1521, %v1515
        %1545 = vst.msk [vmem:[#allocation6 + $0xb8] sm:$0xff] %vm1521, %v1516
        %1546 = vst.msk [vmem:[#allocation6 + $0xc0] sm:$0xff] %vm1521, %v1517
        %1547 = vst.msk [vmem:[#allocation6 + $0xc8] sm:$0xff] %vm1521, %v1518
        %1548 = vst.msk [vmem:[#allocation6 + $0xd0] sm:$0xff] %vm1521, %v1519
        %1549 = vst.msk [vmem:[#allocation6 + $0xd8] sm:$0xff] %vm1521, %v1520
        %v1550 = vld [vmem:[#allocation6] ss:$2 sm:$0xff]
        %s1551 = scalar_lea.vmem [#allocation6], 16
        %v1552 = vld [vmem:[%s1551] ss:$2 sm:$0xff]
        %s1553 = scalar_lea.vmem [#allocation6], 32
        %v1554 = vld [vmem:[%s1553] ss:$2 sm:$0xff]
        %s1555 = scalar_lea.vmem [#allocation6], 48
        %v1556 = vld [vmem:[%s1555] ss:$2 sm:$0xff]
        %s1557 = scalar_lea.vmem [#allocation6], 64
        %v1558 = vld [vmem:[%s1557] ss:$2 sm:$0xff]
        %s1559 = scalar_lea.vmem [#allocation6], 80
        %v1560 = vld [vmem:[%s1559] ss:$2 sm:$0xff]
        %s1561 = scalar_lea.vmem [#allocation6], 96
        %v1562 = vld [vmem:[%s1561] ss:$2 sm:$0xff]
        %s1563 = scalar_lea.vmem [#allocation6], 112
        %v1564 = vld [vmem:[%s1563] ss:$2 sm:$0xff]
        %s1565 = scalar_lea.vmem [#allocation6], 128
        %v1566 = vld [vmem:[%s1565] ss:$2 sm:$0xff]
        %s1567 = scalar_lea.vmem [#allocation6], 144
        %v1568 = vld [vmem:[%s1567] ss:$2 sm:$0xff]
        %s1569 = scalar_lea.vmem [#allocation6], 160
        %v1570 = vld [vmem:[%s1569] ss:$2 sm:$0xff]
        %s1571 = scalar_lea.vmem [#allocation6], 176
        %v1572 = vld [vmem:[%s1571] ss:$2 sm:$0xff]
        %s1573 = scalar_lea.vmem [#allocation6], 192
        %v1574 = vld [vmem:[%s1573] ss:$2 sm:$0xff]
        %s1575 = scalar_lea.vmem [#allocation6], 208
        %v1576 = vld [vmem:[%s1575] ss:$2 sm:$0xff]
        %s1577 = scalar_lea.vmem [#allocation6], 1
        %v1578 = vld [vmem:[%s1577] ss:$2 sm:$0xff]
        %s1579 = scalar_lea.vmem [#allocation6], 17
        %v1580 = vld [vmem:[%s1579] ss:$2 sm:$0xff]
        %s1581 = scalar_lea.vmem [#allocation6], 33
        %v1582 = vld [vmem:[%s1581] ss:$2 sm:$0xff]
        %s1583 = scalar_lea.vmem [#allocation6], 49
        %v1584 = vld [vmem:[%s1583] ss:$2 sm:$0xff]
        %s1585 = scalar_lea.vmem [#allocation6], 65
        %v1586 = vld [vmem:[%s1585] ss:$2 sm:$0xff]
        %s1587 = scalar_lea.vmem [#allocation6], 81
        %v1588 = vld [vmem:[%s1587] ss:$2 sm:$0xff]
        %s1589 = scalar_lea.vmem [#allocation6], 97
        %v1590 = vld [vmem:[%s1589] ss:$2 sm:$0xff]
        %s1591 = scalar_lea.vmem [#allocation6], 113
        %v1592 = vld [vmem:[%s1591] ss:$2 sm:$0xff]
        %s1593 = scalar_lea.vmem [#allocation6], 129
        %v1594 = vld [vmem:[%s1593] ss:$2 sm:$0xff]
        %s1595 = scalar_lea.vmem [#allocation6], 145
        %v1596 = vld [vmem:[%s1595] ss:$2 sm:$0xff]
        %s1597 = scalar_lea.vmem [#allocation6], 161
        %v1598 = vld [vmem:[%s1597] ss:$2 sm:$0xff]
        %s1599 = scalar_lea.vmem [#allocation6], 177
        %v1600 = vld [vmem:[%s1599] ss:$2 sm:$0xff]
        %s1601 = scalar_lea.vmem [#allocation6], 193
        %v1602 = vld [vmem:[%s1601] ss:$2 sm:$0xff]
        %s1603 = scalar_lea.vmem [#allocation6], 209
        %v1604 = vld [vmem:[%s1603] ss:$2 sm:$0xff]
        %v1605 = vmax.f32 %v1550, %v1578
        %v1606 = vmax.f32 %v1552, %v1580
        %v1607 = vmax.f32 %v1554, %v1582
        %v1608 = vmax.f32 %v1556, %v1584
        %v1609 = vmax.f32 %v1558, %v1586
        %v1610 = vmax.f32 %v1560, %v1588
        %v1611 = vmax.f32 %v1562, %v1590
        %v1612 = vmax.f32 %v1564, %v1592
        %v1613 = vmax.f32 %v1566, %v1594
        %v1614 = vmax.f32 %v1568, %v1596
        %v1615 = vmax.f32 %v1570, %v1598
        %v1616 = vmax.f32 %v1572, %v1600
        %v1617 = vmax.f32 %v1574, %v1602
        %v1618 = vmax.f32 %v1576, %v1604
        %v1619 = vld [vmem:[%s7] sm:$0xff]
        %v1620 = vld [vmem:[%s7 + $0x8] sm:$0xff]
        %v1621 = vld [vmem:[%s7 + $0x10] sm:$0xff]
        %v1622 = vld [vmem:[%s7 + $0x18] sm:$0xff]
        %v1623 = vld [vmem:[%s7 + $0x20] sm:$0xff]
        %v1624 = vld [vmem:[%s7 + $0x28] sm:$0xff]
        %v1625 = vld [vmem:[%s7 + $0x30] sm:$0xff]
        %v1626 = vld [vmem:[%s7 + $0x38] sm:$0xff]
        %v1627 = vld [vmem:[%s7 + $0x40] sm:$0xff]
        %v1628 = vld [vmem:[%s7 + $0x48] sm:$0xff]
        %v1629 = vld [vmem:[%s7 + $0x50] sm:$0xff]
        %v1630 = vld [vmem:[%s7 + $0x58] sm:$0xff]
        %v1631 = vld [vmem:[%s7 + $0x60] sm:$0xff]
        %v1632 = vld [vmem:[%s7 + $0x68] sm:$0xff]
        %v1634 = vsel %vm1521, %v1605, 0
        %v1637 = vsel %vm1521, %v1606, 0
        %v1640 = vsel %vm1521, %v1607, 0
        %v1643 = vsel %vm1521, %v1608, 0
        %v1646 = vsel %vm1521, %v1609, 0
        %v1649 = vsel %vm1521, %v1610, 0
        %v1652 = vsel %vm1521, %v1611, 0
        %v1655 = vsel %vm1521, %v1612, 0
        %v1658 = vsel %vm1521, %v1613, 0
        %v1661 = vsel %vm1521, %v1614, 0
        %v1664 = vsel %vm1521, %v1615, 0
        %v1667 = vsel %vm1521, %v1616, 0
        %v1670 = vsel %vm1521, %v1617, 0
        %v1673 = vsel %vm1521, %v1618, 0
        %1675 = vmatpush.msra.mxu0 0.0
        %1676 = vmatpush.msra.mxu0 0.0
        %1677 = vmatpush.msra.mxu0 %v1632
        %1678 = vmatpush.msra.mxu0 %v1631
        %1679 = vmatpush.msra.mxu0 %v1630
        %1680 = vmatpush.msra.mxu0 %v1629
        %1681 = vmatpush.msra.mxu0 %v1628
        %1682 = vmatpush.msra.mxu0 %v1627
        %1683 = vmatpush.msra.mxu0 %v1626
        %1684 = vmatpush.msra.mxu0 %v1625
        %1685 = vmatpush.msra.mxu0 %v1624
        %1686 = vmatpush.msra.mxu0 %v1623
        %1687 = vmatpush.msra.mxu0 %v1622
        %1688 = vmatpush.msra.mxu0 %v1621
        %1689 = vmatpush.msra.mxu0 %v1620
        %1690 = vmatpush.msra.mxu0 %v1619
        %1691 = vmatmul.f32.gmra.mxu0 %v1634
        %v1692 = vpop.f32.mrf.mxu0
        %v1693 = vadd.f32 0.0, %v1692
        %1694 = vmatmul.f32.gmra.mxu0 %v1637
        %v1695 = vpop.f32.mrf.mxu0
        %v1696 = vadd.f32 0.0, %v1695
        %1697 = vmatmul.f32.gmra.mxu0 %v1640
        %v1698 = vpop.f32.mrf.mxu0
        %v1699 = vadd.f32 0.0, %v1698
        %1700 = vmatmul.f32.gmra.mxu0 %v1643
        %v1701 = vpop.f32.mrf.mxu0
        %v1702 = vadd.f32 0.0, %v1701
        %1703 = vmatmul.f32.gmra.mxu0 %v1646
        %v1704 = vpop.f32.mrf.mxu0
        %v1705 = vadd.f32 0.0, %v1704
        %1706 = vmatmul.f32.gmra.mxu0 %v1649
        %v1707 = vpop.f32.mrf.mxu0
        %v1708 = vadd.f32 0.0, %v1707
        %1709 = vmatmul.f32.gmra.mxu0 %v1652
        %v1710 = vpop.f32.mrf.mxu0
        %v1711 = vadd.f32 0.0, %v1710
        %1712 = vmatmul.f32.gmra.mxu0 %v1655
        %v1713 = vpop.f32.mrf.mxu0
        %v1714 = vadd.f32 0.0, %v1713
        %1715 = vmatmul.f32.gmra.mxu0 %v1658
        %v1716 = vpop.f32.mrf.mxu0
        %v1717 = vadd.f32 0.0, %v1716
        %1718 = vmatmul.f32.gmra.mxu0 %v1661
        %v1719 = vpop.f32.mrf.mxu0
        %v1720 = vadd.f32 0.0, %v1719
        %1721 = vmatmul.f32.gmra.mxu0 %v1664
        %v1722 = vpop.f32.mrf.mxu0
        %v1723 = vadd.f32 0.0, %v1722
        %1724 = vmatmul.f32.gmra.mxu0 %v1667
        %v1725 = vpop.f32.mrf.mxu0
        %v1726 = vadd.f32 0.0, %v1725
        %1727 = vmatmul.f32.gmra.mxu0 %v1670
        %v1728 = vpop.f32.mrf.mxu0
        %v1729 = vadd.f32 0.0, %v1728
        %1730 = vmatmul.f32.gmra.mxu0 %v1673
        %v1731 = vpop.f32.mrf.mxu0
        %v1732 = vadd.f32 0.0, %v1731
        %1733 = vdwg.mxu0
        %s1734 = scalar_lea.vmem %s7, 112
        %v1735 = vld [vmem:[%s1734] sm:$0xff]
        %v1736 = vld [vmem:[%s1734 + $0x8] sm:$0xff]
        %v1737 = vld [vmem:[%s1734 + $0x10] sm:$0xff]
        %v1738 = vld [vmem:[%s1734 + $0x18] sm:$0xff]
        %v1739 = vld [vmem:[%s1734 + $0x20] sm:$0xff]
        %v1740 = vld [vmem:[%s1734 + $0x28] sm:$0xff]
        %v1741 = vld [vmem:[%s1734 + $0x30] sm:$0xff]
        %v1742 = vld [vmem:[%s1734 + $0x38] sm:$0xff]
        %v1743 = vld [vmem:[%s1734 + $0x40] sm:$0xff]
        %v1744 = vld [vmem:[%s1734 + $0x48] sm:$0xff]
        %v1745 = vld [vmem:[%s1734 + $0x50] sm:$0xff]
        %v1746 = vld [vmem:[%s1734 + $0x58] sm:$0xff]
        %v1747 = vld [vmem:[%s1734 + $0x60] sm:$0xff]
        %v1748 = vld [vmem:[%s1734 + $0x68] sm:$0xff]
        %1749 = vmatpush.msra.mxu0 0.0
        %1750 = vmatpush.msra.mxu0 0.0
        %1751 = vmatpush.msra.mxu0 %v1748
        %1752 = vmatpush.msra.mxu0 %v1747
        %1753 = vmatpush.msra.mxu0 %v1746
        %1754 = vmatpush.msra.mxu0 %v1745
        %1755 = vmatpush.msra.mxu0 %v1744
        %1756 = vmatpush.msra.mxu0 %v1743
        %1757 = vmatpush.msra.mxu0 %v1742
        %1758 = vmatpush.msra.mxu0 %v1741
        %1759 = vmatpush.msra.mxu0 %v1740
        %1760 = vmatpush.msra.mxu0 %v1739
        %1761 = vmatpush.msra.mxu0 %v1738
        %1762 = vmatpush.msra.mxu0 %v1737
        %1763 = vmatpush.msra.mxu0 %v1736
        %1764 = vmatpush.msra.mxu0 %v1735
        %1765 = vmatmul.f32.gmra.mxu0 %v1634
        %v1766 = vpop.f32.mrf.mxu0
        %v1767 = vadd.f32 0.0, %v1766
        %1768 = vmatmul.f32.gmra.mxu0 %v1637
        %v1769 = vpop.f32.mrf.mxu0
        %v1770 = vadd.f32 0.0, %v1769
        %1771 = vmatmul.f32.gmra.mxu0 %v1640
        %v1772 = vpop.f32.mrf.mxu0
        %v1773 = vadd.f32 0.0, %v1772
        %1774 = vmatmul.f32.gmra.mxu0 %v1643
        %v1775 = vpop.f32.mrf.mxu0
        %v1776 = vadd.f32 0.0, %v1775
        %1777 = vmatmul.f32.gmra.mxu0 %v1646
        %v1778 = vpop.f32.mrf.mxu0
        %v1779 = vadd.f32 0.0, %v1778
        %1780 = vmatmul.f32.gmra.mxu0 %v1649
        %v1781 = vpop.f32.mrf.mxu0
        %v1782 = vadd.f32 0.0, %v1781
        %1783 = vmatmul.f32.gmra.mxu0 %v1652
        %v1784 = vpop.f32.mrf.mxu0
        %v1785 = vadd.f32 0.0, %v1784
        %1786 = vmatmul.f32.gmra.mxu0 %v1655
        %v1787 = vpop.f32.mrf.mxu0
        %v1788 = vadd.f32 0.0, %v1787
        %1789 = vmatmul.f32.gmra.mxu0 %v1658
        %v1790 = vpop.f32.mrf.mxu0
        %v1791 = vadd.f32 0.0, %v1790
        %1792 = vmatmul.f32.gmra.mxu0 %v1661
        %v1793 = vpop.f32.mrf.mxu0
        %v1794 = vadd.f32 0.0, %v1793
        %1795 = vmatmul.f32.gmra.mxu0 %v1664
        %v1796 = vpop.f32.mrf.mxu0
        %v1797 = vadd.f32 0.0, %v1796
        %1798 = vmatmul.f32.gmra.mxu0 %v1667
        %v1799 = vpop.f32.mrf.mxu0
        %v1800 = vadd.f32 0.0, %v1799
        %1801 = vmatmul.f32.gmra.mxu0 %v1670
        %v1802 = vpop.f32.mrf.mxu0
        %v1803 = vadd.f32 0.0, %v1802
        %1804 = vmatmul.f32.gmra.mxu0 %v1673
        %v1805 = vpop.f32.mrf.mxu0
        %v1806 = vadd.f32 0.0, %v1805
        %1807 = vdwg.mxu0
        %v1808 = vmax.f32 %v1693, %v1767
        %v1809 = vmax.f32 %v1696, %v1770
        %v1810 = vmax.f32 %v1699, %v1773
        %v1811 = vmax.f32 %v1702, %v1776
        %v1812 = vmax.f32 %v1705, %v1779
        %v1813 = vmax.f32 %v1708, %v1782
        %v1814 = vmax.f32 %v1711, %v1785
        %v1815 = vmax.f32 %v1714, %v1788
        %v1816 = vmax.f32 %v1717, %v1791
        %v1817 = vmax.f32 %v1720, %v1794
        %v1818 = vmax.f32 %v1723, %v1797
        %v1819 = vmax.f32 %v1726, %v1800
        %v1820 = vmax.f32 %v1729, %v1803
        %v1821 = vmax.f32 %v1732, %v1806
        %vm1822 = vcmask 450560
        %1823 = vst.msk [vmem:[#allocation4] sm:$0x1] %vm1822, 0.0
        %1824 = vst.msk [vmem:[#allocation4 + $0x71] sm:$0x1] %vm1822, 0.0
        %vm1825 = vcmask 457728
        %1826 = vst.msk [vmem:[#allocation4 + $0x1] sm:$0xff] %vm1825, %v1808
        %1827 = vst.msk [vmem:[#allocation4 + $0x9] sm:$0xff] %vm1825, %v1809
        %1828 = vst.msk [vmem:[#allocation4 + $0x11] sm:$0xff] %vm1825, %v1810
        %1829 = vst.msk [vmem:[#allocation4 + $0x19] sm:$0xff] %vm1825, %v1811
        %1830 = vst.msk [vmem:[#allocation4 + $0x21] sm:$0xff] %vm1825, %v1812
        %1831 = vst.msk [vmem:[#allocation4 + $0x29] sm:$0xff] %vm1825, %v1813
        %1832 = vst.msk [vmem:[#allocation4 + $0x31] sm:$0xff] %vm1825, %v1814
        %1833 = vst.msk [vmem:[#allocation4 + $0x39] sm:$0xff] %vm1825, %v1815
        %1834 = vst.msk [vmem:[#allocation4 + $0x41] sm:$0xff] %vm1825, %v1816
        %1835 = vst.msk [vmem:[#allocation4 + $0x49] sm:$0xff] %vm1825, %v1817
        %1836 = vst.msk [vmem:[#allocation4 + $0x51] sm:$0xff] %vm1825, %v1818
        %1837 = vst.msk [vmem:[#allocation4 + $0x59] sm:$0xff] %vm1825, %v1819
        %1838 = vst.msk [vmem:[#allocation4 + $0x61] sm:$0xff] %vm1825, %v1820
        %1839 = vst.msk [vmem:[#allocation4 + $0x69] sm:$0xff] %vm1825, %v1821
        %v1840 = vld [vmem:[#allocation4] sm:$0xff]
        %v1841 = vld [vmem:[#allocation4 + $0x8] sm:$0xff]
        %v1842 = vld [vmem:[#allocation4 + $0x10] sm:$0xff]
        %v1843 = vld [vmem:[#allocation4 + $0x18] sm:$0xff]
        %v1844 = vld [vmem:[#allocation4 + $0x20] sm:$0xff]
        %v1845 = vld [vmem:[#allocation4 + $0x28] sm:$0xff]
        %v1846 = vld [vmem:[#allocation4 + $0x30] sm:$0xff]
        %v1847 = vld [vmem:[#allocation4 + $0x38] sm:$0xff]
        %v1848 = vld [vmem:[#allocation4 + $0x40] sm:$0xff]
        %v1849 = vld [vmem:[#allocation4 + $0x48] sm:$0xff]
        %v1850 = vld [vmem:[#allocation4 + $0x50] sm:$0xff]
        %v1851 = vld [vmem:[#allocation4 + $0x58] sm:$0xff]
        %v1852 = vld [vmem:[#allocation4 + $0x60] sm:$0xff]
        %v1853 = vld [vmem:[#allocation4 + $0x68] sm:$0xff]
        %v1854 = vld [vmem:[%s2] sm:$0xff]
        %v1855 = vld [vmem:[%s2 + $0x8] sm:$0xff]
        %v1856 = vld [vmem:[%s2 + $0x10] sm:$0xff]
        %v1857 = vld [vmem:[%s2 + $0x18] sm:$0xff]
        %v1858 = vld [vmem:[%s2 + $0x20] sm:$0xff]
        %v1859 = vld [vmem:[%s2 + $0x28] sm:$0xff]
        %v1860 = vld [vmem:[%s2 + $0x30] sm:$0xff]
        %v1861 = vld [vmem:[%s2 + $0x38] sm:$0xff]
        %v1862 = vld [vmem:[%s2 + $0x40] sm:$0xff]
        %v1863 = vld [vmem:[%s2 + $0x48] sm:$0xff]
        %v1864 = vld [vmem:[%s2 + $0x50] sm:$0xff]
        %v1865 = vld [vmem:[%s2 + $0x58] sm:$0xff]
        %v1866 = vld [vmem:[%s2 + $0x60] sm:$0xff]
        %v1867 = vld [vmem:[%s2 + $0x68] sm:$0xff]
        %1869 = vset.pattern.permute.xlu0 0
        %1870 = vperm.xlu0 %1869, %v1854
        %v1871 = vpop.permute.xlu0 %1870
        %1874 = vset.pattern.permute.xlu0 0
        %1875 = vperm.xlu0 %1874, %v1855
        %v1876 = vpop.permute.xlu0 %1875
        %1879 = vset.pattern.permute.xlu0 0
        %1880 = vperm.xlu0 %1879, %v1856
        %v1881 = vpop.permute.xlu0 %1880
        %1884 = vset.pattern.permute.xlu0 0
        %1885 = vperm.xlu0 %1884, %v1857
        %v1886 = vpop.permute.xlu0 %1885
        %1889 = vset.pattern.permute.xlu0 0
        %1890 = vperm.xlu0 %1889, %v1858
        %v1891 = vpop.permute.xlu0 %1890
        %1894 = vset.pattern.permute.xlu0 0
        %1895 = vperm.xlu0 %1894, %v1859
        %v1896 = vpop.permute.xlu0 %1895
        %1899 = vset.pattern.permute.xlu0 0
        %1900 = vperm.xlu0 %1899, %v1860
        %v1901 = vpop.permute.xlu0 %1900
        %1904 = vset.pattern.permute.xlu0 0
        %1905 = vperm.xlu0 %1904, %v1861
        %v1906 = vpop.permute.xlu0 %1905
        %1909 = vset.pattern.permute.xlu0 0
        %1910 = vperm.xlu0 %1909, %v1862
        %v1911 = vpop.permute.xlu0 %1910
        %1914 = vset.pattern.permute.xlu0 0
        %1915 = vperm.xlu0 %1914, %v1863
        %v1916 = vpop.permute.xlu0 %1915
        %1919 = vset.pattern.permute.xlu0 0
        %1920 = vperm.xlu0 %1919, %v1864
        %v1921 = vpop.permute.xlu0 %1920
        %1924 = vset.pattern.permute.xlu0 0
        %1925 = vperm.xlu0 %1924, %v1865
        %v1926 = vpop.permute.xlu0 %1925
        %1929 = vset.pattern.permute.xlu0 0
        %1930 = vperm.xlu0 %1929, %v1866
        %v1931 = vpop.permute.xlu0 %1930
        %1934 = vset.pattern.permute.xlu0 0
        %1935 = vperm.xlu0 %1934, %v1867
        %v1936 = vpop.permute.xlu0 %1935
        %v1938 = vmul.f32 %v1840, %v1871
        %v1939 = vmul.f32 %v1841, %v1876
        %v1940 = vmul.f32 %v1842, %v1881
        %v1941 = vmul.f32 %v1843, %v1886
        %v1942 = vmul.f32 %v1844, %v1891
        %v1943 = vmul.f32 %v1845, %v1896
        %v1944 = vmul.f32 %v1846, %v1901
        %v1945 = vmul.f32 %v1847, %v1906
        %v1946 = vmul.f32 %v1848, %v1911
        %v1947 = vmul.f32 %v1849, %v1916
        %v1948 = vmul.f32 %v1850, %v1921
        %v1949 = vmul.f32 %v1851, %v1926
        %v1950 = vmul.f32 %v1852, %v1931
        %v1951 = vmul.f32 %v1853, %v1936
        %1952 = vst.msk [vmem:[#allocation5] sm:$0xff] %vm1825, %v1938
        %1953 = vst.msk [vmem:[#allocation5 + $0x10] sm:$0xff] %vm1825, %v1939
        %1954 = vst.msk [vmem:[#allocation5 + $0x20] sm:$0xff] %vm1825, %v1940
        %1955 = vst.msk [vmem:[#allocation5 + $0x30] sm:$0xff] %vm1825, %v1941
        %1956 = vst.msk [vmem:[#allocation5 + $0x40] sm:$0xff] %vm1825, %v1942
        %1957 = vst.msk [vmem:[#allocation5 + $0x50] sm:$0xff] %vm1825, %v1943
        %1958 = vst.msk [vmem:[#allocation5 + $0x60] sm:$0xff] %vm1825, %v1944
        %1959 = vst.msk [vmem:[#allocation5 + $0x70] sm:$0xff] %vm1825, %v1945
        %1960 = vst.msk [vmem:[#allocation5 + $0x80] sm:$0xff] %vm1825, %v1946
        %1961 = vst.msk [vmem:[#allocation5 + $0x90] sm:$0xff] %vm1825, %v1947
        %1962 = vst.msk [vmem:[#allocation5 + $0xa0] sm:$0xff] %vm1825, %v1948
        %1963 = vst.msk [vmem:[#allocation5 + $0xb0] sm:$0xff] %vm1825, %v1949
        %1964 = vst.msk [vmem:[#allocation5 + $0xc0] sm:$0xff] %vm1825, %v1950
        %1965 = vst.msk [vmem:[#allocation5 + $0xd0] sm:$0xff] %vm1825, %v1951
        %1980 = vrot.lane.b32.xlu0 %v1808, 56
        %v1981 = vpop.permute.xlu0 %1980
        %1982 = vrot.lane.b32.xlu0 %v1809, 56
        %v1983 = vpop.permute.xlu0 %1982
        %1984 = vrot.lane.b32.xlu0 %v1810, 56
        %v1985 = vpop.permute.xlu0 %1984
        %1986 = vrot.lane.b32.xlu0 %v1811, 56
        %v1987 = vpop.permute.xlu0 %1986
        %1988 = vrot.lane.b32.xlu0 %v1812, 56
        %v1989 = vpop.permute.xlu0 %1988
        %1990 = vrot.lane.b32.xlu0 %v1813, 56
        %v1991 = vpop.permute.xlu0 %1990
        %1992 = vrot.lane.b32.xlu0 %v1814, 56
        %v1993 = vpop.permute.xlu0 %1992
        %1994 = vrot.lane.b32.xlu0 %v1815, 56
        %v1995 = vpop.permute.xlu0 %1994
        %1996 = vrot.lane.b32.xlu0 %v1816, 56
        %v1997 = vpop.permute.xlu0 %1996
        %1998 = vrot.lane.b32.xlu0 %v1817, 56
        %v1999 = vpop.permute.xlu0 %1998
        %2000 = vrot.lane.b32.xlu0 %v1818, 56
        %v2001 = vpop.permute.xlu0 %2000
        %2002 = vrot.lane.b32.xlu0 %v1819, 56
        %v2003 = vpop.permute.xlu0 %2002
        %2004 = vrot.lane.b32.xlu0 %v1820, 56
        %v2005 = vpop.permute.xlu0 %2004
        %2006 = vrot.lane.b32.xlu0 %v1821, 56
        %v2007 = vpop.permute.xlu0 %2006
        %vm2022 = vcmask 916928
        %2023 = vst.msk [vmem:[#allocation5] sm:$0xff] %vm2022, %v1981
        %2024 = vst.msk [vmem:[#allocation5 + $0x10] sm:$0xff] %vm2022, %v1983
        %2025 = vst.msk [vmem:[#allocation5 + $0x20] sm:$0xff] %vm2022, %v1985
        %2026 = vst.msk [vmem:[#allocation5 + $0x30] sm:$0xff] %vm2022, %v1987
        %2027 = vst.msk [vmem:[#allocation5 + $0x40] sm:$0xff] %vm2022, %v1989
        %2028 = vst.msk [vmem:[#allocation5 + $0x50] sm:$0xff] %vm2022, %v1991
        %2029 = vst.msk [vmem:[#allocation5 + $0x60] sm:$0xff] %vm2022, %v1993
        %2030 = vst.msk [vmem:[#allocation5 + $0x70] sm:$0xff] %vm2022, %v1995
        %2031 = vst.msk [vmem:[#allocation5 + $0x80] sm:$0xff] %vm2022, %v1997
        %2032 = vst.msk [vmem:[#allocation5 + $0x90] sm:$0xff] %vm2022, %v1999
        %2033 = vst.msk [vmem:[#allocation5 + $0xa0] sm:$0xff] %vm2022, %v2001
        %2034 = vst.msk [vmem:[#allocation5 + $0xb0] sm:$0xff] %vm2022, %v2003
        %2035 = vst.msk [vmem:[#allocation5 + $0xc0] sm:$0xff] %vm2022, %v2005
        %2036 = vst.msk [vmem:[#allocation5 + $0xd0] sm:$0xff] %vm2022, %v2007
        %v2037 = vld [vmem:[#allocation4 + $0x2] sm:$0xff]
        %v2038 = vld [vmem:[#allocation4 + $0xa] sm:$0xff]
        %v2039 = vld [vmem:[#allocation4 + $0x12] sm:$0xff]
        %v2040 = vld [vmem:[#allocation4 + $0x1a] sm:$0xff]
        %v2041 = vld [vmem:[#allocation4 + $0x22] sm:$0xff]
        %v2042 = vld [vmem:[#allocation4 + $0x2a] sm:$0xff]
        %v2043 = vld [vmem:[#allocation4 + $0x32] sm:$0xff]
        %v2044 = vld [vmem:[#allocation4 + $0x3a] sm:$0xff]
        %v2045 = vld [vmem:[#allocation4 + $0x42] sm:$0xff]
        %v2046 = vld [vmem:[#allocation4 + $0x4a] sm:$0xff]
        %v2047 = vld [vmem:[#allocation4 + $0x52] sm:$0xff]
        %v2048 = vld [vmem:[#allocation4 + $0x5a] sm:$0xff]
        %v2049 = vld [vmem:[#allocation4 + $0x62] sm:$0xff]
        %v2050 = vld [vmem:[#allocation4 + $0x6a] sm:$0xff]
        %s2051 = scalar_lea.vmem %s2, 112
        %v2052 = vld [vmem:[%s2051] sm:$0xff]
        %v2053 = vld [vmem:[%s2051 + $0x8] sm:$0xff]
        %v2054 = vld [vmem:[%s2051 + $0x10] sm:$0xff]
        %v2055 = vld [vmem:[%s2051 + $0x18] sm:$0xff]
        %v2056 = vld [vmem:[%s2051 + $0x20] sm:$0xff]
        %v2057 = vld [vmem:[%s2051 + $0x28] sm:$0xff]
        %v2058 = vld [vmem:[%s2051 + $0x30] sm:$0xff]
        %v2059 = vld [vmem:[%s2051 + $0x38] sm:$0xff]
        %v2060 = vld [vmem:[%s2051 + $0x40] sm:$0xff]
        %v2061 = vld [vmem:[%s2051 + $0x48] sm:$0xff]
        %v2062 = vld [vmem:[%s2051 + $0x50] sm:$0xff]
        %v2063 = vld [vmem:[%s2051 + $0x58] sm:$0xff]
        %v2064 = vld [vmem:[%s2051 + $0x60] sm:$0xff]
        %v2065 = vld [vmem:[%s2051 + $0x68] sm:$0xff]
        %2067 = vset.pattern.permute.xlu0 0
        %2068 = vperm.xlu0 %2067, %v2052
        %v2069 = vpop.permute.xlu0 %2068
        %2072 = vset.pattern.permute.xlu0 0
        %2073 = vperm.xlu0 %2072, %v2053
        %v2074 = vpop.permute.xlu0 %2073
        %2077 = vset.pattern.permute.xlu0 0
        %2078 = vperm.xlu0 %2077, %v2054
        %v2079 = vpop.permute.xlu0 %2078
        %2082 = vset.pattern.permute.xlu0 0
        %2083 = vperm.xlu0 %2082, %v2055
        %v2084 = vpop.permute.xlu0 %2083
        %2087 = vset.pattern.permute.xlu0 0
        %2088 = vperm.xlu0 %2087, %v2056
        %v2089 = vpop.permute.xlu0 %2088
        %2092 = vset.pattern.permute.xlu0 0
        %2093 = vperm.xlu0 %2092, %v2057
        %v2094 = vpop.permute.xlu0 %2093
        %2097 = vset.pattern.permute.xlu0 0
        %2098 = vperm.xlu0 %2097, %v2058
        %v2099 = vpop.permute.xlu0 %2098
        %2102 = vset.pattern.permute.xlu0 0
        %2103 = vperm.xlu0 %2102, %v2059
        %v2104 = vpop.permute.xlu0 %2103
        %2107 = vset.pattern.permute.xlu0 0
        %2108 = vperm.xlu0 %2107, %v2060
        %v2109 = vpop.permute.xlu0 %2108
        %2112 = vset.pattern.permute.xlu0 0
        %2113 = vperm.xlu0 %2112, %v2061
        %v2114 = vpop.permute.xlu0 %2113
        %2117 = vset.pattern.permute.xlu0 0
        %2118 = vperm.xlu0 %2117, %v2062
        %v2119 = vpop.permute.xlu0 %2118
        %2122 = vset.pattern.permute.xlu0 0
        %2123 = vperm.xlu0 %2122, %v2063
        %v2124 = vpop.permute.xlu0 %2123
        %2127 = vset.pattern.permute.xlu0 0
        %2128 = vperm.xlu0 %2127, %v2064
        %v2129 = vpop.permute.xlu0 %2128
        %2132 = vset.pattern.permute.xlu0 0
        %2133 = vperm.xlu0 %2132, %v2065
        %v2134 = vpop.permute.xlu0 %2133
        %v2136 = vmul.f32 %v2037, %v2069
        %v2137 = vmul.f32 %v2038, %v2074
        %v2138 = vmul.f32 %v2039, %v2079
        %v2139 = vmul.f32 %v2040, %v2084
        %v2140 = vmul.f32 %v2041, %v2089
        %v2141 = vmul.f32 %v2042, %v2094
        %v2142 = vmul.f32 %v2043, %v2099
        %v2143 = vmul.f32 %v2044, %v2104
        %v2144 = vmul.f32 %v2045, %v2109
        %v2145 = vmul.f32 %v2046, %v2114
        %v2146 = vmul.f32 %v2047, %v2119
        %v2147 = vmul.f32 %v2048, %v2124
        %v2148 = vmul.f32 %v2049, %v2129
        %v2149 = vmul.f32 %v2050, %v2134
        %2164 = vrot.lane.b32.xlu0 %v2136, 112
        %v2165 = vpop.permute.xlu0 %2164
        %2166 = vrot.lane.b32.xlu0 %v2137, 112
        %v2167 = vpop.permute.xlu0 %2166
        %2168 = vrot.lane.b32.xlu0 %v2138, 112
        %v2169 = vpop.permute.xlu0 %2168
        %2170 = vrot.lane.b32.xlu0 %v2139, 112
        %v2171 = vpop.permute.xlu0 %2170
        %2172 = vrot.lane.b32.xlu0 %v2140, 112
        %v2173 = vpop.permute.xlu0 %2172
        %2174 = vrot.lane.b32.xlu0 %v2141, 112
        %v2175 = vpop.permute.xlu0 %2174
        %2176 = vrot.lane.b32.xlu0 %v2142, 112
        %v2177 = vpop.permute.xlu0 %2176
        %2178 = vrot.lane.b32.xlu0 %v2143, 112
        %v2179 = vpop.permute.xlu0 %2178
        %2180 = vrot.lane.b32.xlu0 %v2144, 112
        %v2181 = vpop.permute.xlu0 %2180
        %2182 = vrot.lane.b32.xlu0 %v2145, 112
        %v2183 = vpop.permute.xlu0 %2182
        %2184 = vrot.lane.b32.xlu0 %v2146, 112
        %v2185 = vpop.permute.xlu0 %2184
        %2186 = vrot.lane.b32.xlu0 %v2147, 112
        %v2187 = vpop.permute.xlu0 %2186
        %2188 = vrot.lane.b32.xlu0 %v2148, 112
        %v2189 = vpop.permute.xlu0 %2188
        %2190 = vrot.lane.b32.xlu0 %v2149, 112
        %v2191 = vpop.permute.xlu0 %2190
        %vm2206 = vcmask 1048448
        %2207 = vst.msk [vmem:[#allocation5] sm:$0xff] %vm2206, %v2165
        %vm2208 = vcmask 326656
        %2209 = vst.msk [vmem:[#allocation5 + $0x8] sm:$0xff] %vm2208, %v2165
        %2210 = vst.msk [vmem:[#allocation5 + $0x10] sm:$0xff] %vm2206, %v2167
        %2211 = vst.msk [vmem:[#allocation5 + $0x18] sm:$0xff] %vm2208, %v2167
        %2212 = vst.msk [vmem:[#allocation5 + $0x20] sm:$0xff] %vm2206, %v2169
        %2213 = vst.msk [vmem:[#allocation5 + $0x28] sm:$0xff] %vm2208, %v2169
        %2214 = vst.msk [vmem:[#allocation5 + $0x30] sm:$0xff] %vm2206, %v2171
        %2215 = vst.msk [vmem:[#allocation5 + $0x38] sm:$0xff] %vm2208, %v2171
        %2216 = vst.msk [vmem:[#allocation5 + $0x40] sm:$0xff] %vm2206, %v2173
        %2217 = vst.msk [vmem:[#allocation5 + $0x48] sm:$0xff] %vm2208, %v2173
        %2218 = vst.msk [vmem:[#allocation5 + $0x50] sm:$0xff] %vm2206, %v2175
        %2219 = vst.msk [vmem:[#allocation5 + $0x58] sm:$0xff] %vm2208, %v2175
        %2220 = vst.msk [vmem:[#allocation5 + $0x60] sm:$0xff] %vm2206, %v2177
        %2221 = vst.msk [vmem:[#allocation5 + $0x68] sm:$0xff] %vm2208, %v2177
        %2222 = vst.msk [vmem:[#allocation5 + $0x70] sm:$0xff] %vm2206, %v2179
        %2223 = vst.msk [vmem:[#allocation5 + $0x78] sm:$0xff] %vm2208, %v2179
        %2224 = vst.msk [vmem:[#allocation5 + $0x80] sm:$0xff] %vm2206, %v2181
        %2225 = vst.msk [vmem:[#allocation5 + $0x88] sm:$0xff] %vm2208, %v2181
        %2226 = vst.msk [vmem:[#allocation5 + $0x90] sm:$0xff] %vm2206, %v2183
        %2227 = vst.msk [vmem:[#allocation5 + $0x98] sm:$0xff] %vm2208, %v2183
        %2228 = vst.msk [vmem:[#allocation5 + $0xa0] sm:$0xff] %vm2206, %v2185
        %2229 = vst.msk [vmem:[#allocation5 + $0xa8] sm:$0xff] %vm2208, %v2185
        %2230 = vst.msk [vmem:[#allocation5 + $0xb0] sm:$0xff] %vm2206, %v2187
        %2231 = vst.msk [vmem:[#allocation5 + $0xb8] sm:$0xff] %vm2208, %v2187
        %2232 = vst.msk [vmem:[#allocation5 + $0xc0] sm:$0xff] %vm2206, %v2189
        %2233 = vst.msk [vmem:[#allocation5 + $0xc8] sm:$0xff] %vm2208, %v2189
        %2234 = vst.msk [vmem:[#allocation5 + $0xd0] sm:$0xff] %vm2206, %v2191
        %2235 = vst.msk [vmem:[#allocation5 + $0xd8] sm:$0xff] %vm2208, %v2191
        %v2236 = vld [vmem:[#allocation5] sm:$0xff]
        %v2237 = vld [vmem:[#allocation5 + $0x8] sm:$0xff]
        %v2238 = vld [vmem:[#allocation5 + $0x10] sm:$0xff]
        %v2239 = vld [vmem:[#allocation5 + $0x18] sm:$0xff]
        %v2240 = vld [vmem:[#allocation5 + $0x20] sm:$0xff]
        %v2241 = vld [vmem:[#allocation5 + $0x28] sm:$0xff]
        %v2242 = vld [vmem:[#allocation5 + $0x30] sm:$0xff]
        %v2243 = vld [vmem:[#allocation5 + $0x38] sm:$0xff]
        %v2244 = vld [vmem:[#allocation5 + $0x40] sm:$0xff]
        %v2245 = vld [vmem:[#allocation5 + $0x48] sm:$0xff]
        %v2246 = vld [vmem:[#allocation5 + $0x50] sm:$0xff]
        %v2247 = vld [vmem:[#allocation5 + $0x58] sm:$0xff]
        %v2248 = vld [vmem:[#allocation5 + $0x60] sm:$0xff]
        %v2249 = vld [vmem:[#allocation5 + $0x68] sm:$0xff]
        %v2250 = vld [vmem:[#allocation5 + $0x70] sm:$0xff]
        %v2251 = vld [vmem:[#allocation5 + $0x78] sm:$0xff]
        %v2252 = vld [vmem:[#allocation5 + $0x80] sm:$0xff]
        %v2253 = vld [vmem:[#allocation5 + $0x88] sm:$0xff]
        %v2254 = vld [vmem:[#allocation5 + $0x90] sm:$0xff]
        %v2255 = vld [vmem:[#allocation5 + $0x98] sm:$0xff]
        %v2256 = vld [vmem:[#allocation5 + $0xa0] sm:$0xff]
        %v2257 = vld [vmem:[#allocation5 + $0xa8] sm:$0xff]
        %v2258 = vld [vmem:[#allocation5 + $0xb0] sm:$0xff]
        %v2259 = vld [vmem:[#allocation5 + $0xb8] sm:$0xff]
        %v2260 = vld [vmem:[#allocation5 + $0xc0] sm:$0xff]
        %v2261 = vld [vmem:[#allocation5 + $0xc8] sm:$0xff]
        %v2262 = vld [vmem:[#allocation5 + $0xd0] sm:$0xff]
        %v2263 = vld [vmem:[#allocation5 + $0xd8] sm:$0xff]
        %v2264 = vld [vmem:[%s5] sm:$0xff]
        %v2265 = vld [vmem:[%s5 + $0x8] sm:$0xff]
        %v2266 = vld [vmem:[%s5 + $0x10] sm:$0xff]
        %v2267 = vld [vmem:[%s5 + $0x18] sm:$0xff]
        %v2268 = vld [vmem:[%s5 + $0x20] sm:$0xff]
        %v2269 = vld [vmem:[%s5 + $0x28] sm:$0xff]
        %v2270 = vld [vmem:[%s5 + $0x30] sm:$0xff]
        %v2271 = vld [vmem:[%s5 + $0x38] sm:$0xff]
        %v2272 = vld [vmem:[%s5 + $0x40] sm:$0xff]
        %v2273 = vld [vmem:[%s5 + $0x48] sm:$0xff]
        %v2274 = vld [vmem:[%s5 + $0x50] sm:$0xff]
        %v2275 = vld [vmem:[%s5 + $0x58] sm:$0xff]
        %v2276 = vld [vmem:[%s5 + $0x60] sm:$0xff]
        %v2277 = vld [vmem:[%s5 + $0x68] sm:$0xff]
        %v2278 = vld [vmem:[%s5 + $0x70] sm:$0xff]
        %v2279 = vld [vmem:[%s5 + $0x78] sm:$0xff]
        %v2280 = vld [vmem:[%s5 + $0x80] sm:$0xff]
        %v2281 = vld [vmem:[%s5 + $0x88] sm:$0xff]
        %v2282 = vld [vmem:[%s5 + $0x90] sm:$0xff]
        %v2283 = vld [vmem:[%s5 + $0x98] sm:$0xff]
        %v2284 = vld [vmem:[%s5 + $0xa0] sm:$0xff]
        %v2285 = vld [vmem:[%s6] sm:$0x1]
        %v2287 = vperm.slane %v2285, 0
        %v2290 = vsel %vm2208, %v2237, 0
        %v2293 = vsel %vm2208, %v2239, 0
        %v2296 = vsel %vm2208, %v2241, 0
        %v2299 = vsel %vm2208, %v2243, 0
        %v2302 = vsel %vm2208, %v2245, 0
        %v2305 = vsel %vm2208, %v2247, 0
        %v2308 = vsel %vm2208, %v2249, 0
        %v2311 = vsel %vm2208, %v2251, 0
        %v2314 = vsel %vm2208, %v2253, 0
        %v2317 = vsel %vm2208, %v2255, 0
        %v2320 = vsel %vm2208, %v2257, 0
        %v2323 = vsel %vm2208, %v2259, 0
        %v2326 = vsel %vm2208, %v2261, 0
        %v2329 = vsel %vm2208, %v2263, 0
        %2331 = vmatpush.msra.mxu0 %v2279
        %2332 = vmatpush.msra.mxu0 %v2278
        %2333 = vmatpush.msra.mxu0 %v2277
        %2334 = vmatpush.msra.mxu0 %v2276
        %2335 = vmatpush.msra.mxu0 %v2275
        %2336 = vmatpush.msra.mxu0 %v2274
        %2337 = vmatpush.msra.mxu0 %v2273
        %2338 = vmatpush.msra.mxu0 %v2272
        %2339 = vmatpush.msra.mxu0 %v2271
        %2340 = vmatpush.msra.mxu0 %v2270
        %2341 = vmatpush.msra.mxu0 %v2269
        %2342 = vmatpush.msra.mxu0 %v2268
        %2343 = vmatpush.msra.mxu0 %v2267
        %2344 = vmatpush.msra.mxu0 %v2266
        %2345 = vmatpush.msra.mxu0 %v2265
        %2346 = vmatpush.msra.mxu0 %v2264
        %2347 = vmatmul.f32.gmra.mxu0 %v2236
        %v2348 = vpop.f32.mrf.mxu0
        %v2349 = vadd.f32 %v2287, %v2348
        %2350 = vmatmul.f32.gmra.mxu0 %v2238
        %v2351 = vpop.f32.mrf.mxu0
        %v2352 = vadd.f32 %v2287, %v2351
        %2353 = vmatmul.f32.gmra.mxu0 %v2240
        %v2354 = vpop.f32.mrf.mxu0
        %v2355 = vadd.f32 %v2287, %v2354
        %2356 = vmatmul.f32.gmra.mxu0 %v2242
        %v2357 = vpop.f32.mrf.mxu0
        %v2358 = vadd.f32 %v2287, %v2357
        %2359 = vmatmul.f32.gmra.mxu0 %v2244
        %v2360 = vpop.f32.mrf.mxu0
        %v2361 = vadd.f32 %v2287, %v2360
        %2362 = vmatmul.f32.gmra.mxu0 %v2246
        %v2363 = vpop.f32.mrf.mxu0
        %v2364 = vadd.f32 %v2287, %v2363
        %2365 = vmatmul.f32.gmra.mxu0 %v2248
        %v2366 = vpop.f32.mrf.mxu0
        %v2367 = vadd.f32 %v2287, %v2366
        %2368 = vmatmul.f32.gmra.mxu0 %v2250
        %v2369 = vpop.f32.mrf.mxu0
        %v2370 = vadd.f32 %v2287, %v2369
        %2371 = vmatmul.f32.gmra.mxu0 %v2252
        %v2372 = vpop.f32.mrf.mxu0
        %v2373 = vadd.f32 %v2287, %v2372
        %2374 = vmatmul.f32.gmra.mxu0 %v2254
        %v2375 = vpop.f32.mrf.mxu0
        %v2376 = vadd.f32 %v2287, %v2375
        %2377 = vmatmul.f32.gmra.mxu0 %v2256
        %v2378 = vpop.f32.mrf.mxu0
        %v2379 = vadd.f32 %v2287, %v2378
        %2380 = vmatmul.f32.gmra.mxu0 %v2258
        %v2381 = vpop.f32.mrf.mxu0
        %v2382 = vadd.f32 %v2287, %v2381
        %2383 = vmatmul.f32.gmra.mxu0 %v2260
        %v2384 = vpop.f32.mrf.mxu0
        %v2385 = vadd.f32 %v2287, %v2384
        %2386 = vmatmul.f32.gmra.mxu0 %v2262
        %v2387 = vpop.f32.mrf.mxu0
        %v2388 = vadd.f32 %v2287, %v2387
        %2389 = vdwg.mxu0
        %2390 = vmatpush.msra.mxu0 0.0
        %2391 = vmatpush.msra.mxu0 0.0
        %2392 = vmatpush.msra.mxu0 0.0
        %2393 = vmatpush.msra.mxu0 0.0
        %2394 = vmatpush.msra.mxu0 0.0
        %2395 = vmatpush.msra.mxu0 0.0
        %2396 = vmatpush.msra.mxu0 0.0
        %2397 = vmatpush.msra.mxu0 0.0
        %2398 = vmatpush.msra.mxu0 0.0
        %2399 = vmatpush.msra.mxu0 0.0
        %2400 = vmatpush.msra.mxu0 0.0
        %2401 = vmatpush.msra.mxu0 %v2284
        %2402 = vmatpush.msra.mxu0 %v2283
        %2403 = vmatpush.msra.mxu0 %v2282
        %2404 = vmatpush.msra.mxu0 %v2281
        %2405 = vmatpush.msra.mxu0 %v2280
        %2406 = vmatmul.f32.gmra.mxu0 %v2290
        %v2407 = vpop.f32.mrf.mxu0
        %v2408 = vadd.f32 %v2349, %v2407
        %2409 = vmatmul.f32.gmra.mxu0 %v2293
        %v2410 = vpop.f32.mrf.mxu0
        %v2411 = vadd.f32 %v2352, %v2410
        %2412 = vmatmul.f32.gmra.mxu0 %v2296
        %v2413 = vpop.f32.mrf.mxu0
        %v2414 = vadd.f32 %v2355, %v2413
        %2415 = vmatmul.f32.gmra.mxu0 %v2299
        %v2416 = vpop.f32.mrf.mxu0
        %v2417 = vadd.f32 %v2358, %v2416
        %2418 = vmatmul.f32.gmra.mxu0 %v2302
        %v2419 = vpop.f32.mrf.mxu0
        %v2420 = vadd.f32 %v2361, %v2419
        %2421 = vmatmul.f32.gmra.mxu0 %v2305
        %v2422 = vpop.f32.mrf.mxu0
        %v2423 = vadd.f32 %v2364, %v2422
        %2424 = vmatmul.f32.gmra.mxu0 %v2308
        %v2425 = vpop.f32.mrf.mxu0
        %v2426 = vadd.f32 %v2367, %v2425
        %2427 = vmatmul.f32.gmra.mxu0 %v2311
        %v2428 = vpop.f32.mrf.mxu0
        %v2429 = vadd.f32 %v2370, %v2428
        %2430 = vmatmul.f32.gmra.mxu0 %v2314
        %v2431 = vpop.f32.mrf.mxu0
        %v2432 = vadd.f32 %v2373, %v2431
        %2433 = vmatmul.f32.gmra.mxu0 %v2317
        %v2434 = vpop.f32.mrf.mxu0
        %v2435 = vadd.f32 %v2376, %v2434
        %2436 = vmatmul.f32.gmra.mxu0 %v2320
        %v2437 = vpop.f32.mrf.mxu0
        %v2438 = vadd.f32 %v2379, %v2437
        %2439 = vmatmul.f32.gmra.mxu0 %v2323
        %v2440 = vpop.f32.mrf.mxu0
        %v2441 = vadd.f32 %v2382, %v2440
        %2442 = vmatmul.f32.gmra.mxu0 %v2326
        %v2443 = vpop.f32.mrf.mxu0
        %v2444 = vadd.f32 %v2385, %v2443
        %2445 = vmatmul.f32.gmra.mxu0 %v2329
        %v2446 = vpop.f32.mrf.mxu0
        %v2447 = vadd.f32 %v2388, %v2446
        %2448 = vdwg.mxu0
        %v2449 = vmax.f32 %v2408, 0.0
        %v2450 = vmax.f32 %v2411, 0.0
        %v2451 = vmax.f32 %v2414, 0.0
        %v2452 = vmax.f32 %v2417, 0.0
        %v2453 = vmax.f32 %v2420, 0.0
        %v2454 = vmax.f32 %v2423, 0.0
        %v2455 = vmax.f32 %v2426, 0.0
        %v2456 = vmax.f32 %v2429, 0.0
        %v2457 = vmax.f32 %v2432, 0.0
        %v2458 = vmax.f32 %v2435, 0.0
        %v2459 = vmax.f32 %v2438, 0.0
        %v2460 = vmax.f32 %v2441, 0.0
        %v2461 = vmax.f32 %v2444, 0.0
        %v2462 = vmax.f32 %v2447, 0.0
        %2463 = vst.msk [vmem:[#allocation7] sm:$0xff] %vm1521, %v2449
        %2464 = vst.msk [vmem:[#allocation7 + $0x8] sm:$0xff] %vm1521, %v2450
        %2465 = vst.msk [vmem:[#allocation7 + $0x10] sm:$0xff] %vm1521, %v2451
        %2466 = vst.msk [vmem:[#allocation7 + $0x18] sm:$0xff] %vm1521, %v2452
        %2467 = vst.msk [vmem:[#allocation7 + $0x20] sm:$0xff] %vm1521, %v2453
        %2468 = vst.msk [vmem:[#allocation7 + $0x28] sm:$0xff] %vm1521, %v2454
        %2469 = vst.msk [vmem:[#allocation7 + $0x30] sm:$0xff] %vm1521, %v2455
        %2470 = vst.msk [vmem:[#allocation7 + $0x38] sm:$0xff] %vm1521, %v2456
        %2471 = vst.msk [vmem:[#allocation7 + $0x40] sm:$0xff] %vm1521, %v2457
        %2472 = vst.msk [vmem:[#allocation7 + $0x48] sm:$0xff] %vm1521, %v2458
        %2473 = vst.msk [vmem:[#allocation7 + $0x50] sm:$0xff] %vm1521, %v2459
        %2474 = vst.msk [vmem:[#allocation7 + $0x58] sm:$0xff] %vm1521, %v2460
        %2475 = vst.msk [vmem:[#allocation7 + $0x60] sm:$0xff] %vm1521, %v2461
        %2476 = vst.msk [vmem:[#allocation7 + $0x68] sm:$0xff] %vm1521, %v2462
        %v2477 = vld [vmem:[#allocation7] ss:$2 sm:$0xff]
        %s2478 = scalar_lea.vmem [#allocation7], 16
        %v2479 = vld [vmem:[%s2478] ss:$2 sm:$0xff]
        %s2480 = scalar_lea.vmem [#allocation7], 32
        %v2481 = vld [vmem:[%s2480] ss:$2 sm:$0xff]
        %s2482 = scalar_lea.vmem [#allocation7], 48
        %v2483 = vld [vmem:[%s2482] ss:$2 sm:$0xff]
        %s2484 = scalar_lea.vmem [#allocation7], 64
        %v2485 = vld [vmem:[%s2484] ss:$2 sm:$0xff]
        %s2486 = scalar_lea.vmem [#allocation7], 80
        %v2487 = vld [vmem:[%s2486] ss:$2 sm:$0xff]
        %s2488 = scalar_lea.vmem [#allocation7], 96
        %v2489 = vld [vmem:[%s2488] ss:$2 sm:$0xff]
        %s2490 = scalar_lea.vmem [#allocation7], 1
        %v2491 = vld [vmem:[%s2490] ss:$2 sm:$0xff]
        %s2492 = scalar_lea.vmem [#allocation7], 17
        %v2493 = vld [vmem:[%s2492] ss:$2 sm:$0xff]
        %s2494 = scalar_lea.vmem [#allocation7], 33
        %v2495 = vld [vmem:[%s2494] ss:$2 sm:$0xff]
        %s2496 = scalar_lea.vmem [#allocation7], 49
        %v2497 = vld [vmem:[%s2496] ss:$2 sm:$0xff]
        %s2498 = scalar_lea.vmem [#allocation7], 65
        %v2499 = vld [vmem:[%s2498] ss:$2 sm:$0xff]
        %s2500 = scalar_lea.vmem [#allocation7], 81
        %v2501 = vld [vmem:[%s2500] ss:$2 sm:$0xff]
        %s2502 = scalar_lea.vmem [#allocation7], 97
        %v2503 = vld [vmem:[%s2502] ss:$2 sm:$0xff]
        %v2504 = vmax.f32 %v2477, %v2491
        %v2505 = vmax.f32 %v2479, %v2493
        %v2506 = vmax.f32 %v2481, %v2495
        %v2507 = vmax.f32 %v2483, %v2497
        %v2508 = vmax.f32 %v2485, %v2499
        %v2509 = vmax.f32 %v2487, %v2501
        %v2510 = vmax.f32 %v2489, %v2503
        %v2511 = vld [vmem:[%s8] sm:$0xff]
        %v2512 = vld [vmem:[%s8 + $0x8] sm:$0xff]
        %v2513 = vld [vmem:[%s8 + $0x10] sm:$0xff]
        %v2514 = vld [vmem:[%s8 + $0x18] sm:$0xff]
        %v2515 = vld [vmem:[%s8 + $0x20] sm:$0xff]
        %v2516 = vld [vmem:[%s8 + $0x28] sm:$0xff]
        %v2517 = vld [vmem:[%s8 + $0x30] sm:$0xff]
        %v2518 = vld [vmem:[%s8 + $0x38] sm:$0xff]
        %v2519 = vld [vmem:[%s8 + $0x40] sm:$0xff]
        %v2520 = vld [vmem:[%s8 + $0x48] sm:$0xff]
        %v2521 = vld [vmem:[%s8 + $0x50] sm:$0xff]
        %v2522 = vld [vmem:[%s8 + $0x58] sm:$0xff]
        %v2523 = vld [vmem:[%s8 + $0x60] sm:$0xff]
        %v2524 = vld [vmem:[%s8 + $0x68] sm:$0xff]
        %v2526 = vsel %vm1521, %v2504, 0
        %v2529 = vsel %vm1521, %v2505, 0
        %v2532 = vsel %vm1521, %v2506, 0
        %v2535 = vsel %vm1521, %v2507, 0
        %v2538 = vsel %vm1521, %v2508, 0
        %v2541 = vsel %vm1521, %v2509, 0
        %v2544 = vsel %vm1521, %v2510, 0
        %2546 = vmatpush.msra.mxu0 0.0
        %2547 = vmatpush.msra.mxu0 0.0
        %2548 = vmatpush.msra.mxu0 %v2524
        %2549 = vmatpush.msra.mxu0 %v2523
        %2550 = vmatpush.msra.mxu0 %v2522
        %2551 = vmatpush.msra.mxu0 %v2521
        %2552 = vmatpush.msra.mxu0 %v2520
        %2553 = vmatpush.msra.mxu0 %v2519
        %2554 = vmatpush.msra.mxu0 %v2518
        %2555 = vmatpush.msra.mxu0 %v2517
        %2556 = vmatpush.msra.mxu0 %v2516
        %2557 = vmatpush.msra.mxu0 %v2515
        %2558 = vmatpush.msra.mxu0 %v2514
        %2559 = vmatpush.msra.mxu0 %v2513
        %2560 = vmatpush.msra.mxu0 %v2512
        %2561 = vmatpush.msra.mxu0 %v2511
        %2562 = vmatmul.f32.gmra.mxu0 %v2526
        %v2563 = vpop.f32.mrf.mxu0
        %v2564 = vadd.f32 0.0, %v2563
        %2565 = vmatmul.f32.gmra.mxu0 %v2529
        %v2566 = vpop.f32.mrf.mxu0
        %v2567 = vadd.f32 0.0, %v2566
        %2568 = vmatmul.f32.gmra.mxu0 %v2532
        %v2569 = vpop.f32.mrf.mxu0
        %v2570 = vadd.f32 0.0, %v2569
        %2571 = vmatmul.f32.gmra.mxu0 %v2535
        %v2572 = vpop.f32.mrf.mxu0
        %v2573 = vadd.f32 0.0, %v2572
        %2574 = vmatmul.f32.gmra.mxu0 %v2538
        %v2575 = vpop.f32.mrf.mxu0
        %v2576 = vadd.f32 0.0, %v2575
        %2577 = vmatmul.f32.gmra.mxu0 %v2541
        %v2578 = vpop.f32.mrf.mxu0
        %v2579 = vadd.f32 0.0, %v2578
        %2580 = vmatmul.f32.gmra.mxu0 %v2544
        %v2581 = vpop.f32.mrf.mxu0
        %v2582 = vadd.f32 0.0, %v2581
        %2583 = vdwg.mxu0
        %s2584 = scalar_lea.vmem %s8, 112
        %v2585 = vld [vmem:[%s2584] sm:$0xff]
        %v2586 = vld [vmem:[%s2584 + $0x8] sm:$0xff]
        %v2587 = vld [vmem:[%s2584 + $0x10] sm:$0xff]
        %v2588 = vld [vmem:[%s2584 + $0x18] sm:$0xff]
        %v2589 = vld [vmem:[%s2584 + $0x20] sm:$0xff]
        %v2590 = vld [vmem:[%s2584 + $0x28] sm:$0xff]
        %v2591 = vld [vmem:[%s2584 + $0x30] sm:$0xff]
        %v2592 = vld [vmem:[%s2584 + $0x38] sm:$0xff]
        %v2593 = vld [vmem:[%s2584 + $0x40] sm:$0xff]
        %v2594 = vld [vmem:[%s2584 + $0x48] sm:$0xff]
        %v2595 = vld [vmem:[%s2584 + $0x50] sm:$0xff]
        %v2596 = vld [vmem:[%s2584 + $0x58] sm:$0xff]
        %v2597 = vld [vmem:[%s2584 + $0x60] sm:$0xff]
        %v2598 = vld [vmem:[%s2584 + $0x68] sm:$0xff]
        %2599 = vmatpush.msra.mxu0 0.0
        %2600 = vmatpush.msra.mxu0 0.0
        %2601 = vmatpush.msra.mxu0 %v2598
        %2602 = vmatpush.msra.mxu0 %v2597
        %2603 = vmatpush.msra.mxu0 %v2596
        %2604 = vmatpush.msra.mxu0 %v2595
        %2605 = vmatpush.msra.mxu0 %v2594
        %2606 = vmatpush.msra.mxu0 %v2593
        %2607 = vmatpush.msra.mxu0 %v2592
        %2608 = vmatpush.msra.mxu0 %v2591
        %2609 = vmatpush.msra.mxu0 %v2590
        %2610 = vmatpush.msra.mxu0 %v2589
        %2611 = vmatpush.msra.mxu0 %v2588
        %2612 = vmatpush.msra.mxu0 %v2587
        %2613 = vmatpush.msra.mxu0 %v2586
        %2614 = vmatpush.msra.mxu0 %v2585
        %2615 = vmatmul.f32.gmra.mxu0 %v2526
        %v2616 = vpop.f32.mrf.mxu0
        %v2617 = vadd.f32 0.0, %v2616
        %2618 = vmatmul.f32.gmra.mxu0 %v2529
        %v2619 = vpop.f32.mrf.mxu0
        %v2620 = vadd.f32 0.0, %v2619
        %2621 = vmatmul.f32.gmra.mxu0 %v2532
        %v2622 = vpop.f32.mrf.mxu0
        %v2623 = vadd.f32 0.0, %v2622
        %2624 = vmatmul.f32.gmra.mxu0 %v2535
        %v2625 = vpop.f32.mrf.mxu0
        %v2626 = vadd.f32 0.0, %v2625
        %2627 = vmatmul.f32.gmra.mxu0 %v2538
        %v2628 = vpop.f32.mrf.mxu0
        %v2629 = vadd.f32 0.0, %v2628
        %2630 = vmatmul.f32.gmra.mxu0 %v2541
        %v2631 = vpop.f32.mrf.mxu0
        %v2632 = vadd.f32 0.0, %v2631
        %2633 = vmatmul.f32.gmra.mxu0 %v2544
        %v2634 = vpop.f32.mrf.mxu0
        %v2635 = vadd.f32 0.0, %v2634
        %2636 = vdwg.mxu0
        %v2637 = vmax.f32 %v2564, %v2617
        %v2638 = vmax.f32 %v2567, %v2620
        %v2639 = vmax.f32 %v2570, %v2623
        %v2640 = vmax.f32 %v2573, %v2626
        %v2641 = vmax.f32 %v2576, %v2629
        %v2642 = vmax.f32 %v2579, %v2632
        %v2643 = vmax.f32 %v2582, %v2635
        %2644 = vst.msk [vmem:[#allocation8] sm:$0xff] %vm1825, %v2637
        %2645 = vst.msk [vmem:[#allocation8 + $0x8] sm:$0xff] %vm1825, %v2638
        %2646 = vst.msk [vmem:[#allocation8 + $0x10] sm:$0xff] %vm1825, %v2639
        %2647 = vst.msk [vmem:[#allocation8 + $0x18] sm:$0xff] %vm1825, %v2640
        %2648 = vst.msk [vmem:[#allocation8 + $0x20] sm:$0xff] %vm1825, %v2641
        %2649 = vst.msk [vmem:[#allocation8 + $0x28] sm:$0xff] %vm1825, %v2642
        %2650 = vst.msk [vmem:[#allocation8 + $0x30] sm:$0xff] %vm1825, %v2643
        %v2651 = vld [vmem:[#allocation8] ss:$7 sm:$0xff]
        %v2652 = vld [vmem:[%s9] sm:$0xff]
        %v2653 = vld [vmem:[%s9 + $0x8] sm:$0xff]
        %v2654 = vld [vmem:[%s9 + $0x10] sm:$0xff]
        %v2655 = vld [vmem:[%s9 + $0x18] sm:$0xff]
        %v2656 = vld [vmem:[%s9 + $0x20] sm:$0xff]
        %v2657 = vld [vmem:[%s9 + $0x28] sm:$0xff]
        %v2658 = vld [vmem:[%s9 + $0x30] sm:$0xff]
        %s2659 = scalar_lea.vmem [#allocation8], 1
        %v2660 = vld [vmem:[%s2659] ss:$7 sm:$0xff]
        %s2661 = scalar_lea.vmem %s9, 56
        %v2662 = vld [vmem:[%s2661] sm:$0xff]
        %v2663 = vld [vmem:[%s2661 + $0x8] sm:$0xff]
        %v2664 = vld [vmem:[%s2661 + $0x10] sm:$0xff]
        %v2665 = vld [vmem:[%s2661 + $0x18] sm:$0xff]
        %v2666 = vld [vmem:[%s2661 + $0x20] sm:$0xff]
        %v2667 = vld [vmem:[%s2661 + $0x28] sm:$0xff]
        %v2668 = vld [vmem:[%s2661 + $0x30] sm:$0xff]
        %v2670 = vsel %vm1825, %v2660, 0
        %2672 = vmatpush.msra.mxu0 0.0
        %2673 = vmatpush.msra.mxu0 0.0
        %2674 = vmatpush.msra.mxu0 0.0
        %2675 = vmatpush.msra.mxu0 0.0
        %2676 = vmatpush.msra.mxu0 0.0
        %2677 = vmatpush.msra.mxu0 0.0
        %2678 = vmatpush.msra.mxu0 0.0
        %2679 = vmatpush.msra.mxu0 0.0
        %2680 = vmatpush.msra.mxu0 0.0
        %2681 = vmatpush.msra.mxu0 %v2668
        %2682 = vmatpush.msra.mxu0 %v2667
        %2683 = vmatpush.msra.mxu0 %v2666
        %2684 = vmatpush.msra.mxu0 %v2665
        %2685 = vmatpush.msra.mxu0 %v2664
        %2686 = vmatpush.msra.mxu0 %v2663
        %2687 = vmatpush.msra.mxu0 %v2662
        %2688 = vmatmul.f32.gmra.mxu0 %v2670
        %v2689 = vpop.f32.mrf.mxu0
        %v2690 = vadd.f32 0.0, %v2689
        %2691 = vdwg.mxu0
        %v2693 = vsel %vm1825, %v2651, 0
        %2695 = vmatpush.msra.mxu0 0.0
        %2696 = vmatpush.msra.mxu0 0.0
        %2697 = vmatpush.msra.mxu0 0.0
        %2698 = vmatpush.msra.mxu0 0.0
        %2699 = vmatpush.msra.mxu0 0.0
        %2700 = vmatpush.msra.mxu0 0.0
        %2701 = vmatpush.msra.mxu0 0.0
        %2702 = vmatpush.msra.mxu0 0.0
        %2703 = vmatpush.msra.mxu0 0.0
        %2704 = vmatpush.msra.mxu0 %v2658
        %2705 = vmatpush.msra.mxu0 %v2657
        %2706 = vmatpush.msra.mxu0 %v2656
        %2707 = vmatpush.msra.mxu0 %v2655
        %2708 = vmatpush.msra.mxu0 %v2654
        %2709 = vmatpush.msra.mxu0 %v2653
        %2710 = vmatpush.msra.mxu0 %v2652
        %2711 = vmatmul.f32.gmra.mxu0 %v2693
        %v2712 = vpop.f32.mrf.mxu0
        %v2713 = vadd.f32 %v2690, %v2712
        %2714 = vdwg.mxu0
        %s2715 = scalar_lea.vmem [#allocation8], 2
        %v2716 = vld [vmem:[%s2715] ss:$7 sm:$0xff]
        %s2717 = scalar_lea.vmem %s9, 112
        %v2718 = vld [vmem:[%s2717] sm:$0xff]
        %v2719 = vld [vmem:[%s2717 + $0x8] sm:$0xff]
        %v2720 = vld [vmem:[%s2717 + $0x10] sm:$0xff]
        %v2721 = vld [vmem:[%s2717 + $0x18] sm:$0xff]
        %v2722 = vld [vmem:[%s2717 + $0x20] sm:$0xff]
        %v2723 = vld [vmem:[%s2717 + $0x28] sm:$0xff]
        %v2724 = vld [vmem:[%s2717 + $0x30] sm:$0xff]
        %v2726 = vsel %vm1825, %v2716, 0
        %2728 = vmatpush.msra.mxu0 0.0
        %2729 = vmatpush.msra.mxu0 0.0
        %2730 = vmatpush.msra.mxu0 0.0
        %2731 = vmatpush.msra.mxu0 0.0
        %2732 = vmatpush.msra.mxu0 0.0
        %2733 = vmatpush.msra.mxu0 0.0
        %2734 = vmatpush.msra.mxu0 0.0
        %2735 = vmatpush.msra.mxu0 0.0
        %2736 = vmatpush.msra.mxu0 0.0
        %2737 = vmatpush.msra.mxu0 %v2724
        %2738 = vmatpush.msra.mxu0 %v2723
        %2739 = vmatpush.msra.mxu0 %v2722
        %2740 = vmatpush.msra.mxu0 %v2721
        %2741 = vmatpush.msra.mxu0 %v2720
        %2742 = vmatpush.msra.mxu0 %v2719
        %2743 = vmatpush.msra.mxu0 %v2718
        %2744 = vmatmul.f32.gmra.mxu0 %v2726
        %v2745 = vpop.f32.mrf.mxu0
        %v2746 = vadd.f32 0.0, %v2745
        %2747 = vdwg.mxu0
        %v2748 = vadd.f32 %v2713, %v2746
        %s2749 = scalar_lea.vmem [#allocation8], 3
        %v2750 = vld [vmem:[%s2749] ss:$7 sm:$0xff]
        %s2751 = scalar_lea.vmem %s9, 168
        %v2752 = vld [vmem:[%s2751] sm:$0xff]
        %v2753 = vld [vmem:[%s2751 + $0x8] sm:$0xff]
        %v2754 = vld [vmem:[%s2751 + $0x10] sm:$0xff]
        %v2755 = vld [vmem:[%s2751 + $0x18] sm:$0xff]
        %v2756 = vld [vmem:[%s2751 + $0x20] sm:$0xff]
        %v2757 = vld [vmem:[%s2751 + $0x28] sm:$0xff]
        %v2758 = vld [vmem:[%s2751 + $0x30] sm:$0xff]
        %v2760 = vsel %vm1825, %v2750, 0
        %2762 = vmatpush.msra.mxu0 0.0
        %2763 = vmatpush.msra.mxu0 0.0
        %2764 = vmatpush.msra.mxu0 0.0
        %2765 = vmatpush.msra.mxu0 0.0
        %2766 = vmatpush.msra.mxu0 0.0
        %2767 = vmatpush.msra.mxu0 0.0
        %2768 = vmatpush.msra.mxu0 0.0
        %2769 = vmatpush.msra.mxu0 0.0
        %2770 = vmatpush.msra.mxu0 0.0
        %2771 = vmatpush.msra.mxu0 %v2758
        %2772 = vmatpush.msra.mxu0 %v2757
        %2773 = vmatpush.msra.mxu0 %v2756
        %2774 = vmatpush.msra.mxu0 %v2755
        %2775 = vmatpush.msra.mxu0 %v2754
        %2776 = vmatpush.msra.mxu0 %v2753
        %2777 = vmatpush.msra.mxu0 %v2752
        %2778 = vmatmul.f32.gmra.mxu0 %v2760
        %v2779 = vpop.f32.mrf.mxu0
        %v2780 = vadd.f32 0.0, %v2779
        %2781 = vdwg.mxu0
        %v2782 = vadd.f32 %v2748, %v2780
        %s2783 = scalar_lea.vmem [#allocation8], 4
        %v2784 = vld [vmem:[%s2783] ss:$7 sm:$0xff]
        %s2785 = scalar_lea.vmem %s9, 224
        %v2786 = vld [vmem:[%s2785] sm:$0xff]
        %v2787 = vld [vmem:[%s2785 + $0x8] sm:$0xff]
        %v2788 = vld [vmem:[%s2785 + $0x10] sm:$0xff]
        %v2789 = vld [vmem:[%s2785 + $0x18] sm:$0xff]
        %v2790 = vld [vmem:[%s2785 + $0x20] sm:$0xff]
        %v2791 = vld [vmem:[%s2785 + $0x28] sm:$0xff]
        %v2792 = vld [vmem:[%s2785 + $0x30] sm:$0xff]
        %v2794 = vsel %vm1825, %v2784, 0
        %2796 = vmatpush.msra.mxu0 0.0
        %2797 = vmatpush.msra.mxu0 0.0
        %2798 = vmatpush.msra.mxu0 0.0
        %2799 = vmatpush.msra.mxu0 0.0
        %2800 = vmatpush.msra.mxu0 0.0
        %2801 = vmatpush.msra.mxu0 0.0
        %2802 = vmatpush.msra.mxu0 0.0
        %2803 = vmatpush.msra.mxu0 0.0
        %2804 = vmatpush.msra.mxu0 0.0
        %2805 = vmatpush.msra.mxu0 %v2792
        %2806 = vmatpush.msra.mxu0 %v2791
        %2807 = vmatpush.msra.mxu0 %v2790
        %2808 = vmatpush.msra.mxu0 %v2789
        %2809 = vmatpush.msra.mxu0 %v2788
        %2810 = vmatpush.msra.mxu0 %v2787
        %2811 = vmatpush.msra.mxu0 %v2786
        %2812 = vmatmul.f32.gmra.mxu0 %v2794
        %v2813 = vpop.f32.mrf.mxu0
        %v2814 = vadd.f32 0.0, %v2813
        %2815 = vdwg.mxu0
        %v2816 = vadd.f32 %v2782, %v2814
        %s2817 = scalar_lea.vmem [#allocation8], 5
        %v2818 = vld [vmem:[%s2817] ss:$7 sm:$0xff]
        %s2819 = scalar_lea.vmem %s9, 280
        %v2820 = vld [vmem:[%s2819] sm:$0xff]
        %v2821 = vld [vmem:[%s2819 + $0x8] sm:$0xff]
        %v2822 = vld [vmem:[%s2819 + $0x10] sm:$0xff]
        %v2823 = vld [vmem:[%s2819 + $0x18] sm:$0xff]
        %v2824 = vld [vmem:[%s2819 + $0x20] sm:$0xff]
        %v2825 = vld [vmem:[%s2819 + $0x28] sm:$0xff]
        %v2826 = vld [vmem:[%s2819 + $0x30] sm:$0xff]
        %v2828 = vsel %vm1825, %v2818, 0
        %2830 = vmatpush.msra.mxu0 0.0
        %2831 = vmatpush.msra.mxu0 0.0
        %2832 = vmatpush.msra.mxu0 0.0
        %2833 = vmatpush.msra.mxu0 0.0
        %2834 = vmatpush.msra.mxu0 0.0
        %2835 = vmatpush.msra.mxu0 0.0
        %2836 = vmatpush.msra.mxu0 0.0
        %2837 = vmatpush.msra.mxu0 0.0
        %2838 = vmatpush.msra.mxu0 0.0
        %2839 = vmatpush.msra.mxu0 %v2826
        %2840 = vmatpush.msra.mxu0 %v2825
        %2841 = vmatpush.msra.mxu0 %v2824
        %2842 = vmatpush.msra.mxu0 %v2823
        %2843 = vmatpush.msra.mxu0 %v2822
        %2844 = vmatpush.msra.mxu0 %v2821
        %2845 = vmatpush.msra.mxu0 %v2820
        %2846 = vmatmul.f32.gmra.mxu0 %v2828
        %v2847 = vpop.f32.mrf.mxu0
        %v2848 = vadd.f32 0.0, %v2847
        %2849 = vdwg.mxu0
        %v2850 = vadd.f32 %v2816, %v2848
        %s2851 = scalar_lea.vmem [#allocation8], 6
        %v2852 = vld [vmem:[%s2851] ss:$7 sm:$0xff]
        %s2853 = scalar_lea.vmem %s9, 336
        %v2854 = vld [vmem:[%s2853] sm:$0xff]
        %v2855 = vld [vmem:[%s2853 + $0x8] sm:$0xff]
        %v2856 = vld [vmem:[%s2853 + $0x10] sm:$0xff]
        %v2857 = vld [vmem:[%s2853 + $0x18] sm:$0xff]
        %v2858 = vld [vmem:[%s2853 + $0x20] sm:$0xff]
        %v2859 = vld [vmem:[%s2853 + $0x28] sm:$0xff]
        %v2860 = vld [vmem:[%s2853 + $0x30] sm:$0xff]
        %v2862 = vsel %vm1825, %v2852, 0
        %2864 = vmatpush.msra.mxu0 0.0
        %2865 = vmatpush.msra.mxu0 0.0
        %2866 = vmatpush.msra.mxu0 0.0
        %2867 = vmatpush.msra.mxu0 0.0
        %2868 = vmatpush.msra.mxu0 0.0
        %2869 = vmatpush.msra.mxu0 0.0
        %2870 = vmatpush.msra.mxu0 0.0
        %2871 = vmatpush.msra.mxu0 0.0
        %2872 = vmatpush.msra.mxu0 0.0
        %2873 = vmatpush.msra.mxu0 %v2860
        %2874 = vmatpush.msra.mxu0 %v2859
        %2875 = vmatpush.msra.mxu0 %v2858
        %2876 = vmatpush.msra.mxu0 %v2857
        %2877 = vmatpush.msra.mxu0 %v2856
        %2878 = vmatpush.msra.mxu0 %v2855
        %2879 = vmatpush.msra.mxu0 %v2854
        %2880 = vmatmul.f32.gmra.mxu0 %v2862
        %v2881 = vpop.f32.mrf.mxu0
        %v2882 = vadd.f32 0.0, %v2881
        %2883 = vdwg.mxu0
        %v2884 = vadd.f32 %v2850, %v2882
        %v2885 = vld [vmem:[%s10] sm:$0x1]
        %v2887 = vperm.slane %v2885, 0
        %v2889 = vadd.f32 %v2884, %v2887
        %v2890 = vmax.f32 %v2889, 0.0
        %v2891 = vld [vmem:[%s11] sm:$0xff]
        %v2892 = vld [vmem:[%s11 + $0x8] sm:$0xff]
        %v2893 = vld [vmem:[%s12] sm:$0x1]
        %v2895 = vperm.slane %v2893, 0
        %vm2897 = vcmask 130048
        %v2899 = vsel %vm2897, %v2890, 0
        %2901 = vmatpush.msra.mxu0 0.0
        %2902 = vmatpush.msra.mxu0 0.0
        %2903 = vmatpush.msra.mxu0 0.0
        %2904 = vmatpush.msra.mxu0 0.0
        %2905 = vmatpush.msra.mxu0 0.0
        %2906 = vmatpush.msra.mxu0 0.0
        %2907 = vmatpush.msra.mxu0 0.0
        %2908 = vmatpush.msra.mxu0 0.0
        %2909 = vmatpush.msra.mxu0 0.0
        %2910 = vmatpush.msra.mxu0 0.0
        %2911 = vmatpush.msra.mxu0 0.0
        %2912 = vmatpush.msra.mxu0 0.0
        %2913 = vmatpush.msra.mxu0 0.0
        %2914 = vmatpush.msra.mxu0 0.0
        %2915 = vmatpush.msra.mxu0 %v2892
        %2916 = vmatpush.msra.mxu0 %v2891
        %2917 = vmatmul.f32.gmra.mxu0 %v2899
        %v2918 = vpop.f32.mrf.mxu0
        %v2919 = vadd.f32 %v2895, %v2918
        %2920 = vdwg.mxu0
        %2921 = vst [vmem:[%s434] sm:$0xff] %v2919
        %s2922 = sand.u32 %s313, 1
        %s2923 = scalar_lea.sflag [#allocation10], %s2922
        %s2924 = sand.u32 %s313, 1
        %s2925 = smul.addr %s2924, 8
        %s2926 = scalar_lea.vmem [#allocation9], %s2925
        // Predicated region
        $region73: #{_lambda_.1} parent=71 // pred_check
          %p2927 = pneg %p323
        $region74: #{_lambda_.1} parent=71 // pred_check_branch
          %2929 = sbr.rel (%p2927) target = $region76
        $region75: #{_lambda_.1} parent=71 // pred_region
          %2931 = vsyncadd %s2923, 0
          %s2932 = smul.addr %s27, 8
          %s2933 = scalar_lea.hbm %s13, %s2932
          %s2935 = sshll.u32 %s2926, 4
          %s2936 = int_to_ptr.vmem [resolvable:$true] %s2935
          %s2937 = sshll.u32 %s2933, 4
          %s2938 = int_to_ptr.hbm [resolvable:$true] %s2937
          %2940 = dma.vmem_to_hbm [thread:$0]  %s2936, 128, %s2938, %s2923
        $region76: #{_lambda_.1} parent=71 // pred_fallthru
          _
      $region72: #{_lambda_.1} parent=5 // pred_fallthru
        _
      %p2941 = scmp.le.s32.totalorder 2, %s22
      // Predicated region
      $region77: #{_lambda_.1} parent=5 // pred_check
        %p2942 = pneg %p2941
      $region78: #{_lambda_.1} parent=5 // pred_check_branch
        %2944 = sbr.rel (%p2942) target = $region80
      $region79: #{_lambda_.1} parent=5 // pred_region
        %s2945 = ssub.s32 %s22, 2
        // Predicated region
        $region81: #{_lambda_.1} parent=79 // pred_check
          %p2946 = pneg %p329
        $region82: #{_lambda_.1} parent=79 // pred_check_branch
          %2948 = sbr.rel (%p2946) target = $region84
        $region83: #{_lambda_.1} parent=79 // pred_region
          %s2949 = sand.u32 %s314, 1
          %s2950 = scalar_lea.sflag [#allocation10], %s2949
          %s2951 = sand.u32 %s314, 1
          %s2952 = smul.addr %s2951, 8
          %s2953 = scalar_lea.vmem [#allocation9], %s2952
          %2955 = dma.done %s2950, 128
        $region84: #{_lambda_.1} parent=79 // pred_fallthru
          _
      $region80: #{_lambda_.1} parent=5 // pred_fallthru
        _
    $region6: #{_lambda_.1} parent=1 // loop_footer
      %s26 = sadd.s32 1, %s22
    $region7: #{_lambda_.1} parent=1 // loop_footer_branch
      %21 = sbr.rel target = $region3
    $region8: #{_lambda_.1} parent=1 // loop_exit
      _
    %2956 = vsyncpa [#allocation10], 1
    %s2957 = scalar_lea.sflag [#allocation10], 1
    %2958 = vsyncpa %s2957, 1

</llo_original>
